<compile_context>
chip_gen: v7x
topology: tpu7x:2x2x1
jax: 0.10.0
libtpu: 0.0.40
codegen_flags: <defaults>
</compile_context>

<pallas_src>
import functools

import jax
import jax.numpy as jnp
from jax.experimental import pallas as pl
from jax.experimental.pallas import tpu as pltpu

EMB = 64          # emb_size
EPS = 1e-5        # torch.nn.LayerNorm default eps
HEAD_PAD = 128    # lane-dense padded width of the head output (real logit in column 0)


# ----------------------------- in-kernel helpers -----------------------------

def _layernorm(x, g, b):
    mu = jnp.mean(x, axis=-1, keepdims=True)
    var = jnp.mean(jnp.square(x - mu), axis=-1, keepdims=True)
    return (x - mu) * jax.lax.rsqrt(var + EPS) * g + b


def _embed(x, ln, w1, b12, w2):
    """LayerNorm -> Linear -> ReLU -> Linear -> ReLU (cons/var embedding)."""
    xn = _layernorm(x, ln[0:1, :], ln[1:2, :])
    h = jnp.maximum(
        jnp.dot(xn.astype(jnp.bfloat16), w1, preferred_element_type=jnp.float32)
        + b12[0:1, :], 0.0)
    h = jnp.maximum(
        jnp.dot(h.astype(jnp.bfloat16), w2, preferred_element_type=jnp.float32)
        + b12[1:2, :], 0.0)
    return h


def _biconv(left, right, edge_ln, g_src, g_tgt, gT_tgt, vecs, w_ij, wf, wo1, wo2):
    """One BipartiteGraphConvolution (message + add-aggregate + output_module)."""
    we, bl, g1, b1, bf, g2, b2, bo1, bo2 = (vecs[i:i + 1, :] for i in range(9))

    # per-edge gathers via on-the-fly incidence masks (bf16 MXU matmuls)
    x_i = jnp.dot(g_tgt, right.astype(jnp.bfloat16), preferred_element_type=jnp.float32)
    x_j = jnp.dot(g_src, left.astype(jnp.bfloat16), preferred_element_type=jnp.float32)

    # feature_module_left(x_i) + feature_module_edge(e) + feature_module_right(x_j)
    # merged into one K=128 MXU matmul: [x_i, x_j] @ [wl; wr]
    x_ij = jnp.concatenate([x_i, x_j], axis=-1).astype(jnp.bfloat16)          # (E, 128)
    pre = (jnp.dot(x_ij, w_ij, preferred_element_type=jnp.float32)
           + bl + edge_ln * we)

    # feature_module_final: LayerNorm -> ReLU -> Linear
    msg = jnp.maximum(_layernorm(pre, g1, b1), 0.0)
    msg = jnp.dot(msg.astype(jnp.bfloat16), wf, preferred_element_type=jnp.float32) + bf

    # scatter-add onto target nodes: (Nr, E) mask @ (E, 64) messages
    agg = jnp.dot(gT_tgt, msg.astype(jnp.bfloat16), preferred_element_type=jnp.float32)

    # post_conv_module (LayerNorm), then output_module on concat([LN(agg), right]) (K=128)
    h = _layernorm(agg, g2, b2)
    h_r = jnp.concatenate([h, right], axis=-1).astype(jnp.bfloat16)           # (Nr, 128)
    h1 = jnp.maximum(
        jnp.dot(h_r, wo1, preferred_element_type=jnp.float32) + bo1, 0.0)
    return jnp.dot(h1.astype(jnp.bfloat16), wo2, preferred_element_type=jnp.float32) + bo2


# ----------------------------- the fused kernel -------------------------------

def _gnn_forward_kernel(*refs, use_sigmoid=True):
    (cons_ref, var_ref, edge_ref, idx_col_ref, idx_row_ref,
     c_ln_ref, c_w1_ref, c_b_ref, c_w2_ref,
     v_ln_ref, v_w1_ref, v_b_ref, v_w2_ref,
     e_ln_ref) = refs[:14]
    conv_refs = refs[14:34]                       # 4 convs x (vecs, w_ij, wf, wo1, wo2)
    hw1_ref, hb1_ref, hw2_ref, hb2_ref = refs[34:38]
    out_ref = refs[38]

    Nc = cons_ref.shape[0]
    Nv = var_ref.shape[0]
    E = edge_ref.shape[0]

    # ---- incidence masks built in-kernel from int32 edge indices (no HBM one-hots) ----
    idx_col = idx_col_ref[...]                    # (E, 2): col 0 = cons idx, col 1 = var idx
    idx_row = idx_row_ref[...]                    # (2, E)
    ci_col = idx_col[:, 0:1]
    vi_col = idx_col[:, 1:2]
    ci_row = idx_row[0:1, :]
    vi_row = idx_row[1:2, :]

    def _mask(shape, dim, idx):
        eq = jax.lax.broadcasted_iota(jnp.int32, shape, dim) == idx
        return eq.astype(jnp.float32).astype(jnp.bfloat16)

    g_c = _mask((E, Nc), 1, ci_col)               # gather constraint feats per edge
    g_v = _mask((E, Nv), 1, vi_col)               # gather variable feats per edge
    gT_c = _mask((Nc, E), 0, ci_row)              # scatter-add onto constraints
    gT_v = _mask((Nv, E), 0, vi_row)              # scatter-add onto variables

    # ---- embeddings ----
    cons = _embed(cons_ref[...], c_ln_ref[...], c_w1_ref[...], c_b_ref[...], c_w2_ref[...])
    var = _embed(var_ref[...], v_ln_ref[...], v_w1_ref[...], v_b_ref[...], v_w2_ref[...])
    e_ln = e_ln_ref[...]
    edge = _layernorm(edge_ref[...], e_ln[0:1, :], e_ln[1:2, :])   # LayerNorm(1) -> beta

    def conv(i, left, right, g_src, g_tgt, gT_tgt):
        vecs, w_ij, wf, wo1, wo2 = (r[...] for r in conv_refs[5 * i:5 * i + 5])
        return _biconv(left, right, edge, g_src, g_tgt, gT_tgt, vecs, w_ij, wf, wo1, wo2)

    # ---- 4 bipartite graph convolutions (v->c, c->v, v->c, c->v) ----
    cons = conv(0, var, cons, g_v, g_c, gT_c)
    var = conv(1, cons, var, g_c, g_v, gT_v)
    cons = conv(2, var, cons, g_v, g_c, gT_c)
    var = conv(3, cons, var, g_c, g_v, gT_v)

    # ---- output head: Linear -> ReLU -> Linear(padded lane-dense) [-> Sigmoid] ----
    h = jnp.maximum(
        jnp.dot(var.astype(jnp.bfloat16), hw1_ref[...],
                preferred_element_type=jnp.float32) + hb1_ref[...], 0.0)
    logits = jnp.dot(h.astype(jnp.bfloat16), hw2_ref[...],
                     preferred_element_type=jnp.float32) + hb2_ref[...]
    if use_sigmoid:
        logits = jax.nn.sigmoid(logits)
    out_ref[...] = logits


# ----------------------------- parameters ------------------------------------

def init_params(key):
    ks = iter(jax.random.split(key, 128))

    def nrm(shape, scale=0.1):
        return scale * jax.random.normal(next(ks), shape, dtype=jnp.float32)

    def embed_params(in_f):
        return dict(ln_g=1.0 + nrm((1, in_f), 0.3), ln_b=nrm((1, in_f)),
                    w1=nrm((in_f, EMB)), b1=nrm((1, EMB)),
                    w2=nrm((EMB, EMB)), b2=nrm((1, EMB)))

    def conv_params():
        # weights stored as (in, out); wo1a/wo1b are the split of the (2*emb, emb) concat weight.
        return dict(wl=nrm((EMB, EMB)), bl=nrm((1, EMB)),
                    we=nrm((1, EMB)),
                    wr=nrm((EMB, EMB)),
                    g1=1.0 + nrm((1, EMB), 0.3), b1=nrm((1, EMB)),
                    wf=nrm((EMB, EMB)), bf=nrm((1, EMB)),
                    g2=1.0 + nrm((1, EMB), 0.3), b2=nrm((1, EMB)),
                    wo1a=nrm((EMB, EMB)), wo1b=nrm((EMB, EMB)), bo1=nrm((1, EMB)),
                    wo2=nrm((EMB, EMB)), bo2=nrm((1, EMB)))

    return dict(
        cons_embedding=embed_params(4),
        edge_embedding=dict(ln_g=1.0 + nrm((1, 1), 0.3), ln_b=nrm((1, 1))),
        var_embedding=embed_params(6),
        conv_v_to_c=conv_params(),
        conv_c_to_v=conv_params(),
        conv_v_to_c2=conv_params(),
        conv_c_to_v2=conv_params(),
        output_module=dict(w1=nrm((EMB, EMB)), b1=nrm((1, EMB)),
                           w2=nrm((EMB, 1)), b2=nrm((1, 1))),
    )


def pack_params(p):
    """Pack torch-layout params into kernel-ready arrays (bf16 weights, stacked vectors)."""
    bf16 = jnp.bfloat16

    def pack_embed(e):
        return (jnp.concatenate([e['ln_g'], e['ln_b']], axis=0),          # (2, F)  f32
                e['w1'].astype(bf16),                                     # (F, 64) bf16
                jnp.concatenate([e['b1'], e['b2']], axis=0),              # (2, 64) f32
                e['w2'].astype(bf16))                                     # (64,64) bf16

    def pack_conv(c):
        vecs = jnp.concatenate([c['we'], c['bl'], c['g1'], c['b1'], c['bf'],
                                c['g2'], c['b2'], c['bo1'], c['bo2']], axis=0)   # (9, 64) f32
        w_ij = jnp.concatenate([c['wl'], c['wr']], axis=0).astype(bf16)          # (128, 64)
        wo1 = jnp.concatenate([c['wo1a'], c['wo1b']], axis=0).astype(bf16)       # (128, 64)
        return (vecs, w_ij, c['wf'].astype(bf16), wo1, c['wo2'].astype(bf16))

    cons_ln, cons_w1, cons_b, cons_w2 = pack_embed(p['cons_embedding'])
    var_ln, var_w1, var_b, var_w2 = pack_embed(p['var_embedding'])
    edge_ln = jnp.concatenate([p['edge_embedding']['ln_g'],
                               p['edge_embedding']['ln_b']], axis=0)             # (2, 1)

    convs = []
    for name in ('conv_v_to_c', 'conv_c_to_v', 'conv_v_to_c2', 'conv_c_to_v2'):
        convs.extend(pack_conv(p[name]))

    head = p['output_module']
    head_w2 = jnp.zeros((EMB, HEAD_PAD), jnp.float32).at[:, 0:1].set(head['w2']).astype(bf16)
    head_b2 = jnp.zeros((1, HEAD_PAD), jnp.float32).at[:, 0:1].set(head['b2'])

    return dict(cons_ln=cons_ln, cons_w1=cons_w1, cons_b=cons_b, cons_w2=cons_w2,
                var_ln=var_ln, var_w1=var_w1, var_b=var_b, var_w2=var_w2,
                edge_ln=edge_ln,
                convs=tuple(convs),
                head_w1=head['w1'].astype(bf16), head_b1=head['b1'],
                head_w2=head_w2, head_b2=head_b2)


# ----------------------------- forward (glue) --------------------------------

def gnn_policy_forward(packed, constraint_features, edge_indices, edge_features,
                       variable_features, use_sigmoid=True):
    # TODO(synk): ds2type[args.task_name] is external to the module; assuming type 'B' -> Sigmoid.
    Nv = variable_features.shape[0]

    idx_row = edge_indices.astype(jnp.int32)        # (2, E)
    idx_col = idx_row.T                             # (E, 2) — tiny int table, glue-side only

    inputs = (
        constraint_features.astype(jnp.float32),
        variable_features.astype(jnp.float32),
        edge_features.astype(jnp.float32),
        idx_col, idx_row,
        packed['cons_ln'], packed['cons_w1'], packed['cons_b'], packed['cons_w2'],
        packed['var_ln'], packed['var_w1'], packed['var_b'], packed['var_w2'],
        packed['edge_ln'],
        *packed['convs'],
        packed['head_w1'], packed['head_b1'], packed['head_w2'], packed['head_b2'],
    )

    kern = functools.partial(_gnn_forward_kernel, use_sigmoid=use_sigmoid)
    out_padded = pl.pallas_call(
        kern,
        out_shape=jax.ShapeDtypeStruct((Nv, HEAD_PAD), jnp.float32),
        in_specs=[pl.BlockSpec(memory_space=pltpu.MemorySpace.VMEM)] * len(inputs),
        out_specs=pl.BlockSpec(memory_space=pltpu.MemorySpace.VMEM),
    )(*inputs)

    return out_padded[:, :1]                        # real logit lives in column 0


# ----------------------------- demo ------------------------------------------

if __name__ == "__main__":
    key = jax.random.PRNGKey(0)
    k_cons, k_var, k_edge, k_ci, k_vi, k_par = jax.random.split(key, 6)

    Nc, Nv, E = 16, 24, 48           # constraints, variables, edges
    constraint_features = jax.random.normal(k_cons, (Nc, 4), dtype=jnp.float32)
    variable_features = jax.random.normal(k_var, (Nv, 6), dtype=jnp.float32)
    edge_features = jax.random.normal(k_edge, (E, 1), dtype=jnp.float32)
    edge_indices = jnp.stack([
        jax.random.randint(k_ci, (E,), 0, Nc),
        jax.random.randint(k_vi, (E,), 0, Nv)], axis=0)

    params = pack_params(init_params(k_par))

    out = jax.jit(gnn_policy_forward)(params, constraint_features, edge_indices,
                                      edge_features, variable_features)
    jax.block_until_ready(out)
    assert out.shape == (Nv, 1) and out.dtype == jnp.float32
    assert bool(jnp.all(jnp.isfinite(out)))
    print("KERNEL_OK")
</pallas_src>

<mosaic_0001>
module attributes {stable_mosaic.version = 11 : i64} {
  func.func @_gnn_forward_kernel(%arg0: memref<16x4xf32, #tpu.memory_space<vmem>>, %arg1: memref<24x6xf32, #tpu.memory_space<vmem>>, %arg2: memref<48x1xf32, #tpu.memory_space<vmem>>, %arg3: memref<48x2xi32, #tpu.memory_space<vmem>>, %arg4: memref<2x48xi32, #tpu.memory_space<vmem>>, %arg5: memref<2x4xf32, #tpu.memory_space<vmem>>, %arg6: memref<4x64xbf16, #tpu.memory_space<vmem>>, %arg7: memref<2x64xf32, #tpu.memory_space<vmem>>, %arg8: memref<64x64xbf16, #tpu.memory_space<vmem>>, %arg9: memref<2x6xf32, #tpu.memory_space<vmem>>, %arg10: memref<6x64xbf16, #tpu.memory_space<vmem>>, %arg11: memref<2x64xf32, #tpu.memory_space<vmem>>, %arg12: memref<64x64xbf16, #tpu.memory_space<vmem>>, %arg13: memref<2x1xf32, #tpu.memory_space<vmem>>, %arg14: memref<9x64xf32, #tpu.memory_space<vmem>>, %arg15: memref<128x64xbf16, #tpu.memory_space<vmem>>, %arg16: memref<64x64xbf16, #tpu.memory_space<vmem>>, %arg17: memref<128x64xbf16, #tpu.memory_space<vmem>>, %arg18: memref<64x64xbf16, #tpu.memory_space<vmem>>, %arg19: memref<9x64xf32, #tpu.memory_space<vmem>>, %arg20: memref<128x64xbf16, #tpu.memory_space<vmem>>, %arg21: memref<64x64xbf16, #tpu.memory_space<vmem>>, %arg22: memref<128x64xbf16, #tpu.memory_space<vmem>>, %arg23: memref<64x64xbf16, #tpu.memory_space<vmem>>, %arg24: memref<9x64xf32, #tpu.memory_space<vmem>>, %arg25: memref<128x64xbf16, #tpu.memory_space<vmem>>, %arg26: memref<64x64xbf16, #tpu.memory_space<vmem>>, %arg27: memref<128x64xbf16, #tpu.memory_space<vmem>>, %arg28: memref<64x64xbf16, #tpu.memory_space<vmem>>, %arg29: memref<9x64xf32, #tpu.memory_space<vmem>>, %arg30: memref<128x64xbf16, #tpu.memory_space<vmem>>, %arg31: memref<64x64xbf16, #tpu.memory_space<vmem>>, %arg32: memref<128x64xbf16, #tpu.memory_space<vmem>>, %arg33: memref<64x64xbf16, #tpu.memory_space<vmem>>, %arg34: memref<64x64xbf16, #tpu.memory_space<vmem>>, %arg35: memref<1x64xf32, #tpu.memory_space<vmem>>, %arg36: memref<64x128xbf16, #tpu.memory_space<vmem>>, %arg37: memref<1x128xf32, #tpu.memory_space<vmem>>, %arg38: memref<24x128xf32, #tpu.memory_space<vmem>>) attributes {dimension_semantics = [], scalar_prefetch = 0 : i64, scratch_operands = 0 : i64, tpu.core_type = #tpu.core_type<tc>} {
    %c0 = arith.constant 0 : index
    %c0_0 = arith.constant 0 : index
    %0 = vector.load %arg3[%c0, %c0_0] : memref<48x2xi32, #tpu.memory_space<vmem>>, vector<48x2xi32>
    %c0_1 = arith.constant 0 : index
    %c0_2 = arith.constant 0 : index
    %1 = vector.load %arg4[%c0_1, %c0_2] : memref<2x48xi32, #tpu.memory_space<vmem>>, vector<2x48xi32>
    %2 = vector.extract_strided_slice %0 {offsets = [0, 0], sizes = [48, 1], strides = [1, 1]} : vector<48x2xi32> to vector<48x1xi32>
    %3 = vector.extract_strided_slice %0 {offsets = [0, 1], sizes = [48, 1], strides = [1, 1]} : vector<48x2xi32> to vector<48x1xi32>
    %4 = vector.extract_strided_slice %1 {offsets = [0, 0], sizes = [1, 48], strides = [1, 1]} : vector<2x48xi32> to vector<1x48xi32>
    %5 = vector.extract_strided_slice %1 {offsets = [1, 0], sizes = [1, 48], strides = [1, 1]} : vector<2x48xi32> to vector<1x48xi32>
    %6 = tpu.iota {dimensions = array<i32: 1>} : vector<48x16xi32>
    %7 = vector.broadcast %2 : vector<48x1xi32> to vector<48x16xi32>
    %8 = arith.cmpi eq, %6, %7 : vector<48x16xi32>
    %9 = arith.extui %8 : vector<48x16xi1> to vector<48x16xi32>
    %10 = arith.sitofp %9 : vector<48x16xi32> to vector<48x16xf32>
    %11 = arith.truncf %10 : vector<48x16xf32> to vector<48x16xbf16>
    %12 = tpu.iota {dimensions = array<i32: 1>} : vector<48x24xi32>
    %13 = vector.broadcast %3 : vector<48x1xi32> to vector<48x24xi32>
    %14 = arith.cmpi eq, %12, %13 : vector<48x24xi32>
    %15 = arith.extui %14 : vector<48x24xi1> to vector<48x24xi32>
    %16 = arith.sitofp %15 : vector<48x24xi32> to vector<48x24xf32>
    %17 = arith.truncf %16 : vector<48x24xf32> to vector<48x24xbf16>
    %18 = tpu.iota {dimensions = array<i32: 0>} : vector<16x48xi32>
    %19 = vector.broadcast %4 : vector<1x48xi32> to vector<16x48xi32>
    %20 = arith.cmpi eq, %18, %19 : vector<16x48xi32>
    %21 = arith.extui %20 : vector<16x48xi1> to vector<16x48xi32>
    %22 = arith.sitofp %21 : vector<16x48xi32> to vector<16x48xf32>
    %23 = arith.truncf %22 : vector<16x48xf32> to vector<16x48xbf16>
    %24 = tpu.iota {dimensions = array<i32: 0>} : vector<24x48xi32>
    %25 = vector.broadcast %5 : vector<1x48xi32> to vector<24x48xi32>
    %26 = arith.cmpi eq, %24, %25 : vector<24x48xi32>
    %27 = arith.extui %26 : vector<24x48xi1> to vector<24x48xi32>
    %28 = arith.sitofp %27 : vector<24x48xi32> to vector<24x48xf32>
    %29 = arith.truncf %28 : vector<24x48xf32> to vector<24x48xbf16>
    %c0_3 = arith.constant 0 : index
    %c0_4 = arith.constant 0 : index
    %30 = vector.load %arg0[%c0_3, %c0_4] : memref<16x4xf32, #tpu.memory_space<vmem>>, vector<16x4xf32>
    %c0_5 = arith.constant 0 : index
    %c0_6 = arith.constant 0 : index
    %31 = vector.load %arg5[%c0_5, %c0_6] : memref<2x4xf32, #tpu.memory_space<vmem>>, vector<2x4xf32>
    %c0_7 = arith.constant 0 : index
    %c0_8 = arith.constant 0 : index
    %32 = vector.load %arg6[%c0_7, %c0_8] : memref<4x64xbf16, #tpu.memory_space<vmem>>, vector<4x64xbf16>
    %c0_9 = arith.constant 0 : index
    %c0_10 = arith.constant 0 : index
    %33 = vector.load %arg7[%c0_9, %c0_10] : memref<2x64xf32, #tpu.memory_space<vmem>>, vector<2x64xf32>
    %c0_11 = arith.constant 0 : index
    %c0_12 = arith.constant 0 : index
    %34 = vector.load %arg8[%c0_11, %c0_12] : memref<64x64xbf16, #tpu.memory_space<vmem>>, vector<64x64xbf16>
    %35 = vector.extract_strided_slice %31 {offsets = [0, 0], sizes = [1, 4], strides = [1, 1]} : vector<2x4xf32> to vector<1x4xf32>
    %36 = vector.extract_strided_slice %31 {offsets = [1, 0], sizes = [1, 4], strides = [1, 1]} : vector<2x4xf32> to vector<1x4xf32>
    %cst = arith.constant dense<0.000000e+00> : vector<16xf32>
    %37 = vector.multi_reduction <add>, %30, %cst [1] : vector<16x4xf32> to vector<16xf32>
    %38 = vector.shape_cast %37 : vector<16xf32> to vector<16x1xf32>
    %cst_13 = arith.constant 4.000000e+00 : f32
    %39 = vector.broadcast %cst_13 : f32 to vector<16x1xf32>
    %40 = arith.divf %38, %39 : vector<16x1xf32>
    %41 = vector.broadcast %40 : vector<16x1xf32> to vector<16x4xf32>
    %42 = arith.subf %30, %41 : vector<16x4xf32>
    %43 = arith.mulf %42, %42 : vector<16x4xf32>
    %cst_14 = arith.constant dense<0.000000e+00> : vector<16xf32>
    %44 = vector.multi_reduction <add>, %43, %cst_14 [1] : vector<16x4xf32> to vector<16xf32>
    %45 = vector.shape_cast %44 : vector<16xf32> to vector<16x1xf32>
    %cst_15 = arith.constant 4.000000e+00 : f32
    %46 = vector.broadcast %cst_15 : f32 to vector<16x1xf32>
    %47 = arith.divf %45, %46 : vector<16x1xf32>
    %48 = vector.broadcast %40 : vector<16x1xf32> to vector<16x4xf32>
    %49 = arith.subf %30, %48 : vector<16x4xf32>
    %cst_16 = arith.constant 9.99999974E-6 : f32
    %50 = vector.broadcast %cst_16 : f32 to vector<16x1xf32>
    %51 = arith.addf %47, %50 : vector<16x1xf32>
    %52 = math.rsqrt %51 : vector<16x1xf32>
    %53 = vector.broadcast %52 : vector<16x1xf32> to vector<16x4xf32>
    %54 = arith.mulf %49, %53 : vector<16x4xf32>
    %55 = vector.broadcast %35 : vector<1x4xf32> to vector<16x4xf32>
    %56 = arith.mulf %54, %55 : vector<16x4xf32>
    %57 = vector.broadcast %36 : vector<1x4xf32> to vector<16x4xf32>
    %58 = arith.addf %56, %57 : vector<16x4xf32>
    %59 = arith.truncf %58 : vector<16x4xf32> to vector<16x4xbf16>
    %cst_17 = arith.constant dense<0.000000e+00> : vector<16x64xf32>
    %60 = tpu.matmul %59, %32, %cst_17 {dimension_numbers = #tpu.dot_dimension_numbers<[1], [0], [0], [1], [0, 0, 1, 1], [], []>} : vector<16x4xbf16>, vector<4x64xbf16>, vector<16x64xf32> -> vector<16x64xf32>
    %61 = vector.extract_strided_slice %33 {offsets = [0, 0], sizes = [1, 64], strides = [1, 1]} : vector<2x64xf32> to vector<1x64xf32>
    %62 = vector.broadcast %61 : vector<1x64xf32> to vector<16x64xf32>
    %63 = arith.addf %60, %62 : vector<16x64xf32>
    %cst_18 = arith.constant 0.000000e+00 : f32
    %64 = vector.broadcast %cst_18 : f32 to vector<16x64xf32>
    %65 = arith.maximumf %63, %64 : vector<16x64xf32>
    %66 = arith.truncf %65 : vector<16x64xf32> to vector<16x64xbf16>
    %cst_19 = arith.constant dense<0.000000e+00> : vector<16x64xf32>
    %67 = tpu.matmul %66, %34, %cst_19 {dimension_numbers = #tpu.dot_dimension_numbers<[1], [0], [0], [1], [0, 0, 1, 1], [], []>} : vector<16x64xbf16>, vector<64x64xbf16>, vector<16x64xf32> -> vector<16x64xf32>
    %68 = vector.extract_strided_slice %33 {offsets = [1, 0], sizes = [1, 64], strides = [1, 1]} : vector<2x64xf32> to vector<1x64xf32>
    %69 = vector.broadcast %68 : vector<1x64xf32> to vector<16x64xf32>
    %70 = arith.addf %67, %69 : vector<16x64xf32>
    %cst_20 = arith.constant 0.000000e+00 : f32
    %71 = vector.broadcast %cst_20 : f32 to vector<16x64xf32>
    %72 = arith.maximumf %70, %71 : vector<16x64xf32>
    %c0_21 = arith.constant 0 : index
    %c0_22 = arith.constant 0 : index
    %73 = vector.load %arg1[%c0_21, %c0_22] : memref<24x6xf32, #tpu.memory_space<vmem>>, vector<24x6xf32>
    %c0_23 = arith.constant 0 : index
    %c0_24 = arith.constant 0 : index
    %74 = vector.load %arg9[%c0_23, %c0_24] : memref<2x6xf32, #tpu.memory_space<vmem>>, vector<2x6xf32>
    %c0_25 = arith.constant 0 : index
    %c0_26 = arith.constant 0 : index
    %75 = vector.load %arg10[%c0_25, %c0_26] : memref<6x64xbf16, #tpu.memory_space<vmem>>, vector<6x64xbf16>
    %c0_27 = arith.constant 0 : index
    %c0_28 = arith.constant 0 : index
    %76 = vector.load %arg11[%c0_27, %c0_28] : memref<2x64xf32, #tpu.memory_space<vmem>>, vector<2x64xf32>
    %c0_29 = arith.constant 0 : index
    %c0_30 = arith.constant 0 : index
    %77 = vector.load %arg12[%c0_29, %c0_30] : memref<64x64xbf16, #tpu.memory_space<vmem>>, vector<64x64xbf16>
    %78 = vector.extract_strided_slice %74 {offsets = [0, 0], sizes = [1, 6], strides = [1, 1]} : vector<2x6xf32> to vector<1x6xf32>
    %79 = vector.extract_strided_slice %74 {offsets = [1, 0], sizes = [1, 6], strides = [1, 1]} : vector<2x6xf32> to vector<1x6xf32>
    %cst_31 = arith.constant dense<0.000000e+00> : vector<24xf32>
    %80 = vector.multi_reduction <add>, %73, %cst_31 [1] : vector<24x6xf32> to vector<24xf32>
    %81 = vector.shape_cast %80 : vector<24xf32> to vector<24x1xf32>
    %cst_32 = arith.constant 6.000000e+00 : f32
    %82 = vector.broadcast %cst_32 : f32 to vector<24x1xf32>
    %83 = arith.divf %81, %82 : vector<24x1xf32>
    %84 = vector.broadcast %83 : vector<24x1xf32> to vector<24x6xf32>
    %85 = arith.subf %73, %84 : vector<24x6xf32>
    %86 = arith.mulf %85, %85 : vector<24x6xf32>
    %cst_33 = arith.constant dense<0.000000e+00> : vector<24xf32>
    %87 = vector.multi_reduction <add>, %86, %cst_33 [1] : vector<24x6xf32> to vector<24xf32>
    %88 = vector.shape_cast %87 : vector<24xf32> to vector<24x1xf32>
    %cst_34 = arith.constant 6.000000e+00 : f32
    %89 = vector.broadcast %cst_34 : f32 to vector<24x1xf32>
    %90 = arith.divf %88, %89 : vector<24x1xf32>
    %91 = vector.broadcast %83 : vector<24x1xf32> to vector<24x6xf32>
    %92 = arith.subf %73, %91 : vector<24x6xf32>
    %cst_35 = arith.constant 9.99999974E-6 : f32
    %93 = vector.broadcast %cst_35 : f32 to vector<24x1xf32>
    %94 = arith.addf %90, %93 : vector<24x1xf32>
    %95 = math.rsqrt %94 : vector<24x1xf32>
    %96 = vector.broadcast %95 : vector<24x1xf32> to vector<24x6xf32>
    %97 = arith.mulf %92, %96 : vector<24x6xf32>
    %98 = vector.broadcast %78 : vector<1x6xf32> to vector<24x6xf32>
    %99 = arith.mulf %97, %98 : vector<24x6xf32>
    %100 = vector.broadcast %79 : vector<1x6xf32> to vector<24x6xf32>
    %101 = arith.addf %99, %100 : vector<24x6xf32>
    %102 = arith.truncf %101 : vector<24x6xf32> to vector<24x6xbf16>
    %cst_36 = arith.constant dense<0.000000e+00> : vector<24x64xf32>
    %103 = tpu.matmul %102, %75, %cst_36 {dimension_numbers = #tpu.dot_dimension_numbers<[1], [0], [0], [1], [0, 0, 1, 1], [], []>} : vector<24x6xbf16>, vector<6x64xbf16>, vector<24x64xf32> -> vector<24x64xf32>
    %104 = vector.extract_strided_slice %76 {offsets = [0, 0], sizes = [1, 64], strides = [1, 1]} : vector<2x64xf32> to vector<1x64xf32>
    %105 = vector.broadcast %104 : vector<1x64xf32> to vector<24x64xf32>
    %106 = arith.addf %103, %105 : vector<24x64xf32>
    %cst_37 = arith.constant 0.000000e+00 : f32
    %107 = vector.broadcast %cst_37 : f32 to vector<24x64xf32>
    %108 = arith.maximumf %106, %107 : vector<24x64xf32>
    %109 = arith.truncf %108 : vector<24x64xf32> to vector<24x64xbf16>
    %cst_38 = arith.constant dense<0.000000e+00> : vector<24x64xf32>
    %110 = tpu.matmul %109, %77, %cst_38 {dimension_numbers = #tpu.dot_dimension_numbers<[1], [0], [0], [1], [0, 0, 1, 1], [], []>} : vector<24x64xbf16>, vector<64x64xbf16>, vector<24x64xf32> -> vector<24x64xf32>
    %111 = vector.extract_strided_slice %76 {offsets = [1, 0], sizes = [1, 64], strides = [1, 1]} : vector<2x64xf32> to vector<1x64xf32>
    %112 = vector.broadcast %111 : vector<1x64xf32> to vector<24x64xf32>
    %113 = arith.addf %110, %112 : vector<24x64xf32>
    %cst_39 = arith.constant 0.000000e+00 : f32
    %114 = vector.broadcast %cst_39 : f32 to vector<24x64xf32>
    %115 = arith.maximumf %113, %114 : vector<24x64xf32>
    %c0_40 = arith.constant 0 : index
    %c0_41 = arith.constant 0 : index
    %116 = vector.load %arg13[%c0_40, %c0_41] : memref<2x1xf32, #tpu.memory_space<vmem>>, vector<2x1xf32>
    %c0_42 = arith.constant 0 : index
    %c0_43 = arith.constant 0 : index
    %117 = vector.load %arg2[%c0_42, %c0_43] : memref<48x1xf32, #tpu.memory_space<vmem>>, vector<48x1xf32>
    %118 = vector.extract_strided_slice %116 {offsets = [0, 0], sizes = [1, 1], strides = [1, 1]} : vector<2x1xf32> to vector<1x1xf32>
    %119 = vector.extract_strided_slice %116 {offsets = [1, 0], sizes = [1, 1], strides = [1, 1]} : vector<2x1xf32> to vector<1x1xf32>
    %cst_44 = arith.constant dense<0.000000e+00> : vector<48xf32>
    %120 = vector.multi_reduction <add>, %117, %cst_44 [1] : vector<48x1xf32> to vector<48xf32>
    %121 = vector.shape_cast %120 : vector<48xf32> to vector<48x1xf32>
    %cst_45 = arith.constant 1.000000e+00 : f32
    %122 = vector.broadcast %cst_45 : f32 to vector<48x1xf32>
    %123 = arith.divf %121, %122 : vector<48x1xf32>
    %124 = arith.subf %117, %123 : vector<48x1xf32>
    %125 = arith.mulf %124, %124 : vector<48x1xf32>
    %cst_46 = arith.constant dense<0.000000e+00> : vector<48xf32>
    %126 = vector.multi_reduction <add>, %125, %cst_46 [1] : vector<48x1xf32> to vector<48xf32>
    %127 = vector.shape_cast %126 : vector<48xf32> to vector<48x1xf32>
    %cst_47 = arith.constant 1.000000e+00 : f32
    %128 = vector.broadcast %cst_47 : f32 to vector<48x1xf32>
    %129 = arith.divf %127, %128 : vector<48x1xf32>
    %130 = arith.subf %117, %123 : vector<48x1xf32>
    %cst_48 = arith.constant 9.99999974E-6 : f32
    %131 = vector.broadcast %cst_48 : f32 to vector<48x1xf32>
    %132 = arith.addf %129, %131 : vector<48x1xf32>
    %133 = math.rsqrt %132 : vector<48x1xf32>
    %134 = arith.mulf %130, %133 : vector<48x1xf32>
    %135 = vector.broadcast %118 : vector<1x1xf32> to vector<48x1xf32>
    %136 = arith.mulf %134, %135 : vector<48x1xf32>
    %137 = vector.broadcast %119 : vector<1x1xf32> to vector<48x1xf32>
    %138 = arith.addf %136, %137 : vector<48x1xf32>
    %c0_49 = arith.constant 0 : index
    %c0_50 = arith.constant 0 : index
    %139 = vector.load %arg14[%c0_49, %c0_50] : memref<9x64xf32, #tpu.memory_space<vmem>>, vector<9x64xf32>
    %c0_51 = arith.constant 0 : index
    %c0_52 = arith.constant 0 : index
    %140 = vector.load %arg15[%c0_51, %c0_52] : memref<128x64xbf16, #tpu.memory_space<vmem>>, vector<128x64xbf16>
    %c0_53 = arith.constant 0 : index
    %c0_54 = arith.constant 0 : index
    %141 = vector.load %arg16[%c0_53, %c0_54] : memref<64x64xbf16, #tpu.memory_space<vmem>>, vector<64x64xbf16>
    %c0_55 = arith.constant 0 : index
    %c0_56 = arith.constant 0 : index
    %142 = vector.load %arg17[%c0_55, %c0_56] : memref<128x64xbf16, #tpu.memory_space<vmem>>, vector<128x64xbf16>
    %c0_57 = arith.constant 0 : index
    %c0_58 = arith.constant 0 : index
    %143 = vector.load %arg18[%c0_57, %c0_58] : memref<64x64xbf16, #tpu.memory_space<vmem>>, vector<64x64xbf16>
    %144 = vector.extract_strided_slice %139 {offsets = [0, 0], sizes = [1, 64], strides = [1, 1]} : vector<9x64xf32> to vector<1x64xf32>
    %145 = vector.extract_strided_slice %139 {offsets = [1, 0], sizes = [1, 64], strides = [1, 1]} : vector<9x64xf32> to vector<1x64xf32>
    %146 = vector.extract_strided_slice %139 {offsets = [2, 0], sizes = [1, 64], strides = [1, 1]} : vector<9x64xf32> to vector<1x64xf32>
    %147 = vector.extract_strided_slice %139 {offsets = [3, 0], sizes = [1, 64], strides = [1, 1]} : vector<9x64xf32> to vector<1x64xf32>
    %148 = vector.extract_strided_slice %139 {offsets = [4, 0], sizes = [1, 64], strides = [1, 1]} : vector<9x64xf32> to vector<1x64xf32>
    %149 = vector.extract_strided_slice %139 {offsets = [5, 0], sizes = [1, 64], strides = [1, 1]} : vector<9x64xf32> to vector<1x64xf32>
    %150 = vector.extract_strided_slice %139 {offsets = [6, 0], sizes = [1, 64], strides = [1, 1]} : vector<9x64xf32> to vector<1x64xf32>
    %151 = vector.extract_strided_slice %139 {offsets = [7, 0], sizes = [1, 64], strides = [1, 1]} : vector<9x64xf32> to vector<1x64xf32>
    %152 = vector.extract_strided_slice %139 {offsets = [8, 0], sizes = [1, 64], strides = [1, 1]} : vector<9x64xf32> to vector<1x64xf32>
    %153 = arith.truncf %72 : vector<16x64xf32> to vector<16x64xbf16>
    %cst_59 = arith.constant dense<0.000000e+00> : vector<48x64xf32>
    %154 = tpu.matmul %11, %153, %cst_59 {dimension_numbers = #tpu.dot_dimension_numbers<[1], [0], [0], [1], [0, 0, 1, 1], [], []>} : vector<48x16xbf16>, vector<16x64xbf16>, vector<48x64xf32> -> vector<48x64xf32>
    %155 = arith.truncf %115 : vector<24x64xf32> to vector<24x64xbf16>
    %cst_60 = arith.constant dense<0.000000e+00> : vector<48x64xf32>
    %156 = tpu.matmul %17, %155, %cst_60 {dimension_numbers = #tpu.dot_dimension_numbers<[1], [0], [0], [1], [0, 0, 1, 1], [], []>} : vector<48x24xbf16>, vector<24x64xbf16>, vector<48x64xf32> -> vector<48x64xf32>
    %157 = tpu.concatenate %154, %156 in 1 : vector<48x64xf32>, vector<48x64xf32> -> vector<48x128xf32>
    %158 = arith.truncf %157 : vector<48x128xf32> to vector<48x128xbf16>
    %cst_61 = arith.constant dense<0.000000e+00> : vector<48x64xf32>
    %159 = tpu.matmul %158, %140, %cst_61 {dimension_numbers = #tpu.dot_dimension_numbers<[1], [0], [0], [1], [0, 0, 1, 1], [], []>} : vector<48x128xbf16>, vector<128x64xbf16>, vector<48x64xf32> -> vector<48x64xf32>
    %160 = vector.broadcast %145 : vector<1x64xf32> to vector<48x64xf32>
    %161 = arith.addf %159, %160 : vector<48x64xf32>
    %162 = vector.broadcast %138 : vector<48x1xf32> to vector<48x64xf32>
    %163 = vector.broadcast %144 : vector<1x64xf32> to vector<48x64xf32>
    %164 = arith.mulf %162, %163 : vector<48x64xf32>
    %165 = arith.addf %161, %164 : vector<48x64xf32>
    %cst_62 = arith.constant dense<0.000000e+00> : vector<48xf32>
    %166 = vector.multi_reduction <add>, %165, %cst_62 [1] : vector<48x64xf32> to vector<48xf32>
    %167 = vector.shape_cast %166 : vector<48xf32> to vector<48x1xf32>
    %cst_63 = arith.constant 6.400000e+01 : f32
    %168 = vector.broadcast %cst_63 : f32 to vector<48x1xf32>
    %169 = arith.divf %167, %168 : vector<48x1xf32>
    %170 = vector.broadcast %169 : vector<48x1xf32> to vector<48x64xf32>
    %171 = arith.subf %165, %170 : vector<48x64xf32>
    %172 = arith.mulf %171, %171 : vector<48x64xf32>
    %cst_64 = arith.constant dense<0.000000e+00> : vector<48xf32>
    %173 = vector.multi_reduction <add>, %172, %cst_64 [1] : vector<48x64xf32> to vector<48xf32>
    %174 = vector.shape_cast %173 : vector<48xf32> to vector<48x1xf32>
    %cst_65 = arith.constant 6.400000e+01 : f32
    %175 = vector.broadcast %cst_65 : f32 to vector<48x1xf32>
    %176 = arith.divf %174, %175 : vector<48x1xf32>
    %177 = vector.broadcast %169 : vector<48x1xf32> to vector<48x64xf32>
    %178 = arith.subf %165, %177 : vector<48x64xf32>
    %cst_66 = arith.constant 9.99999974E-6 : f32
    %179 = vector.broadcast %cst_66 : f32 to vector<48x1xf32>
    %180 = arith.addf %176, %179 : vector<48x1xf32>
    %181 = math.rsqrt %180 : vector<48x1xf32>
    %182 = vector.broadcast %181 : vector<48x1xf32> to vector<48x64xf32>
    %183 = arith.mulf %178, %182 : vector<48x64xf32>
    %184 = vector.broadcast %146 : vector<1x64xf32> to vector<48x64xf32>
    %185 = arith.mulf %183, %184 : vector<48x64xf32>
    %186 = vector.broadcast %147 : vector<1x64xf32> to vector<48x64xf32>
    %187 = arith.addf %185, %186 : vector<48x64xf32>
    %cst_67 = arith.constant 0.000000e+00 : f32
    %188 = vector.broadcast %cst_67 : f32 to vector<48x64xf32>
    %189 = arith.maximumf %187, %188 : vector<48x64xf32>
    %190 = arith.truncf %189 : vector<48x64xf32> to vector<48x64xbf16>
    %cst_68 = arith.constant dense<0.000000e+00> : vector<48x64xf32>
    %191 = tpu.matmul %190, %141, %cst_68 {dimension_numbers = #tpu.dot_dimension_numbers<[1], [0], [0], [1], [0, 0, 1, 1], [], []>} : vector<48x64xbf16>, vector<64x64xbf16>, vector<48x64xf32> -> vector<48x64xf32>
    %192 = vector.broadcast %148 : vector<1x64xf32> to vector<48x64xf32>
    %193 = arith.addf %191, %192 : vector<48x64xf32>
    %194 = arith.truncf %193 : vector<48x64xf32> to vector<48x64xbf16>
    %cst_69 = arith.constant dense<0.000000e+00> : vector<16x64xf32>
    %195 = tpu.matmul %23, %194, %cst_69 {dimension_numbers = #tpu.dot_dimension_numbers<[1], [0], [0], [1], [0, 0, 1, 1], [], []>} : vector<16x48xbf16>, vector<48x64xbf16>, vector<16x64xf32> -> vector<16x64xf32>
    %cst_70 = arith.constant dense<0.000000e+00> : vector<16xf32>
    %196 = vector.multi_reduction <add>, %195, %cst_70 [1] : vector<16x64xf32> to vector<16xf32>
    %197 = vector.shape_cast %196 : vector<16xf32> to vector<16x1xf32>
    %cst_71 = arith.constant 6.400000e+01 : f32
    %198 = vector.broadcast %cst_71 : f32 to vector<16x1xf32>
    %199 = arith.divf %197, %198 : vector<16x1xf32>
    %200 = vector.broadcast %199 : vector<16x1xf32> to vector<16x64xf32>
    %201 = arith.subf %195, %200 : vector<16x64xf32>
    %202 = arith.mulf %201, %201 : vector<16x64xf32>
    %cst_72 = arith.constant dense<0.000000e+00> : vector<16xf32>
    %203 = vector.multi_reduction <add>, %202, %cst_72 [1] : vector<16x64xf32> to vector<16xf32>
    %204 = vector.shape_cast %203 : vector<16xf32> to vector<16x1xf32>
    %cst_73 = arith.constant 6.400000e+01 : f32
    %205 = vector.broadcast %cst_73 : f32 to vector<16x1xf32>
    %206 = arith.divf %204, %205 : vector<16x1xf32>
    %207 = vector.broadcast %199 : vector<16x1xf32> to vector<16x64xf32>
    %208 = arith.subf %195, %207 : vector<16x64xf32>
    %cst_74 = arith.constant 9.99999974E-6 : f32
    %209 = vector.broadcast %cst_74 : f32 to vector<16x1xf32>
    %210 = arith.addf %206, %209 : vector<16x1xf32>
    %211 = math.rsqrt %210 : vector<16x1xf32>
    %212 = vector.broadcast %211 : vector<16x1xf32> to vector<16x64xf32>
    %213 = arith.mulf %208, %212 : vector<16x64xf32>
    %214 = vector.broadcast %149 : vector<1x64xf32> to vector<16x64xf32>
    %215 = arith.mulf %213, %214 : vector<16x64xf32>
    %216 = vector.broadcast %150 : vector<1x64xf32> to vector<16x64xf32>
    %217 = arith.addf %215, %216 : vector<16x64xf32>
    %218 = tpu.concatenate %217, %72 in 1 : vector<16x64xf32>, vector<16x64xf32> -> vector<16x128xf32>
    %219 = arith.truncf %218 : vector<16x128xf32> to vector<16x128xbf16>
    %cst_75 = arith.constant dense<0.000000e+00> : vector<16x64xf32>
    %220 = tpu.matmul %219, %142, %cst_75 {dimension_numbers = #tpu.dot_dimension_numbers<[1], [0], [0], [1], [0, 0, 1, 1], [], []>} : vector<16x128xbf16>, vector<128x64xbf16>, vector<16x64xf32> -> vector<16x64xf32>
    %221 = vector.broadcast %151 : vector<1x64xf32> to vector<16x64xf32>
    %222 = arith.addf %220, %221 : vector<16x64xf32>
    %cst_76 = arith.constant 0.000000e+00 : f32
    %223 = vector.broadcast %cst_76 : f32 to vector<16x64xf32>
    %224 = arith.maximumf %222, %223 : vector<16x64xf32>
    %225 = arith.truncf %224 : vector<16x64xf32> to vector<16x64xbf16>
    %cst_77 = arith.constant dense<0.000000e+00> : vector<16x64xf32>
    %226 = tpu.matmul %225, %143, %cst_77 {dimension_numbers = #tpu.dot_dimension_numbers<[1], [0], [0], [1], [0, 0, 1, 1], [], []>} : vector<16x64xbf16>, vector<64x64xbf16>, vector<16x64xf32> -> vector<16x64xf32>
    %227 = vector.broadcast %152 : vector<1x64xf32> to vector<16x64xf32>
    %228 = arith.addf %226, %227 : vector<16x64xf32>
    %c0_78 = arith.constant 0 : index
    %c0_79 = arith.constant 0 : index
    %229 = vector.load %arg19[%c0_78, %c0_79] : memref<9x64xf32, #tpu.memory_space<vmem>>, vector<9x64xf32>
    %c0_80 = arith.constant 0 : index
    %c0_81 = arith.constant 0 : index
    %230 = vector.load %arg20[%c0_80, %c0_81] : memref<128x64xbf16, #tpu.memory_space<vmem>>, vector<128x64xbf16>
    %c0_82 = arith.constant 0 : index
    %c0_83 = arith.constant 0 : index
    %231 = vector.load %arg21[%c0_82, %c0_83] : memref<64x64xbf16, #tpu.memory_space<vmem>>, vector<64x64xbf16>
    %c0_84 = arith.constant 0 : index
    %c0_85 = arith.constant 0 : index
    %232 = vector.load %arg22[%c0_84, %c0_85] : memref<128x64xbf16, #tpu.memory_space<vmem>>, vector<128x64xbf16>
    %c0_86 = arith.constant 0 : index
    %c0_87 = arith.constant 0 : index
    %233 = vector.load %arg23[%c0_86, %c0_87] : memref<64x64xbf16, #tpu.memory_space<vmem>>, vector<64x64xbf16>
    %234 = vector.extract_strided_slice %229 {offsets = [0, 0], sizes = [1, 64], strides = [1, 1]} : vector<9x64xf32> to vector<1x64xf32>
    %235 = vector.extract_strided_slice %229 {offsets = [1, 0], sizes = [1, 64], strides = [1, 1]} : vector<9x64xf32> to vector<1x64xf32>
    %236 = vector.extract_strided_slice %229 {offsets = [2, 0], sizes = [1, 64], strides = [1, 1]} : vector<9x64xf32> to vector<1x64xf32>
    %237 = vector.extract_strided_slice %229 {offsets = [3, 0], sizes = [1, 64], strides = [1, 1]} : vector<9x64xf32> to vector<1x64xf32>
    %238 = vector.extract_strided_slice %229 {offsets = [4, 0], sizes = [1, 64], strides = [1, 1]} : vector<9x64xf32> to vector<1x64xf32>
    %239 = vector.extract_strided_slice %229 {offsets = [5, 0], sizes = [1, 64], strides = [1, 1]} : vector<9x64xf32> to vector<1x64xf32>
    %240 = vector.extract_strided_slice %229 {offsets = [6, 0], sizes = [1, 64], strides = [1, 1]} : vector<9x64xf32> to vector<1x64xf32>
    %241 = vector.extract_strided_slice %229 {offsets = [7, 0], sizes = [1, 64], strides = [1, 1]} : vector<9x64xf32> to vector<1x64xf32>
    %242 = vector.extract_strided_slice %229 {offsets = [8, 0], sizes = [1, 64], strides = [1, 1]} : vector<9x64xf32> to vector<1x64xf32>
    %243 = arith.truncf %115 : vector<24x64xf32> to vector<24x64xbf16>
    %cst_88 = arith.constant dense<0.000000e+00> : vector<48x64xf32>
    %244 = tpu.matmul %17, %243, %cst_88 {dimension_numbers = #tpu.dot_dimension_numbers<[1], [0], [0], [1], [0, 0, 1, 1], [], []>} : vector<48x24xbf16>, vector<24x64xbf16>, vector<48x64xf32> -> vector<48x64xf32>
    %245 = arith.truncf %228 : vector<16x64xf32> to vector<16x64xbf16>
    %cst_89 = arith.constant dense<0.000000e+00> : vector<48x64xf32>
    %246 = tpu.matmul %11, %245, %cst_89 {dimension_numbers = #tpu.dot_dimension_numbers<[1], [0], [0], [1], [0, 0, 1, 1], [], []>} : vector<48x16xbf16>, vector<16x64xbf16>, vector<48x64xf32> -> vector<48x64xf32>
    %247 = tpu.concatenate %244, %246 in 1 : vector<48x64xf32>, vector<48x64xf32> -> vector<48x128xf32>
    %248 = arith.truncf %247 : vector<48x128xf32> to vector<48x128xbf16>
    %cst_90 = arith.constant dense<0.000000e+00> : vector<48x64xf32>
    %249 = tpu.matmul %248, %230, %cst_90 {dimension_numbers = #tpu.dot_dimension_numbers<[1], [0], [0], [1], [0, 0, 1, 1], [], []>} : vector<48x128xbf16>, vector<128x64xbf16>, vector<48x64xf32> -> vector<48x64xf32>
    %250 = vector.broadcast %235 : vector<1x64xf32> to vector<48x64xf32>
    %251 = arith.addf %249, %250 : vector<48x64xf32>
    %252 = vector.broadcast %138 : vector<48x1xf32> to vector<48x64xf32>
    %253 = vector.broadcast %234 : vector<1x64xf32> to vector<48x64xf32>
    %254 = arith.mulf %252, %253 : vector<48x64xf32>
    %255 = arith.addf %251, %254 : vector<48x64xf32>
    %cst_91 = arith.constant dense<0.000000e+00> : vector<48xf32>
    %256 = vector.multi_reduction <add>, %255, %cst_91 [1] : vector<48x64xf32> to vector<48xf32>
    %257 = vector.shape_cast %256 : vector<48xf32> to vector<48x1xf32>
    %cst_92 = arith.constant 6.400000e+01 : f32
    %258 = vector.broadcast %cst_92 : f32 to vector<48x1xf32>
    %259 = arith.divf %257, %258 : vector<48x1xf32>
    %260 = vector.broadcast %259 : vector<48x1xf32> to vector<48x64xf32>
    %261 = arith.subf %255, %260 : vector<48x64xf32>
    %262 = arith.mulf %261, %261 : vector<48x64xf32>
    %cst_93 = arith.constant dense<0.000000e+00> : vector<48xf32>
    %263 = vector.multi_reduction <add>, %262, %cst_93 [1] : vector<48x64xf32> to vector<48xf32>
    %264 = vector.shape_cast %263 : vector<48xf32> to vector<48x1xf32>
    %cst_94 = arith.constant 6.400000e+01 : f32
    %265 = vector.broadcast %cst_94 : f32 to vector<48x1xf32>
    %266 = arith.divf %264, %265 : vector<48x1xf32>
    %267 = vector.broadcast %259 : vector<48x1xf32> to vector<48x64xf32>
    %268 = arith.subf %255, %267 : vector<48x64xf32>
    %cst_95 = arith.constant 9.99999974E-6 : f32
    %269 = vector.broadcast %cst_95 : f32 to vector<48x1xf32>
    %270 = arith.addf %266, %269 : vector<48x1xf32>
    %271 = math.rsqrt %270 : vector<48x1xf32>
    %272 = vector.broadcast %271 : vector<48x1xf32> to vector<48x64xf32>
    %273 = arith.mulf %268, %272 : vector<48x64xf32>
    %274 = vector.broadcast %236 : vector<1x64xf32> to vector<48x64xf32>
    %275 = arith.mulf %273, %274 : vector<48x64xf32>
    %276 = vector.broadcast %237 : vector<1x64xf32> to vector<48x64xf32>
    %277 = arith.addf %275, %276 : vector<48x64xf32>
    %cst_96 = arith.constant 0.000000e+00 : f32
    %278 = vector.broadcast %cst_96 : f32 to vector<48x64xf32>
    %279 = arith.maximumf %277, %278 : vector<48x64xf32>
    %280 = arith.truncf %279 : vector<48x64xf32> to vector<48x64xbf16>
    %cst_97 = arith.constant dense<0.000000e+00> : vector<48x64xf32>
    %281 = tpu.matmul %280, %231, %cst_97 {dimension_numbers = #tpu.dot_dimension_numbers<[1], [0], [0], [1], [0, 0, 1, 1], [], []>} : vector<48x64xbf16>, vector<64x64xbf16>, vector<48x64xf32> -> vector<48x64xf32>
    %282 = vector.broadcast %238 : vector<1x64xf32> to vector<48x64xf32>
    %283 = arith.addf %281, %282 : vector<48x64xf32>
    %284 = arith.truncf %283 : vector<48x64xf32> to vector<48x64xbf16>
    %cst_98 = arith.constant dense<0.000000e+00> : vector<24x64xf32>
    %285 = tpu.matmul %29, %284, %cst_98 {dimension_numbers = #tpu.dot_dimension_numbers<[1], [0], [0], [1], [0, 0, 1, 1], [], []>} : vector<24x48xbf16>, vector<48x64xbf16>, vector<24x64xf32> -> vector<24x64xf32>
    %cst_99 = arith.constant dense<0.000000e+00> : vector<24xf32>
    %286 = vector.multi_reduction <add>, %285, %cst_99 [1] : vector<24x64xf32> to vector<24xf32>
    %287 = vector.shape_cast %286 : vector<24xf32> to vector<24x1xf32>
    %cst_100 = arith.constant 6.400000e+01 : f32
    %288 = vector.broadcast %cst_100 : f32 to vector<24x1xf32>
    %289 = arith.divf %287, %288 : vector<24x1xf32>
    %290 = vector.broadcast %289 : vector<24x1xf32> to vector<24x64xf32>
    %291 = arith.subf %285, %290 : vector<24x64xf32>
    %292 = arith.mulf %291, %291 : vector<24x64xf32>
    %cst_101 = arith.constant dense<0.000000e+00> : vector<24xf32>
    %293 = vector.multi_reduction <add>, %292, %cst_101 [1] : vector<24x64xf32> to vector<24xf32>
    %294 = vector.shape_cast %293 : vector<24xf32> to vector<24x1xf32>
    %cst_102 = arith.constant 6.400000e+01 : f32
    %295 = vector.broadcast %cst_102 : f32 to vector<24x1xf32>
    %296 = arith.divf %294, %295 : vector<24x1xf32>
    %297 = vector.broadcast %289 : vector<24x1xf32> to vector<24x64xf32>
    %298 = arith.subf %285, %297 : vector<24x64xf32>
    %cst_103 = arith.constant 9.99999974E-6 : f32
    %299 = vector.broadcast %cst_103 : f32 to vector<24x1xf32>
    %300 = arith.addf %296, %299 : vector<24x1xf32>
    %301 = math.rsqrt %300 : vector<24x1xf32>
    %302 = vector.broadcast %301 : vector<24x1xf32> to vector<24x64xf32>
    %303 = arith.mulf %298, %302 : vector<24x64xf32>
    %304 = vector.broadcast %239 : vector<1x64xf32> to vector<24x64xf32>
    %305 = arith.mulf %303, %304 : vector<24x64xf32>
    %306 = vector.broadcast %240 : vector<1x64xf32> to vector<24x64xf32>
    %307 = arith.addf %305, %306 : vector<24x64xf32>
    %308 = tpu.concatenate %307, %115 in 1 : vector<24x64xf32>, vector<24x64xf32> -> vector<24x128xf32>
    %309 = arith.truncf %308 : vector<24x128xf32> to vector<24x128xbf16>
    %cst_104 = arith.constant dense<0.000000e+00> : vector<24x64xf32>
    %310 = tpu.matmul %309, %232, %cst_104 {dimension_numbers = #tpu.dot_dimension_numbers<[1], [0], [0], [1], [0, 0, 1, 1], [], []>} : vector<24x128xbf16>, vector<128x64xbf16>, vector<24x64xf32> -> vector<24x64xf32>
    %311 = vector.broadcast %241 : vector<1x64xf32> to vector<24x64xf32>
    %312 = arith.addf %310, %311 : vector<24x64xf32>
    %cst_105 = arith.constant 0.000000e+00 : f32
    %313 = vector.broadcast %cst_105 : f32 to vector<24x64xf32>
    %314 = arith.maximumf %312, %313 : vector<24x64xf32>
    %315 = arith.truncf %314 : vector<24x64xf32> to vector<24x64xbf16>
    %cst_106 = arith.constant dense<0.000000e+00> : vector<24x64xf32>
    %316 = tpu.matmul %315, %233, %cst_106 {dimension_numbers = #tpu.dot_dimension_numbers<[1], [0], [0], [1], [0, 0, 1, 1], [], []>} : vector<24x64xbf16>, vector<64x64xbf16>, vector<24x64xf32> -> vector<24x64xf32>
    %317 = vector.broadcast %242 : vector<1x64xf32> to vector<24x64xf32>
    %318 = arith.addf %316, %317 : vector<24x64xf32>
    %c0_107 = arith.constant 0 : index
    %c0_108 = arith.constant 0 : index
    %319 = vector.load %arg24[%c0_107, %c0_108] : memref<9x64xf32, #tpu.memory_space<vmem>>, vector<9x64xf32>
    %c0_109 = arith.constant 0 : index
    %c0_110 = arith.constant 0 : index
    %320 = vector.load %arg25[%c0_109, %c0_110] : memref<128x64xbf16, #tpu.memory_space<vmem>>, vector<128x64xbf16>
    %c0_111 = arith.constant 0 : index
    %c0_112 = arith.constant 0 : index
    %321 = vector.load %arg26[%c0_111, %c0_112] : memref<64x64xbf16, #tpu.memory_space<vmem>>, vector<64x64xbf16>
    %c0_113 = arith.constant 0 : index
    %c0_114 = arith.constant 0 : index
    %322 = vector.load %arg27[%c0_113, %c0_114] : memref<128x64xbf16, #tpu.memory_space<vmem>>, vector<128x64xbf16>
    %c0_115 = arith.constant 0 : index
    %c0_116 = arith.constant 0 : index
    %323 = vector.load %arg28[%c0_115, %c0_116] : memref<64x64xbf16, #tpu.memory_space<vmem>>, vector<64x64xbf16>
    %324 = vector.extract_strided_slice %319 {offsets = [0, 0], sizes = [1, 64], strides = [1, 1]} : vector<9x64xf32> to vector<1x64xf32>
    %325 = vector.extract_strided_slice %319 {offsets = [1, 0], sizes = [1, 64], strides = [1, 1]} : vector<9x64xf32> to vector<1x64xf32>
    %326 = vector.extract_strided_slice %319 {offsets = [2, 0], sizes = [1, 64], strides = [1, 1]} : vector<9x64xf32> to vector<1x64xf32>
    %327 = vector.extract_strided_slice %319 {offsets = [3, 0], sizes = [1, 64], strides = [1, 1]} : vector<9x64xf32> to vector<1x64xf32>
    %328 = vector.extract_strided_slice %319 {offsets = [4, 0], sizes = [1, 64], strides = [1, 1]} : vector<9x64xf32> to vector<1x64xf32>
    %329 = vector.extract_strided_slice %319 {offsets = [5, 0], sizes = [1, 64], strides = [1, 1]} : vector<9x64xf32> to vector<1x64xf32>
    %330 = vector.extract_strided_slice %319 {offsets = [6, 0], sizes = [1, 64], strides = [1, 1]} : vector<9x64xf32> to vector<1x64xf32>
    %331 = vector.extract_strided_slice %319 {offsets = [7, 0], sizes = [1, 64], strides = [1, 1]} : vector<9x64xf32> to vector<1x64xf32>
    %332 = vector.extract_strided_slice %319 {offsets = [8, 0], sizes = [1, 64], strides = [1, 1]} : vector<9x64xf32> to vector<1x64xf32>
    %333 = arith.truncf %228 : vector<16x64xf32> to vector<16x64xbf16>
    %cst_117 = arith.constant dense<0.000000e+00> : vector<48x64xf32>
    %334 = tpu.matmul %11, %333, %cst_117 {dimension_numbers = #tpu.dot_dimension_numbers<[1], [0], [0], [1], [0, 0, 1, 1], [], []>} : vector<48x16xbf16>, vector<16x64xbf16>, vector<48x64xf32> -> vector<48x64xf32>
    %335 = arith.truncf %318 : vector<24x64xf32> to vector<24x64xbf16>
    %cst_118 = arith.constant dense<0.000000e+00> : vector<48x64xf32>
    %336 = tpu.matmul %17, %335, %cst_118 {dimension_numbers = #tpu.dot_dimension_numbers<[1], [0], [0], [1], [0, 0, 1, 1], [], []>} : vector<48x24xbf16>, vector<24x64xbf16>, vector<48x64xf32> -> vector<48x64xf32>
    %337 = tpu.concatenate %334, %336 in 1 : vector<48x64xf32>, vector<48x64xf32> -> vector<48x128xf32>
    %338 = arith.truncf %337 : vector<48x128xf32> to vector<48x128xbf16>
    %cst_119 = arith.constant dense<0.000000e+00> : vector<48x64xf32>
    %339 = tpu.matmul %338, %320, %cst_119 {dimension_numbers = #tpu.dot_dimension_numbers<[1], [0], [0], [1], [0, 0, 1, 1], [], []>} : vector<48x128xbf16>, vector<128x64xbf16>, vector<48x64xf32> -> vector<48x64xf32>
    %340 = vector.broadcast %325 : vector<1x64xf32> to vector<48x64xf32>
    %341 = arith.addf %339, %340 : vector<48x64xf32>
    %342 = vector.broadcast %138 : vector<48x1xf32> to vector<48x64xf32>
    %343 = vector.broadcast %324 : vector<1x64xf32> to vector<48x64xf32>
    %344 = arith.mulf %342, %343 : vector<48x64xf32>
    %345 = arith.addf %341, %344 : vector<48x64xf32>
    %cst_120 = arith.constant dense<0.000000e+00> : vector<48xf32>
    %346 = vector.multi_reduction <add>, %345, %cst_120 [1] : vector<48x64xf32> to vector<48xf32>
    %347 = vector.shape_cast %346 : vector<48xf32> to vector<48x1xf32>
    %cst_121 = arith.constant 6.400000e+01 : f32
    %348 = vector.broadcast %cst_121 : f32 to vector<48x1xf32>
    %349 = arith.divf %347, %348 : vector<48x1xf32>
    %350 = vector.broadcast %349 : vector<48x1xf32> to vector<48x64xf32>
    %351 = arith.subf %345, %350 : vector<48x64xf32>
    %352 = arith.mulf %351, %351 : vector<48x64xf32>
    %cst_122 = arith.constant dense<0.000000e+00> : vector<48xf32>
    %353 = vector.multi_reduction <add>, %352, %cst_122 [1] : vector<48x64xf32> to vector<48xf32>
    %354 = vector.shape_cast %353 : vector<48xf32> to vector<48x1xf32>
    %cst_123 = arith.constant 6.400000e+01 : f32
    %355 = vector.broadcast %cst_123 : f32 to vector<48x1xf32>
    %356 = arith.divf %354, %355 : vector<48x1xf32>
    %357 = vector.broadcast %349 : vector<48x1xf32> to vector<48x64xf32>
    %358 = arith.subf %345, %357 : vector<48x64xf32>
    %cst_124 = arith.constant 9.99999974E-6 : f32
    %359 = vector.broadcast %cst_124 : f32 to vector<48x1xf32>
    %360 = arith.addf %356, %359 : vector<48x1xf32>
    %361 = math.rsqrt %360 : vector<48x1xf32>
    %362 = vector.broadcast %361 : vector<48x1xf32> to vector<48x64xf32>
    %363 = arith.mulf %358, %362 : vector<48x64xf32>
    %364 = vector.broadcast %326 : vector<1x64xf32> to vector<48x64xf32>
    %365 = arith.mulf %363, %364 : vector<48x64xf32>
    %366 = vector.broadcast %327 : vector<1x64xf32> to vector<48x64xf32>
    %367 = arith.addf %365, %366 : vector<48x64xf32>
    %cst_125 = arith.constant 0.000000e+00 : f32
    %368 = vector.broadcast %cst_125 : f32 to vector<48x64xf32>
    %369 = arith.maximumf %367, %368 : vector<48x64xf32>
    %370 = arith.truncf %369 : vector<48x64xf32> to vector<48x64xbf16>
    %cst_126 = arith.constant dense<0.000000e+00> : vector<48x64xf32>
    %371 = tpu.matmul %370, %321, %cst_126 {dimension_numbers = #tpu.dot_dimension_numbers<[1], [0], [0], [1], [0, 0, 1, 1], [], []>} : vector<48x64xbf16>, vector<64x64xbf16>, vector<48x64xf32> -> vector<48x64xf32>
    %372 = vector.broadcast %328 : vector<1x64xf32> to vector<48x64xf32>
    %373 = arith.addf %371, %372 : vector<48x64xf32>
    %374 = arith.truncf %373 : vector<48x64xf32> to vector<48x64xbf16>
    %cst_127 = arith.constant dense<0.000000e+00> : vector<16x64xf32>
    %375 = tpu.matmul %23, %374, %cst_127 {dimension_numbers = #tpu.dot_dimension_numbers<[1], [0], [0], [1], [0, 0, 1, 1], [], []>} : vector<16x48xbf16>, vector<48x64xbf16>, vector<16x64xf32> -> vector<16x64xf32>
    %cst_128 = arith.constant dense<0.000000e+00> : vector<16xf32>
    %376 = vector.multi_reduction <add>, %375, %cst_128 [1] : vector<16x64xf32> to vector<16xf32>
    %377 = vector.shape_cast %376 : vector<16xf32> to vector<16x1xf32>
    %cst_129 = arith.constant 6.400000e+01 : f32
    %378 = vector.broadcast %cst_129 : f32 to vector<16x1xf32>
    %379 = arith.divf %377, %378 : vector<16x1xf32>
    %380 = vector.broadcast %379 : vector<16x1xf32> to vector<16x64xf32>
    %381 = arith.subf %375, %380 : vector<16x64xf32>
    %382 = arith.mulf %381, %381 : vector<16x64xf32>
    %cst_130 = arith.constant dense<0.000000e+00> : vector<16xf32>
    %383 = vector.multi_reduction <add>, %382, %cst_130 [1] : vector<16x64xf32> to vector<16xf32>
    %384 = vector.shape_cast %383 : vector<16xf32> to vector<16x1xf32>
    %cst_131 = arith.constant 6.400000e+01 : f32
    %385 = vector.broadcast %cst_131 : f32 to vector<16x1xf32>
    %386 = arith.divf %384, %385 : vector<16x1xf32>
    %387 = vector.broadcast %379 : vector<16x1xf32> to vector<16x64xf32>
    %388 = arith.subf %375, %387 : vector<16x64xf32>
    %cst_132 = arith.constant 9.99999974E-6 : f32
    %389 = vector.broadcast %cst_132 : f32 to vector<16x1xf32>
    %390 = arith.addf %386, %389 : vector<16x1xf32>
    %391 = math.rsqrt %390 : vector<16x1xf32>
    %392 = vector.broadcast %391 : vector<16x1xf32> to vector<16x64xf32>
    %393 = arith.mulf %388, %392 : vector<16x64xf32>
    %394 = vector.broadcast %329 : vector<1x64xf32> to vector<16x64xf32>
    %395 = arith.mulf %393, %394 : vector<16x64xf32>
    %396 = vector.broadcast %330 : vector<1x64xf32> to vector<16x64xf32>
    %397 = arith.addf %395, %396 : vector<16x64xf32>
    %398 = tpu.concatenate %397, %228 in 1 : vector<16x64xf32>, vector<16x64xf32> -> vector<16x128xf32>
    %399 = arith.truncf %398 : vector<16x128xf32> to vector<16x128xbf16>
    %cst_133 = arith.constant dense<0.000000e+00> : vector<16x64xf32>
    %400 = tpu.matmul %399, %322, %cst_133 {dimension_numbers = #tpu.dot_dimension_numbers<[1], [0], [0], [1], [0, 0, 1, 1], [], []>} : vector<16x128xbf16>, vector<128x64xbf16>, vector<16x64xf32> -> vector<16x64xf32>
    %401 = vector.broadcast %331 : vector<1x64xf32> to vector<16x64xf32>
    %402 = arith.addf %400, %401 : vector<16x64xf32>
    %cst_134 = arith.constant 0.000000e+00 : f32
    %403 = vector.broadcast %cst_134 : f32 to vector<16x64xf32>
    %404 = arith.maximumf %402, %403 : vector<16x64xf32>
    %405 = arith.truncf %404 : vector<16x64xf32> to vector<16x64xbf16>
    %cst_135 = arith.constant dense<0.000000e+00> : vector<16x64xf32>
    %406 = tpu.matmul %405, %323, %cst_135 {dimension_numbers = #tpu.dot_dimension_numbers<[1], [0], [0], [1], [0, 0, 1, 1], [], []>} : vector<16x64xbf16>, vector<64x64xbf16>, vector<16x64xf32> -> vector<16x64xf32>
    %407 = vector.broadcast %332 : vector<1x64xf32> to vector<16x64xf32>
    %408 = arith.addf %406, %407 : vector<16x64xf32>
    %c0_136 = arith.constant 0 : index
    %c0_137 = arith.constant 0 : index
    %409 = vector.load %arg29[%c0_136, %c0_137] : memref<9x64xf32, #tpu.memory_space<vmem>>, vector<9x64xf32>
    %c0_138 = arith.constant 0 : index
    %c0_139 = arith.constant 0 : index
    %410 = vector.load %arg30[%c0_138, %c0_139] : memref<128x64xbf16, #tpu.memory_space<vmem>>, vector<128x64xbf16>
    %c0_140 = arith.constant 0 : index
    %c0_141 = arith.constant 0 : index
    %411 = vector.load %arg31[%c0_140, %c0_141] : memref<64x64xbf16, #tpu.memory_space<vmem>>, vector<64x64xbf16>
    %c0_142 = arith.constant 0 : index
    %c0_143 = arith.constant 0 : index
    %412 = vector.load %arg32[%c0_142, %c0_143] : memref<128x64xbf16, #tpu.memory_space<vmem>>, vector<128x64xbf16>
    %c0_144 = arith.constant 0 : index
    %c0_145 = arith.constant 0 : index
    %413 = vector.load %arg33[%c0_144, %c0_145] : memref<64x64xbf16, #tpu.memory_space<vmem>>, vector<64x64xbf16>
    %414 = vector.extract_strided_slice %409 {offsets = [0, 0], sizes = [1, 64], strides = [1, 1]} : vector<9x64xf32> to vector<1x64xf32>
    %415 = vector.extract_strided_slice %409 {offsets = [1, 0], sizes = [1, 64], strides = [1, 1]} : vector<9x64xf32> to vector<1x64xf32>
    %416 = vector.extract_strided_slice %409 {offsets = [2, 0], sizes = [1, 64], strides = [1, 1]} : vector<9x64xf32> to vector<1x64xf32>
    %417 = vector.extract_strided_slice %409 {offsets = [3, 0], sizes = [1, 64], strides = [1, 1]} : vector<9x64xf32> to vector<1x64xf32>
    %418 = vector.extract_strided_slice %409 {offsets = [4, 0], sizes = [1, 64], strides = [1, 1]} : vector<9x64xf32> to vector<1x64xf32>
    %419 = vector.extract_strided_slice %409 {offsets = [5, 0], sizes = [1, 64], strides = [1, 1]} : vector<9x64xf32> to vector<1x64xf32>
    %420 = vector.extract_strided_slice %409 {offsets = [6, 0], sizes = [1, 64], strides = [1, 1]} : vector<9x64xf32> to vector<1x64xf32>
    %421 = vector.extract_strided_slice %409 {offsets = [7, 0], sizes = [1, 64], strides = [1, 1]} : vector<9x64xf32> to vector<1x64xf32>
    %422 = vector.extract_strided_slice %409 {offsets = [8, 0], sizes = [1, 64], strides = [1, 1]} : vector<9x64xf32> to vector<1x64xf32>
    %423 = arith.truncf %318 : vector<24x64xf32> to vector<24x64xbf16>
    %cst_146 = arith.constant dense<0.000000e+00> : vector<48x64xf32>
    %424 = tpu.matmul %17, %423, %cst_146 {dimension_numbers = #tpu.dot_dimension_numbers<[1], [0], [0], [1], [0, 0, 1, 1], [], []>} : vector<48x24xbf16>, vector<24x64xbf16>, vector<48x64xf32> -> vector<48x64xf32>
    %425 = arith.truncf %408 : vector<16x64xf32> to vector<16x64xbf16>
    %cst_147 = arith.constant dense<0.000000e+00> : vector<48x64xf32>
    %426 = tpu.matmul %11, %425, %cst_147 {dimension_numbers = #tpu.dot_dimension_numbers<[1], [0], [0], [1], [0, 0, 1, 1], [], []>} : vector<48x16xbf16>, vector<16x64xbf16>, vector<48x64xf32> -> vector<48x64xf32>
    %427 = tpu.concatenate %424, %426 in 1 : vector<48x64xf32>, vector<48x64xf32> -> vector<48x128xf32>
    %428 = arith.truncf %427 : vector<48x128xf32> to vector<48x128xbf16>
    %cst_148 = arith.constant dense<0.000000e+00> : vector<48x64xf32>
    %429 = tpu.matmul %428, %410, %cst_148 {dimension_numbers = #tpu.dot_dimension_numbers<[1], [0], [0], [1], [0, 0, 1, 1], [], []>} : vector<48x128xbf16>, vector<128x64xbf16>, vector<48x64xf32> -> vector<48x64xf32>
    %430 = vector.broadcast %415 : vector<1x64xf32> to vector<48x64xf32>
    %431 = arith.addf %429, %430 : vector<48x64xf32>
    %432 = vector.broadcast %138 : vector<48x1xf32> to vector<48x64xf32>
    %433 = vector.broadcast %414 : vector<1x64xf32> to vector<48x64xf32>
    %434 = arith.mulf %432, %433 : vector<48x64xf32>
    %435 = arith.addf %431, %434 : vector<48x64xf32>
    %cst_149 = arith.constant dense<0.000000e+00> : vector<48xf32>
    %436 = vector.multi_reduction <add>, %435, %cst_149 [1] : vector<48x64xf32> to vector<48xf32>
    %437 = vector.shape_cast %436 : vector<48xf32> to vector<48x1xf32>
    %cst_150 = arith.constant 6.400000e+01 : f32
    %438 = vector.broadcast %cst_150 : f32 to vector<48x1xf32>
    %439 = arith.divf %437, %438 : vector<48x1xf32>
    %440 = vector.broadcast %439 : vector<48x1xf32> to vector<48x64xf32>
    %441 = arith.subf %435, %440 : vector<48x64xf32>
    %442 = arith.mulf %441, %441 : vector<48x64xf32>
    %cst_151 = arith.constant dense<0.000000e+00> : vector<48xf32>
    %443 = vector.multi_reduction <add>, %442, %cst_151 [1] : vector<48x64xf32> to vector<48xf32>
    %444 = vector.shape_cast %443 : vector<48xf32> to vector<48x1xf32>
    %cst_152 = arith.constant 6.400000e+01 : f32
    %445 = vector.broadcast %cst_152 : f32 to vector<48x1xf32>
    %446 = arith.divf %444, %445 : vector<48x1xf32>
    %447 = vector.broadcast %439 : vector<48x1xf32> to vector<48x64xf32>
    %448 = arith.subf %435, %447 : vector<48x64xf32>
    %cst_153 = arith.constant 9.99999974E-6 : f32
    %449 = vector.broadcast %cst_153 : f32 to vector<48x1xf32>
    %450 = arith.addf %446, %449 : vector<48x1xf32>
    %451 = math.rsqrt %450 : vector<48x1xf32>
    %452 = vector.broadcast %451 : vector<48x1xf32> to vector<48x64xf32>
    %453 = arith.mulf %448, %452 : vector<48x64xf32>
    %454 = vector.broadcast %416 : vector<1x64xf32> to vector<48x64xf32>
    %455 = arith.mulf %453, %454 : vector<48x64xf32>
    %456 = vector.broadcast %417 : vector<1x64xf32> to vector<48x64xf32>
    %457 = arith.addf %455, %456 : vector<48x64xf32>
    %cst_154 = arith.constant 0.000000e+00 : f32
    %458 = vector.broadcast %cst_154 : f32 to vector<48x64xf32>
    %459 = arith.maximumf %457, %458 : vector<48x64xf32>
    %460 = arith.truncf %459 : vector<48x64xf32> to vector<48x64xbf16>
    %cst_155 = arith.constant dense<0.000000e+00> : vector<48x64xf32>
    %461 = tpu.matmul %460, %411, %cst_155 {dimension_numbers = #tpu.dot_dimension_numbers<[1], [0], [0], [1], [0, 0, 1, 1], [], []>} : vector<48x64xbf16>, vector<64x64xbf16>, vector<48x64xf32> -> vector<48x64xf32>
    %462 = vector.broadcast %418 : vector<1x64xf32> to vector<48x64xf32>
    %463 = arith.addf %461, %462 : vector<48x64xf32>
    %464 = arith.truncf %463 : vector<48x64xf32> to vector<48x64xbf16>
    %cst_156 = arith.constant dense<0.000000e+00> : vector<24x64xf32>
    %465 = tpu.matmul %29, %464, %cst_156 {dimension_numbers = #tpu.dot_dimension_numbers<[1], [0], [0], [1], [0, 0, 1, 1], [], []>} : vector<24x48xbf16>, vector<48x64xbf16>, vector<24x64xf32> -> vector<24x64xf32>
    %cst_157 = arith.constant dense<0.000000e+00> : vector<24xf32>
    %466 = vector.multi_reduction <add>, %465, %cst_157 [1] : vector<24x64xf32> to vector<24xf32>
    %467 = vector.shape_cast %466 : vector<24xf32> to vector<24x1xf32>
    %cst_158 = arith.constant 6.400000e+01 : f32
    %468 = vector.broadcast %cst_158 : f32 to vector<24x1xf32>
    %469 = arith.divf %467, %468 : vector<24x1xf32>
    %470 = vector.broadcast %469 : vector<24x1xf32> to vector<24x64xf32>
    %471 = arith.subf %465, %470 : vector<24x64xf32>
    %472 = arith.mulf %471, %471 : vector<24x64xf32>
    %cst_159 = arith.constant dense<0.000000e+00> : vector<24xf32>
    %473 = vector.multi_reduction <add>, %472, %cst_159 [1] : vector<24x64xf32> to vector<24xf32>
    %474 = vector.shape_cast %473 : vector<24xf32> to vector<24x1xf32>
    %cst_160 = arith.constant 6.400000e+01 : f32
    %475 = vector.broadcast %cst_160 : f32 to vector<24x1xf32>
    %476 = arith.divf %474, %475 : vector<24x1xf32>
    %477 = vector.broadcast %469 : vector<24x1xf32> to vector<24x64xf32>
    %478 = arith.subf %465, %477 : vector<24x64xf32>
    %cst_161 = arith.constant 9.99999974E-6 : f32
    %479 = vector.broadcast %cst_161 : f32 to vector<24x1xf32>
    %480 = arith.addf %476, %479 : vector<24x1xf32>
    %481 = math.rsqrt %480 : vector<24x1xf32>
    %482 = vector.broadcast %481 : vector<24x1xf32> to vector<24x64xf32>
    %483 = arith.mulf %478, %482 : vector<24x64xf32>
    %484 = vector.broadcast %419 : vector<1x64xf32> to vector<24x64xf32>
    %485 = arith.mulf %483, %484 : vector<24x64xf32>
    %486 = vector.broadcast %420 : vector<1x64xf32> to vector<24x64xf32>
    %487 = arith.addf %485, %486 : vector<24x64xf32>
    %488 = tpu.concatenate %487, %318 in 1 : vector<24x64xf32>, vector<24x64xf32> -> vector<24x128xf32>
    %489 = arith.truncf %488 : vector<24x128xf32> to vector<24x128xbf16>
    %cst_162 = arith.constant dense<0.000000e+00> : vector<24x64xf32>
    %490 = tpu.matmul %489, %412, %cst_162 {dimension_numbers = #tpu.dot_dimension_numbers<[1], [0], [0], [1], [0, 0, 1, 1], [], []>} : vector<24x128xbf16>, vector<128x64xbf16>, vector<24x64xf32> -> vector<24x64xf32>
    %491 = vector.broadcast %421 : vector<1x64xf32> to vector<24x64xf32>
    %492 = arith.addf %490, %491 : vector<24x64xf32>
    %cst_163 = arith.constant 0.000000e+00 : f32
    %493 = vector.broadcast %cst_163 : f32 to vector<24x64xf32>
    %494 = arith.maximumf %492, %493 : vector<24x64xf32>
    %495 = arith.truncf %494 : vector<24x64xf32> to vector<24x64xbf16>
    %cst_164 = arith.constant dense<0.000000e+00> : vector<24x64xf32>
    %496 = tpu.matmul %495, %413, %cst_164 {dimension_numbers = #tpu.dot_dimension_numbers<[1], [0], [0], [1], [0, 0, 1, 1], [], []>} : vector<24x64xbf16>, vector<64x64xbf16>, vector<24x64xf32> -> vector<24x64xf32>
    %497 = vector.broadcast %422 : vector<1x64xf32> to vector<24x64xf32>
    %498 = arith.addf %496, %497 : vector<24x64xf32>
    %499 = arith.truncf %498 : vector<24x64xf32> to vector<24x64xbf16>
    %c0_165 = arith.constant 0 : index
    %c0_166 = arith.constant 0 : index
    %500 = vector.load %arg34[%c0_165, %c0_166] : memref<64x64xbf16, #tpu.memory_space<vmem>>, vector<64x64xbf16>
    %cst_167 = arith.constant dense<0.000000e+00> : vector<24x64xf32>
    %501 = tpu.matmul %499, %500, %cst_167 {dimension_numbers = #tpu.dot_dimension_numbers<[1], [0], [0], [1], [0, 0, 1, 1], [], []>} : vector<24x64xbf16>, vector<64x64xbf16>, vector<24x64xf32> -> vector<24x64xf32>
    %c0_168 = arith.constant 0 : index
    %c0_169 = arith.constant 0 : index
    %502 = vector.load %arg35[%c0_168, %c0_169] : memref<1x64xf32, #tpu.memory_space<vmem>>, vector<1x64xf32>
    %503 = vector.broadcast %502 : vector<1x64xf32> to vector<24x64xf32>
    %504 = arith.addf %501, %503 : vector<24x64xf32>
    %cst_170 = arith.constant 0.000000e+00 : f32
    %505 = vector.broadcast %cst_170 : f32 to vector<24x64xf32>
    %506 = arith.maximumf %504, %505 : vector<24x64xf32>
    %507 = arith.truncf %506 : vector<24x64xf32> to vector<24x64xbf16>
    %c0_171 = arith.constant 0 : index
    %c0_172 = arith.constant 0 : index
    %508 = vector.load %arg36[%c0_171, %c0_172] : memref<64x128xbf16, #tpu.memory_space<vmem>>, vector<64x128xbf16>
    %cst_173 = arith.constant dense<0.000000e+00> : vector<24x128xf32>
    %509 = tpu.matmul %507, %508, %cst_173 {dimension_numbers = #tpu.dot_dimension_numbers<[1], [0], [0], [1], [0, 0, 1, 1], [], []>} : vector<24x64xbf16>, vector<64x128xbf16>, vector<24x128xf32> -> vector<24x128xf32>
    %c0_174 = arith.constant 0 : index
    %c0_175 = arith.constant 0 : index
    %510 = vector.load %arg37[%c0_174, %c0_175] : memref<1x128xf32, #tpu.memory_space<vmem>>, vector<1x128xf32>
    %511 = vector.broadcast %510 : vector<1x128xf32> to vector<24x128xf32>
    %512 = arith.addf %509, %511 : vector<24x128xf32>
    %513 = arith.negf %512 : vector<24x128xf32>
    %514 = math.exp %513 : vector<24x128xf32>
    %cst_176 = arith.constant 1.000000e+00 : f32
    %515 = vector.broadcast %cst_176 : f32 to vector<24x128xf32>
    %516 = arith.addf %515, %514 : vector<24x128xf32>
    %517 = arith.divf %515, %516 : vector<24x128xf32>
    %c0_177 = arith.constant 0 : index
    %c0_178 = arith.constant 0 : index
    %518 = vector.load %arg38[%c0_177, %c0_178] : memref<24x128xf32, #tpu.memory_space<vmem>>, vector<24x128xf32>
    tpu.vector_store %arg38[%c0_177, %c0_178], %517 {strides = array<i32>} : memref<24x128xf32, #tpu.memory_space<vmem>>, vector<24x128xf32>,
    return
  }
}

</mosaic_0001>

<llo_original>
// kernel: gnn_policy_forward.1
$region0: #{gnn_policy_forward.1}
  #allocation0 [shape = 'u32[]', space=smem, size = 0x4, offset = 0x4, fixed_abs, tag = 'smem constant byte address 0x4 - core index']
  #allocation1 [shape = 'u32[144,128]{1,0:T(1,128)}', space=vmem, size = 0x12000, scoped, tag = 'internal scratch']
  %s0 = inlined_call_operand.smem [shape: u32[39], index: -1, kind: input, shape index: {}]
  %s1 = sld [smem:[%s0]]
  %s2 = scalar_lea.smem %s0, 1
  %s3 = sld [smem:[%s2]]
  %s4 = scalar_lea.smem %s0, 2
  %s5 = sld [smem:[%s4]]
  %s6 = scalar_lea.smem %s0, 3
  %s7 = sld [smem:[%s6]]
  %s8 = scalar_lea.smem %s0, 4
  %s9 = sld [smem:[%s8]]
  %s10 = scalar_lea.smem %s0, 5
  %s11 = sld [smem:[%s10]]
  %s12 = scalar_lea.smem %s0, 6
  %s13 = sld [smem:[%s12]]
  %s14 = scalar_lea.smem %s0, 7
  %s15 = sld [smem:[%s14]]
  %s16 = scalar_lea.smem %s0, 8
  %s17 = sld [smem:[%s16]]
  %s18 = scalar_lea.smem %s0, 9
  %s19 = sld [smem:[%s18]]
  %s20 = scalar_lea.smem %s0, 10
  %s21 = sld [smem:[%s20]]
  %s22 = scalar_lea.smem %s0, 11
  %s23 = sld [smem:[%s22]]
  %s24 = scalar_lea.smem %s0, 12
  %s25 = sld [smem:[%s24]]
  %s26 = scalar_lea.smem %s0, 13
  %s27 = sld [smem:[%s26]]
  %s28 = scalar_lea.smem %s0, 14
  %s29 = sld [smem:[%s28]]
  %s30 = scalar_lea.smem %s0, 15
  %s31 = sld [smem:[%s30]]
  %s32 = scalar_lea.smem %s0, 16
  %s33 = sld [smem:[%s32]]
  %s34 = scalar_lea.smem %s0, 17
  %s35 = sld [smem:[%s34]]
  %s36 = scalar_lea.smem %s0, 18
  %s37 = sld [smem:[%s36]]
  %s38 = scalar_lea.smem %s0, 19
  %s39 = sld [smem:[%s38]]
  %s40 = scalar_lea.smem %s0, 20
  %s41 = sld [smem:[%s40]]
  %s42 = scalar_lea.smem %s0, 21
  %s43 = sld [smem:[%s42]]
  %s44 = scalar_lea.smem %s0, 22
  %s45 = sld [smem:[%s44]]
  %s46 = scalar_lea.smem %s0, 23
  %s47 = sld [smem:[%s46]]
  %s48 = scalar_lea.smem %s0, 24
  %s49 = sld [smem:[%s48]]
  %s50 = scalar_lea.smem %s0, 25
  %s51 = sld [smem:[%s50]]
  %s52 = scalar_lea.smem %s0, 26
  %s53 = sld [smem:[%s52]]
  %s54 = scalar_lea.smem %s0, 27
  %s55 = sld [smem:[%s54]]
  %s56 = scalar_lea.smem %s0, 28
  %s57 = sld [smem:[%s56]]
  %s58 = scalar_lea.smem %s0, 29
  %s59 = sld [smem:[%s58]]
  %s60 = scalar_lea.smem %s0, 30
  %s61 = sld [smem:[%s60]]
  %s62 = scalar_lea.smem %s0, 31
  %s63 = sld [smem:[%s62]]
  %s64 = scalar_lea.smem %s0, 32
  %s65 = sld [smem:[%s64]]
  %s66 = scalar_lea.smem %s0, 33
  %s67 = sld [smem:[%s66]]
  %s68 = scalar_lea.smem %s0, 34
  %s69 = sld [smem:[%s68]]
  %s70 = scalar_lea.smem %s0, 35
  %s71 = sld [smem:[%s70]]
  %s72 = scalar_lea.smem %s0, 36
  %s73 = sld [smem:[%s72]]
  %s74 = scalar_lea.smem %s0, 37
  %s75 = sld [smem:[%s74]]
  %s76 = scalar_lea.smem %s0, 38
  %s77 = sld [smem:[%s76]]
  %s78 = sld [smem:[#allocation0]]
  $region162: #{gnn_policy_forward.1} parent=0
    _
  %s80 = ssub.s32 1, %s78
  %s81 = scalar_select 0, %s80, %s78
  // Predicated region
  $region2: #{gnn_policy_forward.1} parent=0 // pred_check
    _
  $region3: #{gnn_policy_forward.1} parent=0 // pred_check_branch
    %83 = sbr.rel (0) target = $region5
  $region4: #{gnn_policy_forward.1} parent=0 // pred_region
    _
  $region5: #{gnn_policy_forward.1} parent=0 // pred_fallthru
    _
  // Predicated region
  $region6: #{gnn_policy_forward.1} parent=0 // pred_check
    _
  $region7: #{gnn_policy_forward.1} parent=0 // pred_check_branch
    %85 = sbr.rel (0) target = $region9
  $region8: #{gnn_policy_forward.1} parent=0 // pred_region
    _
  $region9: #{gnn_policy_forward.1} parent=0 // pred_fallthru
    _
  // Predicated region
  $region10: #{gnn_policy_forward.1} parent=0 // pred_check
    _
  $region11: #{gnn_policy_forward.1} parent=0 // pred_check_branch
    %87 = sbr.rel (0) target = $region13
  $region12: #{gnn_policy_forward.1} parent=0 // pred_region
    _
  $region13: #{gnn_policy_forward.1} parent=0 // pred_fallthru
    _
  // Predicated region
  $region14: #{gnn_policy_forward.1} parent=0 // pred_check
    _
  $region15: #{gnn_policy_forward.1} parent=0 // pred_check_branch
    %89 = sbr.rel (0) target = $region17
  $region16: #{gnn_policy_forward.1} parent=0 // pred_region
    _
  $region17: #{gnn_policy_forward.1} parent=0 // pred_fallthru
    _
  // Predicated region
  $region18: #{gnn_policy_forward.1} parent=0 // pred_check
    _
  $region19: #{gnn_policy_forward.1} parent=0 // pred_check_branch
    %91 = sbr.rel (0) target = $region21
  $region20: #{gnn_policy_forward.1} parent=0 // pred_region
    _
  $region21: #{gnn_policy_forward.1} parent=0 // pred_fallthru
    _
  // Predicated region
  $region22: #{gnn_policy_forward.1} parent=0 // pred_check
    _
  $region23: #{gnn_policy_forward.1} parent=0 // pred_check_branch
    %93 = sbr.rel (0) target = $region25
  $region24: #{gnn_policy_forward.1} parent=0 // pred_region
    _
  $region25: #{gnn_policy_forward.1} parent=0 // pred_fallthru
    _
  // Predicated region
  $region26: #{gnn_policy_forward.1} parent=0 // pred_check
    _
  $region27: #{gnn_policy_forward.1} parent=0 // pred_check_branch
    %95 = sbr.rel (0) target = $region29
  $region28: #{gnn_policy_forward.1} parent=0 // pred_region
    _
  $region29: #{gnn_policy_forward.1} parent=0 // pred_fallthru
    _
  // Predicated region
  $region30: #{gnn_policy_forward.1} parent=0 // pred_check
    _
  $region31: #{gnn_policy_forward.1} parent=0 // pred_check_branch
    %97 = sbr.rel (0) target = $region33
  $region32: #{gnn_policy_forward.1} parent=0 // pred_region
    _
  $region33: #{gnn_policy_forward.1} parent=0 // pred_fallthru
    _
  // Predicated region
  $region34: #{gnn_policy_forward.1} parent=0 // pred_check
    _
  $region35: #{gnn_policy_forward.1} parent=0 // pred_check_branch
    %99 = sbr.rel (0) target = $region37
  $region36: #{gnn_policy_forward.1} parent=0 // pred_region
    _
  $region37: #{gnn_policy_forward.1} parent=0 // pred_fallthru
    _
  // Predicated region
  $region38: #{gnn_policy_forward.1} parent=0 // pred_check
    _
  $region39: #{gnn_policy_forward.1} parent=0 // pred_check_branch
    %101 = sbr.rel (0) target = $region41
  $region40: #{gnn_policy_forward.1} parent=0 // pred_region
    _
  $region41: #{gnn_policy_forward.1} parent=0 // pred_fallthru
    _
  // Predicated region
  $region42: #{gnn_policy_forward.1} parent=0 // pred_check
    _
  $region43: #{gnn_policy_forward.1} parent=0 // pred_check_branch
    %103 = sbr.rel (0) target = $region45
  $region44: #{gnn_policy_forward.1} parent=0 // pred_region
    _
  $region45: #{gnn_policy_forward.1} parent=0 // pred_fallthru
    _
  // Predicated region
  $region46: #{gnn_policy_forward.1} parent=0 // pred_check
    _
  $region47: #{gnn_policy_forward.1} parent=0 // pred_check_branch
    %105 = sbr.rel (0) target = $region49
  $region48: #{gnn_policy_forward.1} parent=0 // pred_region
    _
  $region49: #{gnn_policy_forward.1} parent=0 // pred_fallthru
    _
  // Predicated region
  $region50: #{gnn_policy_forward.1} parent=0 // pred_check
    _
  $region51: #{gnn_policy_forward.1} parent=0 // pred_check_branch
    %107 = sbr.rel (0) target = $region53
  $region52: #{gnn_policy_forward.1} parent=0 // pred_region
    _
  $region53: #{gnn_policy_forward.1} parent=0 // pred_fallthru
    _
  // Predicated region
  $region54: #{gnn_policy_forward.1} parent=0 // pred_check
    _
  $region55: #{gnn_policy_forward.1} parent=0 // pred_check_branch
    %109 = sbr.rel (0) target = $region57
  $region56: #{gnn_policy_forward.1} parent=0 // pred_region
    _
  $region57: #{gnn_policy_forward.1} parent=0 // pred_fallthru
    _
  // Predicated region
  $region58: #{gnn_policy_forward.1} parent=0 // pred_check
    _
  $region59: #{gnn_policy_forward.1} parent=0 // pred_check_branch
    %111 = sbr.rel (0) target = $region61
  $region60: #{gnn_policy_forward.1} parent=0 // pred_region
    _
  $region61: #{gnn_policy_forward.1} parent=0 // pred_fallthru
    _
  // Predicated region
  $region62: #{gnn_policy_forward.1} parent=0 // pred_check
    _
  $region63: #{gnn_policy_forward.1} parent=0 // pred_check_branch
    %113 = sbr.rel (0) target = $region65
  $region64: #{gnn_policy_forward.1} parent=0 // pred_region
    _
  $region65: #{gnn_policy_forward.1} parent=0 // pred_fallthru
    _
  // Predicated region
  $region66: #{gnn_policy_forward.1} parent=0 // pred_check
    _
  $region67: #{gnn_policy_forward.1} parent=0 // pred_check_branch
    %115 = sbr.rel (0) target = $region69
  $region68: #{gnn_policy_forward.1} parent=0 // pred_region
    _
  $region69: #{gnn_policy_forward.1} parent=0 // pred_fallthru
    _
  // Predicated region
  $region70: #{gnn_policy_forward.1} parent=0 // pred_check
    _
  $region71: #{gnn_policy_forward.1} parent=0 // pred_check_branch
    %117 = sbr.rel (0) target = $region73
  $region72: #{gnn_policy_forward.1} parent=0 // pred_region
    _
  $region73: #{gnn_policy_forward.1} parent=0 // pred_fallthru
    _
  // Predicated region
  $region74: #{gnn_policy_forward.1} parent=0 // pred_check
    _
  $region75: #{gnn_policy_forward.1} parent=0 // pred_check_branch
    %119 = sbr.rel (0) target = $region77
  $region76: #{gnn_policy_forward.1} parent=0 // pred_region
    _
  $region77: #{gnn_policy_forward.1} parent=0 // pred_fallthru
    _
  // Predicated region
  $region78: #{gnn_policy_forward.1} parent=0 // pred_check
    _
  $region79: #{gnn_policy_forward.1} parent=0 // pred_check_branch
    %121 = sbr.rel (0) target = $region81
  $region80: #{gnn_policy_forward.1} parent=0 // pred_region
    _
  $region81: #{gnn_policy_forward.1} parent=0 // pred_fallthru
    _
  // Predicated region
  $region82: #{gnn_policy_forward.1} parent=0 // pred_check
    _
  $region83: #{gnn_policy_forward.1} parent=0 // pred_check_branch
    %123 = sbr.rel (0) target = $region85
  $region84: #{gnn_policy_forward.1} parent=0 // pred_region
    _
  $region85: #{gnn_policy_forward.1} parent=0 // pred_fallthru
    _
  // Predicated region
  $region86: #{gnn_policy_forward.1} parent=0 // pred_check
    _
  $region87: #{gnn_policy_forward.1} parent=0 // pred_check_branch
    %125 = sbr.rel (0) target = $region89
  $region88: #{gnn_policy_forward.1} parent=0 // pred_region
    _
  $region89: #{gnn_policy_forward.1} parent=0 // pred_fallthru
    _
  // Predicated region
  $region90: #{gnn_policy_forward.1} parent=0 // pred_check
    _
  $region91: #{gnn_policy_forward.1} parent=0 // pred_check_branch
    %127 = sbr.rel (0) target = $region93
  $region92: #{gnn_policy_forward.1} parent=0 // pred_region
    _
  $region93: #{gnn_policy_forward.1} parent=0 // pred_fallthru
    _
  // Predicated region
  $region94: #{gnn_policy_forward.1} parent=0 // pred_check
    _
  $region95: #{gnn_policy_forward.1} parent=0 // pred_check_branch
    %129 = sbr.rel (0) target = $region97
  $region96: #{gnn_policy_forward.1} parent=0 // pred_region
    _
  $region97: #{gnn_policy_forward.1} parent=0 // pred_fallthru
    _
  // Predicated region
  $region98: #{gnn_policy_forward.1} parent=0 // pred_check
    _
  $region99: #{gnn_policy_forward.1} parent=0 // pred_check_branch
    %131 = sbr.rel (0) target = $region101
  $region100: #{gnn_policy_forward.1} parent=0 // pred_region
    _
  $region101: #{gnn_policy_forward.1} parent=0 // pred_fallthru
    _
  // Predicated region
  $region102: #{gnn_policy_forward.1} parent=0 // pred_check
    _
  $region103: #{gnn_policy_forward.1} parent=0 // pred_check_branch
    %133 = sbr.rel (0) target = $region105
  $region104: #{gnn_policy_forward.1} parent=0 // pred_region
    _
  $region105: #{gnn_policy_forward.1} parent=0 // pred_fallthru
    _
  // Predicated region
  $region106: #{gnn_policy_forward.1} parent=0 // pred_check
    _
  $region107: #{gnn_policy_forward.1} parent=0 // pred_check_branch
    %135 = sbr.rel (0) target = $region109
  $region108: #{gnn_policy_forward.1} parent=0 // pred_region
    _
  $region109: #{gnn_policy_forward.1} parent=0 // pred_fallthru
    _
  // Predicated region
  $region110: #{gnn_policy_forward.1} parent=0 // pred_check
    _
  $region111: #{gnn_policy_forward.1} parent=0 // pred_check_branch
    %137 = sbr.rel (0) target = $region113
  $region112: #{gnn_policy_forward.1} parent=0 // pred_region
    _
  $region113: #{gnn_policy_forward.1} parent=0 // pred_fallthru
    _
  // Predicated region
  $region114: #{gnn_policy_forward.1} parent=0 // pred_check
    _
  $region115: #{gnn_policy_forward.1} parent=0 // pred_check_branch
    %139 = sbr.rel (0) target = $region117
  $region116: #{gnn_policy_forward.1} parent=0 // pred_region
    _
  $region117: #{gnn_policy_forward.1} parent=0 // pred_fallthru
    _
  // Predicated region
  $region118: #{gnn_policy_forward.1} parent=0 // pred_check
    _
  $region119: #{gnn_policy_forward.1} parent=0 // pred_check_branch
    %141 = sbr.rel (0) target = $region121
  $region120: #{gnn_policy_forward.1} parent=0 // pred_region
    _
  $region121: #{gnn_policy_forward.1} parent=0 // pred_fallthru
    _
  // Predicated region
  $region122: #{gnn_policy_forward.1} parent=0 // pred_check
    _
  $region123: #{gnn_policy_forward.1} parent=0 // pred_check_branch
    %143 = sbr.rel (0) target = $region125
  $region124: #{gnn_policy_forward.1} parent=0 // pred_region
    _
  $region125: #{gnn_policy_forward.1} parent=0 // pred_fallthru
    _
  // Predicated region
  $region126: #{gnn_policy_forward.1} parent=0 // pred_check
    _
  $region127: #{gnn_policy_forward.1} parent=0 // pred_check_branch
    %145 = sbr.rel (0) target = $region129
  $region128: #{gnn_policy_forward.1} parent=0 // pred_region
    _
  $region129: #{gnn_policy_forward.1} parent=0 // pred_fallthru
    _
  // Predicated region
  $region130: #{gnn_policy_forward.1} parent=0 // pred_check
    _
  $region131: #{gnn_policy_forward.1} parent=0 // pred_check_branch
    %147 = sbr.rel (0) target = $region133
  $region132: #{gnn_policy_forward.1} parent=0 // pred_region
    _
  $region133: #{gnn_policy_forward.1} parent=0 // pred_fallthru
    _
  // Predicated region
  $region134: #{gnn_policy_forward.1} parent=0 // pred_check
    _
  $region135: #{gnn_policy_forward.1} parent=0 // pred_check_branch
    %149 = sbr.rel (0) target = $region137
  $region136: #{gnn_policy_forward.1} parent=0 // pred_region
    _
  $region137: #{gnn_policy_forward.1} parent=0 // pred_fallthru
    _
  // Predicated region
  $region138: #{gnn_policy_forward.1} parent=0 // pred_check
    _
  $region139: #{gnn_policy_forward.1} parent=0 // pred_check_branch
    %151 = sbr.rel (0) target = $region141
  $region140: #{gnn_policy_forward.1} parent=0 // pred_region
    _
  $region141: #{gnn_policy_forward.1} parent=0 // pred_fallthru
    _
  // Predicated region
  $region142: #{gnn_policy_forward.1} parent=0 // pred_check
    _
  $region143: #{gnn_policy_forward.1} parent=0 // pred_check_branch
    %153 = sbr.rel (0) target = $region145
  $region144: #{gnn_policy_forward.1} parent=0 // pred_region
    _
  $region145: #{gnn_policy_forward.1} parent=0 // pred_fallthru
    _
  // Predicated region
  $region146: #{gnn_policy_forward.1} parent=0 // pred_check
    _
  $region147: #{gnn_policy_forward.1} parent=0 // pred_check_branch
    %155 = sbr.rel (0) target = $region149
  $region148: #{gnn_policy_forward.1} parent=0 // pred_region
    _
  $region149: #{gnn_policy_forward.1} parent=0 // pred_fallthru
    _
  // Predicated region
  $region150: #{gnn_policy_forward.1} parent=0 // pred_check
    _
  $region151: #{gnn_policy_forward.1} parent=0 // pred_check_branch
    %157 = sbr.rel (0) target = $region153
  $region152: #{gnn_policy_forward.1} parent=0 // pred_region
    _
  $region153: #{gnn_policy_forward.1} parent=0 // pred_fallthru
    _
  %v159 = vld [vmem:[%s7] sm:$0xff]
  %v160 = vld [vmem:[%s7 + $0x8] sm:$0xff]
  %v161 = vld [vmem:[%s7 + $0x10] sm:$0xff]
  %v162 = vld [vmem:[%s7 + $0x18] sm:$0xff]
  %v163 = vld [vmem:[%s7 + $0x20] sm:$0xff]
  %v164 = vld [vmem:[%s7 + $0x28] sm:$0xff]
  %v165 = vld [vmem:[%s9] sm:$0x3]
  %v166 = vlaneseq
  %v167 = vand.u32 %v166, 127
  %168 = vset.pattern.permute.xlu0 0
  %169 = vperm.xlu0 %168, %v159
  %v170 = vpop.permute.xlu0 %169
  %171 = vset.pattern.permute.xlu0 0
  %172 = vperm.xlu0 %171, %v160
  %v173 = vpop.permute.xlu0 %172
  %174 = vset.pattern.permute.xlu0 0
  %175 = vperm.xlu0 %174, %v161
  %v176 = vpop.permute.xlu0 %175
  %177 = vset.pattern.permute.xlu0 0
  %178 = vperm.xlu0 %177, %v162
  %v179 = vpop.permute.xlu0 %178
  %180 = vset.pattern.permute.xlu0 0
  %181 = vperm.xlu0 %180, %v163
  %v182 = vpop.permute.xlu0 %181
  %183 = vset.pattern.permute.xlu0 0
  %184 = vperm.xlu0 %183, %v164
  %v185 = vpop.permute.xlu0 %184
  %vm186 = vcmp.eq.s32.totalorder %v167, %v170
  %vm187 = vcmp.eq.s32.totalorder %v167, %v173
  %vm188 = vcmp.eq.s32.totalorder %v167, %v176
  %vm189 = vcmp.eq.s32.totalorder %v167, %v179
  %vm190 = vcmp.eq.s32.totalorder %v167, %v182
  %vm191 = vcmp.eq.s32.totalorder %v167, %v185
  %v192 = vsel %vm186, 1, 0
  %v193 = vsel %vm187, 1, 0
  %v194 = vsel %vm188, 1, 0
  %v195 = vsel %vm189, 1, 0
  %v196 = vsel %vm190, 1, 0
  %v197 = vsel %vm191, 1, 0
  %v198 = vcvt.s32.f32 %v192
  %v199 = vcvt.s32.f32 %v193
  %v200 = vcvt.s32.f32 %v194
  %v201 = vcvt.s32.f32 %v195
  %v202 = vcvt.s32.f32 %v196
  %v203 = vcvt.s32.f32 %v197
  %v204 = vpack.c.bf16 %v199, %v198
  %v205 = vpack.c.bf16 %v201, %v200
  %v206 = vpack.c.bf16 %v203, %v202
  %207 = vset.pattern.permute.xlu0 1
  %208 = vperm.xlu0 %207, %v159
  %v209 = vpop.permute.xlu0 %208
  %210 = vset.pattern.permute.xlu0 1
  %211 = vperm.xlu0 %210, %v160
  %v212 = vpop.permute.xlu0 %211
  %213 = vset.pattern.permute.xlu0 1
  %214 = vperm.xlu0 %213, %v161
  %v215 = vpop.permute.xlu0 %214
  %216 = vset.pattern.permute.xlu0 1
  %217 = vperm.xlu0 %216, %v162
  %v218 = vpop.permute.xlu0 %217
  %219 = vset.pattern.permute.xlu0 1
  %220 = vperm.xlu0 %219, %v163
  %v221 = vpop.permute.xlu0 %220
  %222 = vset.pattern.permute.xlu0 1
  %223 = vperm.xlu0 %222, %v164
  %v224 = vpop.permute.xlu0 %223
  %vm225 = vcmp.eq.s32.totalorder %v167, %v209
  %vm226 = vcmp.eq.s32.totalorder %v167, %v212
  %vm227 = vcmp.eq.s32.totalorder %v167, %v215
  %vm228 = vcmp.eq.s32.totalorder %v167, %v218
  %vm229 = vcmp.eq.s32.totalorder %v167, %v221
  %vm230 = vcmp.eq.s32.totalorder %v167, %v224
  %v231 = vsel %vm225, 1, 0
  %v232 = vsel %vm226, 1, 0
  %v233 = vsel %vm227, 1, 0
  %v234 = vsel %vm228, 1, 0
  %v235 = vsel %vm229, 1, 0
  %v236 = vsel %vm230, 1, 0
  %v237 = vcvt.s32.f32 %v231
  %v238 = vcvt.s32.f32 %v232
  %v239 = vcvt.s32.f32 %v233
  %v240 = vcvt.s32.f32 %v234
  %v241 = vcvt.s32.f32 %v235
  %v242 = vcvt.s32.f32 %v236
  %v243 = vpack.c.bf16 %v238, %v237
  %v244 = vpack.c.bf16 %v240, %v239
  %v245 = vpack.c.bf16 %v242, %v241
  %v246 = vlaneseq
  %v247 = vshrl.u32 %v246, 7
  %v248 = vadd.s32 %v247, 8
  %v249 = vlaneseq
  %v250 = vshrl.u32 %v249, 7
  %v251 = vsub.s32 0, %v250
  %v252 = vrot.slane %v165, %v251
  %vm253 = vcmp.eq.s32.totalorder %v247, %v252
  %vm254 = vcmp.eq.s32.totalorder %v248, %v252
  %v255 = vsel %vm253, 1, 0
  %v256 = vsel %vm254, 1, 0
  %v257 = vcvt.s32.f32 %v255
  %v258 = vcvt.s32.f32 %v256
  %v259 = vpack.c.bf16 %v258, %v257
  %v260 = vadd.s32 %v247, 16
  %v261 = vlaneseq
  %v262 = vshrl.u32 %v261, 7
  %v263 = vsub.s32 1, %v262
  %v264 = vrot.slane %v165, %v263
  %vm265 = vcmp.eq.s32.totalorder %v247, %v264
  %vm266 = vcmp.eq.s32.totalorder %v248, %v264
  %vm267 = vcmp.eq.s32.totalorder %v260, %v264
  %v268 = vsel %vm265, 1, 0
  %v269 = vsel %vm266, 1, 0
  %v270 = vsel %vm267, 1, 0
  %v271 = vcvt.s32.f32 %v268
  %v272 = vcvt.s32.f32 %v269
  %v273 = vcvt.s32.f32 %v270
  %v274 = vpack.c.bf16 %v272, %v271
  %v275 = vpack.c.bf16 %v273, %v273
  %v276 = vld [vmem:[%s1] sm:$0xff]
  %v277 = vld [vmem:[%s1 + $0x8] sm:$0xff]
  %v278 = vld [vmem:[%s11] sm:$0x3]
  %v279 = vld [vmem:[%s13] sm:$0x3]
  %v280 = vld [vmem:[%s15] sm:$0x3]
  %v281 = vld [vmem:[%s17] sm:$0xf]
  %v282 = vld [vmem:[%s17 + $0x4] sm:$0xf]
  %v283 = vld [vmem:[%s17 + $0x8] sm:$0xf]
  %v284 = vld [vmem:[%s17 + $0xc] sm:$0xf]
  %v285 = vld [vmem:[%s17 + $0x10] sm:$0xf]
  %v286 = vld [vmem:[%s17 + $0x14] sm:$0xf]
  %v287 = vld [vmem:[%s17 + $0x18] sm:$0xf]
  %v288 = vld [vmem:[%s17 + $0x1c] sm:$0xf]
  %vm289 = vcmask 31744
  %v290 = vsel %vm289, %v276, 0.0
  %291 = vadd.xlane.f32.xlu0 %v290
  %v292 = vpop.xlane.xlu0 %291
  %v293 = vsel %vm289, %v277, 0.0
  %294 = vadd.xlane.f32.xlu0 %v293
  %v295 = vpop.xlane.xlu0 %294
  %v296 = vrcp.pop 4.0
  %v297 = vmul.f32 %v292, %v296
  %v298 = vmul.f32 %v295, %v296
  %v299 = vsub.f32 %v276, %v297
  %v300 = vsub.f32 %v277, %v298
  %v301 = vmul.f32 %v299, %v299
  %v302 = vmul.f32 %v300, %v300
  %v303 = vsel %vm289, %v301, 0.0
  %304 = vadd.xlane.f32.xlu0 %v303
  %v305 = vpop.xlane.xlu0 %304
  %v306 = vsel %vm289, %v302, 0.0
  %307 = vadd.xlane.f32.xlu0 %v306
  %v308 = vpop.xlane.xlu0 %307
  %v309 = vmul.f32 %v305, %v296
  %v310 = vmul.f32 %v308, %v296
  %v311 = vadd.f32 %v309, 1e-05
  %v312 = vadd.f32 %v310, 1e-05
  %v313 = vrsqrt.pop %v311
  %v314 = vrsqrt.pop %v312
  %v315 = vmul.f32 %v299, %v313
  %v316 = vmul.f32 %v300, %v314
  %v317 = vlaneseq
  %v318 = vshrl.u32 %v317, 7
  %v319 = vsub.s32 0, %v318
  %v320 = vrot.slane %v278, %v319
  %v321 = vmul.f32 %v315, %v320
  %v322 = vmul.f32 %v316, %v320
  %v323 = vlaneseq
  %v324 = vshrl.u32 %v323, 7
  %v325 = vsub.s32 1, %v324
  %v326 = vrot.slane %v278, %v325
  %v327 = vadd.f32 %v321, %v326
  %v328 = vadd.f32 %v322, %v326
  %v329 = vpack.c.bf16 %v328, %v327
  %v330 = vlaneseq
  %v331 = vshrl.u32 %v330, 7
  %v332 = vsub.s32 0, %v331
  %v333 = vrot.slane %v280, %v332
  %v335 = vsel %vm289, %v329, 0
  %vm337 = vcmask 1041408
  %v339 = vsel %vm337, %v279, 0
  %341 = vmatprep.subr.bf16.mxu0 0
  %342 = vmatpush1.bf16.msra.mxu0 %v339
  %343 = vmatprep.subr.bf16.mxu0 0
  %344 = vmatpush1.bf16.msra.mxu0 0
  %345 = vmatprep.subr.bf16.mxu0 0
  %346 = vmatpush1.bf16.msra.mxu0 0
  %347 = vmatprep.subr.bf16.mxu0 0
  %348 = vmatpush1.bf16.msra.mxu0 0
  %349 = vmatprep.subr.bf16.mxu0 0
  %350 = vmatpush1.bf16.msra.mxu0 0
  %351 = vmatprep.subr.bf16.mxu0 0
  %352 = vmatpush1.bf16.msra.mxu0 0
  %353 = vmatprep.subr.bf16.mxu0 0
  %354 = vmatpush1.bf16.msra.mxu0 0
  %355 = vmatprep.subr.bf16.mxu0 0
  %356 = vmatpush1.bf16.msra.mxu0 0
  %357 = vmatprep.subr.bf16.mxu0 0
  %358 = vmatpush1.bf16.msra.mxu0 0
  %359 = vmatprep.subr.bf16.mxu0 0
  %360 = vmatpush1.bf16.msra.mxu0 0
  %361 = vmatprep.subr.bf16.mxu0 0
  %362 = vmatpush1.bf16.msra.mxu0 0
  %363 = vmatprep.subr.bf16.mxu0 0
  %364 = vmatpush1.bf16.msra.mxu0 0
  %365 = vmatprep.subr.bf16.mxu0 0
  %366 = vmatpush1.bf16.msra.mxu0 0
  %367 = vmatprep.subr.bf16.mxu0 0
  %368 = vmatpush1.bf16.msra.mxu0 0
  %369 = vmatprep.subr.bf16.mxu0 0
  %370 = vmatpush1.bf16.msra.mxu0 0
  %371 = vmatprep.subr.bf16.mxu0 0
  %372 = vmatpush1.bf16.msra.mxu0 0
  %373 = vmatprep.mubr.bf16.mxu0 0
  %374 = vmatmul.mubr.bf16.gmra.mrb[0].mxu0 %v335
  %v375 = vpop.f32.mrb[0].mxu0
  %v376 = vadd.f32 %v333, %v375
  %v377 = vpop.f32.mrb[0].mxu0
  %v378 = vpop.f32.mrb[0].mxu0
  %v379 = vadd.f32 %v333, %v378
  %v380 = vpop.f32.mrb[0].mxu0
  %381 = vdwg.mxu0
  %v382 = vmax.f32 %v376, 0.0
  %v383 = vmax.f32 %v379, 0.0
  %v384 = vpack.c.bf16 %v383, %v382
  %v385 = vlaneseq
  %v386 = vshrl.u32 %v385, 7
  %v387 = vsub.s32 1, %v386
  %v388 = vrot.slane %v280, %v387
  %v397 = vunpack.c.l.b16 %v281
  %v398 = vunpack.c.l.b16 %v282
  %v399 = vunpack.c.l.b16 %v283
  %v400 = vunpack.c.l.b16 %v284
  %v401 = vunpack.c.l.b16 %v285
  %v402 = vunpack.c.l.b16 %v286
  %v403 = vunpack.c.l.b16 %v287
  %v404 = vunpack.c.l.b16 %v288
  %v405 = vpack.c.b16 %v398, %v397
  %v406 = vpack.c.b16 %v400, %v399
  %v407 = vpack.c.b16 %v402, %v401
  %v408 = vpack.c.b16 %v404, %v403
  %vm413 = vcmask 523264
  %v415 = vsel %vm413, %v384, 0
  %417 = vmatprep.subr.bf16.mxu0 0
  %418 = vmatpush1.bf16.msra.mxu0 %v405
  %419 = vmatprep.subr.bf16.mxu0 0
  %420 = vmatpush1.bf16.msra.mxu0 %v406
  %421 = vmatprep.subr.bf16.mxu0 0
  %422 = vmatpush1.bf16.msra.mxu0 %v407
  %423 = vmatprep.subr.bf16.mxu0 0
  %424 = vmatpush1.bf16.msra.mxu0 %v408
  %425 = vmatprep.subr.bf16.mxu0 0
  %426 = vmatpush1.bf16.msra.mxu0 0
  %427 = vmatprep.subr.bf16.mxu0 0
  %428 = vmatpush1.bf16.msra.mxu0 0
  %429 = vmatprep.subr.bf16.mxu0 0
  %430 = vmatpush1.bf16.msra.mxu0 0
  %431 = vmatprep.subr.bf16.mxu0 0
  %432 = vmatpush1.bf16.msra.mxu0 0
  %433 = vmatprep.subr.bf16.mxu0 0
  %434 = vmatpush1.bf16.msra.mxu0 0
  %435 = vmatprep.subr.bf16.mxu0 0
  %436 = vmatpush1.bf16.msra.mxu0 0
  %437 = vmatprep.subr.bf16.mxu0 0
  %438 = vmatpush1.bf16.msra.mxu0 0
  %439 = vmatprep.subr.bf16.mxu0 0
  %440 = vmatpush1.bf16.msra.mxu0 0
  %441 = vmatprep.subr.bf16.mxu0 0
  %442 = vmatpush1.bf16.msra.mxu0 0
  %443 = vmatprep.subr.bf16.mxu0 0
  %444 = vmatpush1.bf16.msra.mxu0 0
  %445 = vmatprep.subr.bf16.mxu0 0
  %446 = vmatpush1.bf16.msra.mxu0 0
  %447 = vmatprep.subr.bf16.mxu0 0
  %448 = vmatpush1.bf16.msra.mxu0 0
  %449 = vmatprep.mubr.bf16.mxu0 0
  %450 = vmatmul.mubr.bf16.gmra.mrb[0].mxu0 %v415
  %v451 = vpop.f32.mrb[0].mxu0
  %v452 = vadd.f32 %v388, %v451
  %v453 = vpop.f32.mrb[0].mxu0
  %v454 = vpop.f32.mrb[0].mxu0
  %v455 = vadd.f32 %v388, %v454
  %v456 = vpop.f32.mrb[0].mxu0
  %457 = vdwg.mxu0
  %v458 = vmax.f32 %v452, 0.0
  %v459 = vmax.f32 %v455, 0.0
  %v460 = vld [vmem:[%s3] sm:$0xff]
  %v461 = vld [vmem:[%s3 + $0x8] sm:$0xff]
  %v462 = vld [vmem:[%s3 + $0x10] sm:$0xff]
  %v463 = vld [vmem:[%s19] sm:$0x3]
  %v464 = vld [vmem:[%s21] sm:$0x7]
  %v465 = vld [vmem:[%s23] sm:$0x3]
  %v466 = vld [vmem:[%s25] sm:$0xf]
  %v467 = vld [vmem:[%s25 + $0x4] sm:$0xf]
  %v468 = vld [vmem:[%s25 + $0x8] sm:$0xf]
  %v469 = vld [vmem:[%s25 + $0xc] sm:$0xf]
  %v470 = vld [vmem:[%s25 + $0x10] sm:$0xf]
  %v471 = vld [vmem:[%s25 + $0x14] sm:$0xf]
  %v472 = vld [vmem:[%s25 + $0x18] sm:$0xf]
  %v473 = vld [vmem:[%s25 + $0x1c] sm:$0xf]
  %vm474 = vcmask 48128
  %v475 = vsel %vm474, %v460, 0.0
  %476 = vadd.xlane.f32.xlu0 %v475
  %v477 = vpop.xlane.xlu0 %476
  %v478 = vsel %vm474, %v461, 0.0
  %479 = vadd.xlane.f32.xlu0 %v478
  %v480 = vpop.xlane.xlu0 %479
  %v481 = vsel %vm474, %v462, 0.0
  %482 = vadd.xlane.f32.xlu0 %v481
  %v483 = vpop.xlane.xlu0 %482
  %v484 = vrcp.pop 6.0
  %v485 = vmul.f32 %v477, %v484
  %v486 = vmul.f32 %v480, %v484
  %v487 = vmul.f32 %v483, %v484
  %v488 = vsub.f32 %v460, %v485
  %v489 = vsub.f32 %v461, %v486
  %v490 = vsub.f32 %v462, %v487
  %v491 = vmul.f32 %v488, %v488
  %v492 = vmul.f32 %v489, %v489
  %v493 = vmul.f32 %v490, %v490
  %v494 = vsel %vm474, %v491, 0.0
  %495 = vadd.xlane.f32.xlu0 %v494
  %v496 = vpop.xlane.xlu0 %495
  %v497 = vsel %vm474, %v492, 0.0
  %498 = vadd.xlane.f32.xlu0 %v497
  %v499 = vpop.xlane.xlu0 %498
  %v500 = vsel %vm474, %v493, 0.0
  %501 = vadd.xlane.f32.xlu0 %v500
  %v502 = vpop.xlane.xlu0 %501
  %v503 = vmul.f32 %v496, %v484
  %v504 = vmul.f32 %v499, %v484
  %v505 = vmul.f32 %v502, %v484
  %v506 = vadd.f32 %v503, 1e-05
  %v507 = vadd.f32 %v504, 1e-05
  %v508 = vadd.f32 %v505, 1e-05
  %v509 = vrsqrt.pop %v506
  %v510 = vrsqrt.pop %v507
  %v511 = vrsqrt.pop %v508
  %v512 = vmul.f32 %v488, %v509
  %v513 = vmul.f32 %v489, %v510
  %v514 = vmul.f32 %v490, %v511
  %v515 = vlaneseq
  %v516 = vshrl.u32 %v515, 7
  %v517 = vsub.s32 0, %v516
  %v518 = vrot.slane %v463, %v517
  %v519 = vmul.f32 %v512, %v518
  %v520 = vmul.f32 %v513, %v518
  %v521 = vmul.f32 %v514, %v518
  %v522 = vlaneseq
  %v523 = vshrl.u32 %v522, 7
  %v524 = vsub.s32 1, %v523
  %v525 = vrot.slane %v463, %v524
  %v526 = vadd.f32 %v519, %v525
  %v527 = vadd.f32 %v520, %v525
  %v528 = vadd.f32 %v521, %v525
  %v529 = vpack.c.bf16 %v527, %v526
  %v530 = vpack.c.bf16 %v528, %v528
  %v531 = vlaneseq
  %v532 = vshrl.u32 %v531, 7
  %v533 = vsub.s32 0, %v532
  %v534 = vrot.slane %v465, %v533
  %v536 = vsel %vm474, %v529, 0
  %v539 = vsel %vm474, %v530, 0
  %vm541 = vcmask 1042432
  %v543 = vsel %vm541, %v464, 0
  %545 = vmatprep.subr.bf16.mxu0 0
  %546 = vmatpush1.bf16.msra.mxu0 %v543
  %547 = vmatprep.subr.bf16.mxu0 0
  %548 = vmatpush1.bf16.msra.mxu0 0
  %549 = vmatprep.subr.bf16.mxu0 0
  %550 = vmatpush1.bf16.msra.mxu0 0
  %551 = vmatprep.subr.bf16.mxu0 0
  %552 = vmatpush1.bf16.msra.mxu0 0
  %553 = vmatprep.subr.bf16.mxu0 0
  %554 = vmatpush1.bf16.msra.mxu0 0
  %555 = vmatprep.subr.bf16.mxu0 0
  %556 = vmatpush1.bf16.msra.mxu0 0
  %557 = vmatprep.subr.bf16.mxu0 0
  %558 = vmatpush1.bf16.msra.mxu0 0
  %559 = vmatprep.subr.bf16.mxu0 0
  %560 = vmatpush1.bf16.msra.mxu0 0
  %561 = vmatprep.subr.bf16.mxu0 0
  %562 = vmatpush1.bf16.msra.mxu0 0
  %563 = vmatprep.subr.bf16.mxu0 0
  %564 = vmatpush1.bf16.msra.mxu0 0
  %565 = vmatprep.subr.bf16.mxu0 0
  %566 = vmatpush1.bf16.msra.mxu0 0
  %567 = vmatprep.subr.bf16.mxu0 0
  %568 = vmatpush1.bf16.msra.mxu0 0
  %569 = vmatprep.subr.bf16.mxu0 0
  %570 = vmatpush1.bf16.msra.mxu0 0
  %571 = vmatprep.subr.bf16.mxu0 0
  %572 = vmatpush1.bf16.msra.mxu0 0
  %573 = vmatprep.subr.bf16.mxu0 0
  %574 = vmatpush1.bf16.msra.mxu0 0
  %575 = vmatprep.subr.bf16.mxu0 0
  %576 = vmatpush1.bf16.msra.mxu0 0
  %577 = vmatprep.mubr.bf16.mxu0 0
  %578 = vmatmul.mubr.bf16.gmra.mrb[0].mxu0 %v536
  %v579 = vpop.f32.mrb[0].mxu0
  %v580 = vadd.f32 %v534, %v579
  %v581 = vpop.f32.mrb[0].mxu0
  %v582 = vpop.f32.mrb[0].mxu0
  %v583 = vadd.f32 %v534, %v582
  %v584 = vpop.f32.mrb[0].mxu0
  %585 = vmatprep.mubr.bf16.mxu0 0
  %586 = vmatmul.mubr.bf16.gmra.mrb[0].mxu0 %v539
  %v587 = vpop.f32.mrb[0].mxu0
  %v588 = vadd.f32 %v534, %v587
  %v589 = vpop.f32.mrb[0].mxu0
  %v590 = vpop.f32.mrb[0].mxu0
  %v591 = vpop.f32.mrb[0].mxu0
  %592 = vdwg.mxu0
  %v593 = vmax.f32 %v580, 0.0
  %v594 = vmax.f32 %v583, 0.0
  %v595 = vmax.f32 %v588, 0.0
  %v596 = vpack.c.bf16 %v594, %v593
  %v597 = vpack.c.bf16 %v595, %v595
  %v598 = vlaneseq
  %v599 = vshrl.u32 %v598, 7
  %v600 = vsub.s32 1, %v599
  %v601 = vrot.slane %v465, %v600
  %v610 = vunpack.c.l.b16 %v466
  %v611 = vunpack.c.l.b16 %v467
  %v612 = vunpack.c.l.b16 %v468
  %v613 = vunpack.c.l.b16 %v469
  %v614 = vunpack.c.l.b16 %v470
  %v615 = vunpack.c.l.b16 %v471
  %v616 = vunpack.c.l.b16 %v472
  %v617 = vunpack.c.l.b16 %v473
  %v618 = vpack.c.b16 %v611, %v610
  %v619 = vpack.c.b16 %v613, %v612
  %v620 = vpack.c.b16 %v615, %v614
  %v621 = vpack.c.b16 %v617, %v616
  %v627 = vsel %vm413, %v596, 0
  %v630 = vsel %vm413, %v597, 0
  %632 = vmatprep.subr.bf16.mxu0 0
  %633 = vmatpush1.bf16.msra.mxu0 %v618
  %634 = vmatprep.subr.bf16.mxu0 0
  %635 = vmatpush1.bf16.msra.mxu0 %v619
  %636 = vmatprep.subr.bf16.mxu0 0
  %637 = vmatpush1.bf16.msra.mxu0 %v620
  %638 = vmatprep.subr.bf16.mxu0 0
  %639 = vmatpush1.bf16.msra.mxu0 %v621
  %640 = vmatprep.subr.bf16.mxu0 0
  %641 = vmatpush1.bf16.msra.mxu0 0
  %642 = vmatprep.subr.bf16.mxu0 0
  %643 = vmatpush1.bf16.msra.mxu0 0
  %644 = vmatprep.subr.bf16.mxu0 0
  %645 = vmatpush1.bf16.msra.mxu0 0
  %646 = vmatprep.subr.bf16.mxu0 0
  %647 = vmatpush1.bf16.msra.mxu0 0
  %648 = vmatprep.subr.bf16.mxu0 0
  %649 = vmatpush1.bf16.msra.mxu0 0
  %650 = vmatprep.subr.bf16.mxu0 0
  %651 = vmatpush1.bf16.msra.mxu0 0
  %652 = vmatprep.subr.bf16.mxu0 0
  %653 = vmatpush1.bf16.msra.mxu0 0
  %654 = vmatprep.subr.bf16.mxu0 0
  %655 = vmatpush1.bf16.msra.mxu0 0
  %656 = vmatprep.subr.bf16.mxu0 0
  %657 = vmatpush1.bf16.msra.mxu0 0
  %658 = vmatprep.subr.bf16.mxu0 0
  %659 = vmatpush1.bf16.msra.mxu0 0
  %660 = vmatprep.subr.bf16.mxu0 0
  %661 = vmatpush1.bf16.msra.mxu0 0
  %662 = vmatprep.subr.bf16.mxu0 0
  %663 = vmatpush1.bf16.msra.mxu0 0
  %664 = vmatprep.mubr.bf16.mxu0 0
  %665 = vmatmul.mubr.bf16.gmra.mrb[0].mxu0 %v627
  %v666 = vpop.f32.mrb[0].mxu0
  %v667 = vadd.f32 %v601, %v666
  %v668 = vpop.f32.mrb[0].mxu0
  %v669 = vpop.f32.mrb[0].mxu0
  %v670 = vadd.f32 %v601, %v669
  %v671 = vpop.f32.mrb[0].mxu0
  %672 = vmatprep.mubr.bf16.mxu0 0
  %673 = vmatmul.mubr.bf16.gmra.mrb[0].mxu0 %v630
  %v674 = vpop.f32.mrb[0].mxu0
  %v675 = vadd.f32 %v601, %v674
  %v676 = vpop.f32.mrb[0].mxu0
  %v677 = vpop.f32.mrb[0].mxu0
  %v678 = vpop.f32.mrb[0].mxu0
  %679 = vdwg.mxu0
  %v680 = vmax.f32 %v667, 0.0
  %v681 = vmax.f32 %v670, 0.0
  %v682 = vmax.f32 %v675, 0.0
  %v683 = vld [vmem:[%s27] sm:$0x3]
  %v684 = vld [vmem:[%s5] sm:$0xff]
  %v685 = vld [vmem:[%s5 + $0x8] sm:$0xff]
  %v686 = vld [vmem:[%s5 + $0x10] sm:$0xff]
  %v687 = vld [vmem:[%s5 + $0x18] sm:$0xff]
  %v688 = vld [vmem:[%s5 + $0x20] sm:$0xff]
  %v689 = vld [vmem:[%s5 + $0x28] sm:$0xff]
  %v690 = vadd.f32 %v684, 0.0
  %v691 = vadd.f32 %v685, 0.0
  %v692 = vadd.f32 %v686, 0.0
  %v693 = vadd.f32 %v687, 0.0
  %v694 = vadd.f32 %v688, 0.0
  %v695 = vadd.f32 %v689, 0.0
  %v696 = vsub.f32 %v684, %v690
  %v697 = vsub.f32 %v685, %v691
  %v698 = vsub.f32 %v686, %v692
  %v699 = vsub.f32 %v687, %v693
  %v700 = vsub.f32 %v688, %v694
  %v701 = vsub.f32 %v689, %v695
  %v702 = vmul.f32 %v696, %v696
  %v703 = vmul.f32 %v697, %v697
  %v704 = vmul.f32 %v698, %v698
  %v705 = vmul.f32 %v699, %v699
  %v706 = vmul.f32 %v700, %v700
  %v707 = vmul.f32 %v701, %v701
  %v708 = vadd.f32 %v702, 0.0
  %v709 = vadd.f32 %v703, 0.0
  %v710 = vadd.f32 %v704, 0.0
  %v711 = vadd.f32 %v705, 0.0
  %v712 = vadd.f32 %v706, 0.0
  %v713 = vadd.f32 %v707, 0.0
  %v714 = vadd.f32 %v708, 1e-05
  %v715 = vadd.f32 %v709, 1e-05
  %v716 = vadd.f32 %v710, 1e-05
  %v717 = vadd.f32 %v711, 1e-05
  %v718 = vadd.f32 %v712, 1e-05
  %v719 = vadd.f32 %v713, 1e-05
  %v720 = vrsqrt.pop %v714
  %v721 = vrsqrt.pop %v715
  %v722 = vrsqrt.pop %v716
  %v723 = vrsqrt.pop %v717
  %v724 = vrsqrt.pop %v718
  %v725 = vrsqrt.pop %v719
  %v726 = vmul.f32 %v696, %v720
  %v727 = vmul.f32 %v697, %v721
  %v728 = vmul.f32 %v698, %v722
  %v729 = vmul.f32 %v699, %v723
  %v730 = vmul.f32 %v700, %v724
  %v731 = vmul.f32 %v701, %v725
  %v732 = vlaneseq
  %v733 = vshrl.u32 %v732, 7
  %v734 = vsub.s32 0, %v733
  %v735 = vrot.slane %v683, %v734
  %v736 = vmul.f32 %v726, %v735
  %v737 = vmul.f32 %v727, %v735
  %v738 = vmul.f32 %v728, %v735
  %v739 = vmul.f32 %v729, %v735
  %v740 = vmul.f32 %v730, %v735
  %v741 = vmul.f32 %v731, %v735
  %v742 = vlaneseq
  %v743 = vshrl.u32 %v742, 7
  %v744 = vsub.s32 1, %v743
  %v745 = vrot.slane %v683, %v744
  %v746 = vadd.f32 %v736, %v745
  %v747 = vadd.f32 %v737, %v745
  %v748 = vadd.f32 %v738, %v745
  %v749 = vadd.f32 %v739, %v745
  %v750 = vadd.f32 %v740, %v745
  %v751 = vadd.f32 %v741, %v745
  %v752 = vld [vmem:[%s29] sm:$0xff]
  %v753 = vld [vmem:[%s29 + $0x8] sm:$0x1]
  %v754 = vld [vmem:[%s31] sm:$0xf]
  %v755 = vld [vmem:[%s31 + $0x4] sm:$0xf]
  %v756 = vld [vmem:[%s31 + $0x8] sm:$0xf]
  %v757 = vld [vmem:[%s31 + $0xc] sm:$0xf]
  %v758 = vld [vmem:[%s31 + $0x10] sm:$0xf]
  %v759 = vld [vmem:[%s31 + $0x14] sm:$0xf]
  %v760 = vld [vmem:[%s31 + $0x18] sm:$0xf]
  %v761 = vld [vmem:[%s31 + $0x1c] sm:$0xf]
  %v762 = vld [vmem:[%s31 + $0x20] sm:$0xf]
  %v763 = vld [vmem:[%s31 + $0x24] sm:$0xf]
  %v764 = vld [vmem:[%s31 + $0x28] sm:$0xf]
  %v765 = vld [vmem:[%s31 + $0x2c] sm:$0xf]
  %v766 = vld [vmem:[%s31 + $0x30] sm:$0xf]
  %v767 = vld [vmem:[%s31 + $0x34] sm:$0xf]
  %v768 = vld [vmem:[%s31 + $0x38] sm:$0xf]
  %v769 = vld [vmem:[%s31 + $0x3c] sm:$0xf]
  %v770 = vld [vmem:[%s33] sm:$0xf]
  %v771 = vld [vmem:[%s33 + $0x4] sm:$0xf]
  %v772 = vld [vmem:[%s33 + $0x8] sm:$0xf]
  %v773 = vld [vmem:[%s33 + $0xc] sm:$0xf]
  %v774 = vld [vmem:[%s33 + $0x10] sm:$0xf]
  %v775 = vld [vmem:[%s33 + $0x14] sm:$0xf]
  %v776 = vld [vmem:[%s33 + $0x18] sm:$0xf]
  %v777 = vld [vmem:[%s33 + $0x1c] sm:$0xf]
  %v778 = vld [vmem:[%s35] sm:$0xf]
  %v779 = vld [vmem:[%s35 + $0x4] sm:$0xf]
  %v780 = vld [vmem:[%s35 + $0x8] sm:$0xf]
  %v781 = vld [vmem:[%s35 + $0xc] sm:$0xf]
  %v782 = vld [vmem:[%s35 + $0x10] sm:$0xf]
  %v783 = vld [vmem:[%s35 + $0x14] sm:$0xf]
  %v784 = vld [vmem:[%s35 + $0x18] sm:$0xf]
  %v785 = vld [vmem:[%s35 + $0x1c] sm:$0xf]
  %v786 = vld [vmem:[%s35 + $0x20] sm:$0xf]
  %v787 = vld [vmem:[%s35 + $0x24] sm:$0xf]
  %v788 = vld [vmem:[%s35 + $0x28] sm:$0xf]
  %v789 = vld [vmem:[%s35 + $0x2c] sm:$0xf]
  %v790 = vld [vmem:[%s35 + $0x30] sm:$0xf]
  %v791 = vld [vmem:[%s35 + $0x34] sm:$0xf]
  %v792 = vld [vmem:[%s35 + $0x38] sm:$0xf]
  %v793 = vld [vmem:[%s35 + $0x3c] sm:$0xf]
  %v794 = vld [vmem:[%s37] sm:$0xf]
  %v795 = vld [vmem:[%s37 + $0x4] sm:$0xf]
  %v796 = vld [vmem:[%s37 + $0x8] sm:$0xf]
  %v797 = vld [vmem:[%s37 + $0xc] sm:$0xf]
  %v798 = vld [vmem:[%s37 + $0x10] sm:$0xf]
  %v799 = vld [vmem:[%s37 + $0x14] sm:$0xf]
  %v800 = vld [vmem:[%s37 + $0x18] sm:$0xf]
  %v801 = vld [vmem:[%s37 + $0x1c] sm:$0xf]
  %v802 = vpack.c.bf16 %v459, %v458
  %vm803 = vcmask 130048
  %v805 = vsel %vm803, %v204, 0
  %v808 = vsel %vm803, %v205, 0
  %v811 = vsel %vm803, %v206, 0
  %813 = vmatprep.subr.bf16.mxu0 0
  %814 = vmatpush1.bf16.msra.mxu0 %v802
  %815 = vmatprep.subr.bf16.mxu0 0
  %816 = vmatpush1.bf16.msra.mxu0 0
  %817 = vmatprep.subr.bf16.mxu0 0
  %818 = vmatpush1.bf16.msra.mxu0 0
  %819 = vmatprep.subr.bf16.mxu0 0
  %820 = vmatpush1.bf16.msra.mxu0 0
  %821 = vmatprep.subr.bf16.mxu0 0
  %822 = vmatpush1.bf16.msra.mxu0 0
  %823 = vmatprep.subr.bf16.mxu0 0
  %824 = vmatpush1.bf16.msra.mxu0 0
  %825 = vmatprep.subr.bf16.mxu0 0
  %826 = vmatpush1.bf16.msra.mxu0 0
  %827 = vmatprep.subr.bf16.mxu0 0
  %828 = vmatpush1.bf16.msra.mxu0 0
  %829 = vmatprep.subr.bf16.mxu0 0
  %830 = vmatpush1.bf16.msra.mxu0 0
  %831 = vmatprep.subr.bf16.mxu0 0
  %832 = vmatpush1.bf16.msra.mxu0 0
  %833 = vmatprep.subr.bf16.mxu0 0
  %834 = vmatpush1.bf16.msra.mxu0 0
  %835 = vmatprep.subr.bf16.mxu0 0
  %836 = vmatpush1.bf16.msra.mxu0 0
  %837 = vmatprep.subr.bf16.mxu0 0
  %838 = vmatpush1.bf16.msra.mxu0 0
  %839 = vmatprep.subr.bf16.mxu0 0
  %840 = vmatpush1.bf16.msra.mxu0 0
  %841 = vmatprep.subr.bf16.mxu0 0
  %842 = vmatpush1.bf16.msra.mxu0 0
  %843 = vmatprep.subr.bf16.mxu0 0
  %844 = vmatpush1.bf16.msra.mxu0 0
  %845 = vmatprep.mubr.bf16.mxu0 0
  %846 = vmatmul.mubr.bf16.gmra.mrb[0].mxu0 %v805
  %v847 = vpop.f32.mrb[0].mxu0
  %v848 = vadd.f32 0.0, %v847
  %v849 = vpop.f32.mrb[0].mxu0
  %v850 = vpop.f32.mrb[0].mxu0
  %v851 = vadd.f32 0.0, %v850
  %v852 = vpop.f32.mrb[0].mxu0
  %853 = vmatprep.mubr.bf16.mxu0 0
  %854 = vmatmul.mubr.bf16.gmra.mrb[0].mxu0 %v808
  %v855 = vpop.f32.mrb[0].mxu0
  %v856 = vadd.f32 0.0, %v855
  %v857 = vpop.f32.mrb[0].mxu0
  %v858 = vpop.f32.mrb[0].mxu0
  %v859 = vadd.f32 0.0, %v858
  %v860 = vpop.f32.mrb[0].mxu0
  %861 = vmatprep.mubr.bf16.mxu0 0
  %862 = vmatmul.mubr.bf16.gmra.mrb[0].mxu0 %v811
  %v863 = vpop.f32.mrb[0].mxu0
  %v864 = vadd.f32 0.0, %v863
  %v865 = vpop.f32.mrb[0].mxu0
  %v866 = vpop.f32.mrb[0].mxu0
  %v867 = vadd.f32 0.0, %v866
  %v868 = vpop.f32.mrb[0].mxu0
  %869 = vdwg.mxu0
  %v870 = vpack.c.bf16 %v681, %v680
  %v871 = vpack.c.bf16 %v682, %v682
  %vm872 = vcmask 195584
  %v874 = vsel %vm872, %v243, 0
  %v877 = vsel %vm872, %v244, 0
  %v880 = vsel %vm872, %v245, 0
  %vm882 = vcmask 1043456
  %v884 = vsel %vm882, %v871, 0
  %886 = vmatprep.subr.bf16.mxu0 0
  %887 = vmatpush1.bf16.msra.mxu0 %v870
  %888 = vmatprep.subr.bf16.mxu0 0
  %889 = vmatpush1.bf16.msra.mxu0 %v884
  %890 = vmatprep.subr.bf16.mxu0 0
  %891 = vmatpush1.bf16.msra.mxu0 0
  %892 = vmatprep.subr.bf16.mxu0 0
  %893 = vmatpush1.bf16.msra.mxu0 0
  %894 = vmatprep.subr.bf16.mxu0 0
  %895 = vmatpush1.bf16.msra.mxu0 0
  %896 = vmatprep.subr.bf16.mxu0 0
  %897 = vmatpush1.bf16.msra.mxu0 0
  %898 = vmatprep.subr.bf16.mxu0 0
  %899 = vmatpush1.bf16.msra.mxu0 0
  %900 = vmatprep.subr.bf16.mxu0 0
  %901 = vmatpush1.bf16.msra.mxu0 0
  %902 = vmatprep.subr.bf16.mxu0 0
  %903 = vmatpush1.bf16.msra.mxu0 0
  %904 = vmatprep.subr.bf16.mxu0 0
  %905 = vmatpush1.bf16.msra.mxu0 0
  %906 = vmatprep.subr.bf16.mxu0 0
  %907 = vmatpush1.bf16.msra.mxu0 0
  %908 = vmatprep.subr.bf16.mxu0 0
  %909 = vmatpush1.bf16.msra.mxu0 0
  %910 = vmatprep.subr.bf16.mxu0 0
  %911 = vmatpush1.bf16.msra.mxu0 0
  %912 = vmatprep.subr.bf16.mxu0 0
  %913 = vmatpush1.bf16.msra.mxu0 0
  %914 = vmatprep.subr.bf16.mxu0 0
  %915 = vmatpush1.bf16.msra.mxu0 0
  %916 = vmatprep.subr.bf16.mxu0 0
  %917 = vmatpush1.bf16.msra.mxu0 0
  %918 = vmatprep.mubr.bf16.mxu0 0
  %919 = vmatmul.mubr.bf16.gmra.mrb[0].mxu0 %v874
  %v920 = vpop.f32.mrb[0].mxu0
  %v921 = vadd.f32 0.0, %v920
  %v922 = vpop.f32.mrb[0].mxu0
  %v923 = vpop.f32.mrb[0].mxu0
  %v924 = vadd.f32 0.0, %v923
  %v925 = vpop.f32.mrb[0].mxu0
  %926 = vmatprep.mubr.bf16.mxu0 0
  %927 = vmatmul.mubr.bf16.gmra.mrb[0].mxu0 %v877
  %v928 = vpop.f32.mrb[0].mxu0
  %v929 = vadd.f32 0.0, %v928
  %v930 = vpop.f32.mrb[0].mxu0
  %v931 = vpop.f32.mrb[0].mxu0
  %v932 = vadd.f32 0.0, %v931
  %v933 = vpop.f32.mrb[0].mxu0
  %934 = vmatprep.mubr.bf16.mxu0 0
  %935 = vmatmul.mubr.bf16.gmra.mrb[0].mxu0 %v880
  %v936 = vpop.f32.mrb[0].mxu0
  %v937 = vadd.f32 0.0, %v936
  %v938 = vpop.f32.mrb[0].mxu0
  %v939 = vpop.f32.mrb[0].mxu0
  %v940 = vadd.f32 0.0, %v939
  %v941 = vpop.f32.mrb[0].mxu0
  %942 = vdwg.mxu0
  %949 = vrot.lane.b32.xlu0 %v921, 64
  %v950 = vpop.permute.xlu0 %949
  %951 = vrot.lane.b32.xlu0 %v924, 64
  %v952 = vpop.permute.xlu0 %951
  %953 = vrot.lane.b32.xlu0 %v929, 64
  %v954 = vpop.permute.xlu0 %953
  %955 = vrot.lane.b32.xlu0 %v932, 64
  %v956 = vpop.permute.xlu0 %955
  %957 = vrot.lane.b32.xlu0 %v937, 64
  %v958 = vpop.permute.xlu0 %957
  %959 = vrot.lane.b32.xlu0 %v940, 64
  %v960 = vpop.permute.xlu0 %959
  %v967 = vsel %vm413, %v848, %v950
  %v968 = vsel %vm413, %v851, %v952
  %v969 = vsel %vm413, %v856, %v954
  %v970 = vsel %vm413, %v859, %v956
  %v971 = vsel %vm413, %v864, %v958
  %v972 = vsel %vm413, %v867, %v960
  %v973 = vpack.c.bf16 %v968, %v967
  %v974 = vpack.c.bf16 %v970, %v969
  %v975 = vpack.c.bf16 %v972, %v971
  %v976 = vlaneseq
  %v977 = vshrl.u32 %v976, 7
  %v978 = vsub.s32 1, %v977
  %v979 = vrot.slane %v752, %v978
  %v996 = vunpack.c.l.b16 %v754
  %v997 = vunpack.c.l.b16 %v755
  %v998 = vunpack.c.l.b16 %v756
  %v999 = vunpack.c.l.b16 %v757
  %v1000 = vunpack.c.l.b16 %v758
  %v1001 = vunpack.c.l.b16 %v759
  %v1002 = vunpack.c.l.b16 %v760
  %v1003 = vunpack.c.l.b16 %v761
  %v1004 = vunpack.c.l.b16 %v762
  %v1005 = vunpack.c.l.b16 %v763
  %v1006 = vunpack.c.l.b16 %v764
  %v1007 = vunpack.c.l.b16 %v765
  %v1008 = vunpack.c.l.b16 %v766
  %v1009 = vunpack.c.l.b16 %v767
  %v1010 = vunpack.c.l.b16 %v768
  %v1011 = vunpack.c.l.b16 %v769
  %v1012 = vpack.c.b16 %v997, %v996
  %v1013 = vpack.c.b16 %v999, %v998
  %v1014 = vpack.c.b16 %v1001, %v1000
  %v1015 = vpack.c.b16 %v1003, %v1002
  %v1016 = vpack.c.b16 %v1005, %v1004
  %v1017 = vpack.c.b16 %v1007, %v1006
  %v1018 = vpack.c.b16 %v1009, %v1008
  %v1019 = vpack.c.b16 %v1011, %v1010
  %1028 = vmatprep.subr.bf16.mxu0 0
  %1029 = vmatpush1.bf16.msra.mxu0 %v1012
  %1030 = vmatprep.subr.bf16.mxu0 0
  %1031 = vmatpush1.bf16.msra.mxu0 %v1013
  %1032 = vmatprep.subr.bf16.mxu0 0
  %1033 = vmatpush1.bf16.msra.mxu0 %v1014
  %1034 = vmatprep.subr.bf16.mxu0 0
  %1035 = vmatpush1.bf16.msra.mxu0 %v1015
  %1036 = vmatprep.subr.bf16.mxu0 0
  %1037 = vmatpush1.bf16.msra.mxu0 %v1016
  %1038 = vmatprep.subr.bf16.mxu0 0
  %1039 = vmatpush1.bf16.msra.mxu0 %v1017
  %1040 = vmatprep.subr.bf16.mxu0 0
  %1041 = vmatpush1.bf16.msra.mxu0 %v1018
  %1042 = vmatprep.subr.bf16.mxu0 0
  %1043 = vmatpush1.bf16.msra.mxu0 %v1019
  %1044 = vmatprep.subr.bf16.mxu0 0
  %1045 = vmatpush1.bf16.msra.mxu0 0
  %1046 = vmatprep.subr.bf16.mxu0 0
  %1047 = vmatpush1.bf16.msra.mxu0 0
  %1048 = vmatprep.subr.bf16.mxu0 0
  %1049 = vmatpush1.bf16.msra.mxu0 0
  %1050 = vmatprep.subr.bf16.mxu0 0
  %1051 = vmatpush1.bf16.msra.mxu0 0
  %1052 = vmatprep.subr.bf16.mxu0 0
  %1053 = vmatpush1.bf16.msra.mxu0 0
  %1054 = vmatprep.subr.bf16.mxu0 0
  %1055 = vmatpush1.bf16.msra.mxu0 0
  %1056 = vmatprep.subr.bf16.mxu0 0
  %1057 = vmatpush1.bf16.msra.mxu0 0
  %1058 = vmatprep.subr.bf16.mxu0 0
  %1059 = vmatpush1.bf16.msra.mxu0 0
  %1060 = vmatprep.mubr.bf16.mxu0 0
  %1061 = vmatmul.mubr.bf16.gmra.mrb[0].mxu0 %v973
  %v1062 = vpop.f32.mrb[0].mxu0
  %v1063 = vadd.f32 %v979, %v1062
  %v1064 = vpop.f32.mrb[0].mxu0
  %v1065 = vpop.f32.mrb[0].mxu0
  %v1066 = vadd.f32 %v979, %v1065
  %v1067 = vpop.f32.mrb[0].mxu0
  %1068 = vmatprep.mubr.bf16.mxu0 0
  %1069 = vmatmul.mubr.bf16.gmra.mrb[0].mxu0 %v974
  %v1070 = vpop.f32.mrb[0].mxu0
  %v1071 = vadd.f32 %v979, %v1070
  %v1072 = vpop.f32.mrb[0].mxu0
  %v1073 = vpop.f32.mrb[0].mxu0
  %v1074 = vadd.f32 %v979, %v1073
  %v1075 = vpop.f32.mrb[0].mxu0
  %1076 = vmatprep.mubr.bf16.mxu0 0
  %1077 = vmatmul.mubr.bf16.gmra.mrb[0].mxu0 %v975
  %v1078 = vpop.f32.mrb[0].mxu0
  %v1079 = vadd.f32 %v979, %v1078
  %v1080 = vpop.f32.mrb[0].mxu0
  %v1081 = vpop.f32.mrb[0].mxu0
  %v1082 = vadd.f32 %v979, %v1081
  %v1083 = vpop.f32.mrb[0].mxu0
  %1084 = vdwg.mxu0
  %1086 = vset.pattern.permute.xlu0 0
  %1087 = vperm.xlu0 %1086, %v746
  %v1088 = vpop.permute.xlu0 %1087
  %1091 = vset.pattern.permute.xlu0 0
  %1092 = vperm.xlu0 %1091, %v747
  %v1093 = vpop.permute.xlu0 %1092
  %1096 = vset.pattern.permute.xlu0 0
  %1097 = vperm.xlu0 %1096, %v748
  %v1098 = vpop.permute.xlu0 %1097
  %1101 = vset.pattern.permute.xlu0 0
  %1102 = vperm.xlu0 %1101, %v749
  %v1103 = vpop.permute.xlu0 %1102
  %1106 = vset.pattern.permute.xlu0 0
  %1107 = vperm.xlu0 %1106, %v750
  %v1108 = vpop.permute.xlu0 %1107
  %1111 = vset.pattern.permute.xlu0 0
  %1112 = vperm.xlu0 %1111, %v751
  %v1113 = vpop.permute.xlu0 %1112
  %v1115 = vlaneseq
  %v1116 = vshrl.u32 %v1115, 7
  %v1117 = vsub.s32 0, %v1116
  %v1118 = vrot.slane %v752, %v1117
  %v1119 = vmul.f32 %v1088, %v1118
  %v1120 = vmul.f32 %v1093, %v1118
  %v1121 = vmul.f32 %v1098, %v1118
  %v1122 = vmul.f32 %v1103, %v1118
  %v1123 = vmul.f32 %v1108, %v1118
  %v1124 = vmul.f32 %v1113, %v1118
  %v1125 = vadd.f32 %v1063, %v1119
  %v1126 = vadd.f32 %v1066, %v1120
  %v1127 = vadd.f32 %v1071, %v1121
  %v1128 = vadd.f32 %v1074, %v1122
  %v1129 = vadd.f32 %v1079, %v1123
  %v1130 = vadd.f32 %v1082, %v1124
  %v1131 = vsel %vm413, %v1125, 0.0
  %1132 = vadd.xlane.f32.xlu0 %v1131
  %v1133 = vpop.xlane.xlu0 %1132
  %v1134 = vsel %vm413, %v1126, 0.0
  %1135 = vadd.xlane.f32.xlu0 %v1134
  %v1136 = vpop.xlane.xlu0 %1135
  %v1137 = vsel %vm413, %v1127, 0.0
  %1138 = vadd.xlane.f32.xlu0 %v1137
  %v1139 = vpop.xlane.xlu0 %1138
  %v1140 = vsel %vm413, %v1128, 0.0
  %1141 = vadd.xlane.f32.xlu0 %v1140
  %v1142 = vpop.xlane.xlu0 %1141
  %v1143 = vsel %vm413, %v1129, 0.0
  %1144 = vadd.xlane.f32.xlu0 %v1143
  %v1145 = vpop.xlane.xlu0 %1144
  %v1146 = vsel %vm413, %v1130, 0.0
  %1147 = vadd.xlane.f32.xlu0 %v1146
  %v1148 = vpop.xlane.xlu0 %1147
  %v1149 = vrcp.pop 64.0
  %v1150 = vmul.f32 %v1133, %v1149
  %v1151 = vmul.f32 %v1136, %v1149
  %v1152 = vmul.f32 %v1139, %v1149
  %v1153 = vmul.f32 %v1142, %v1149
  %v1154 = vmul.f32 %v1145, %v1149
  %v1155 = vmul.f32 %v1148, %v1149
  %v1156 = vsub.f32 %v1125, %v1150
  %v1157 = vsub.f32 %v1126, %v1151
  %v1158 = vsub.f32 %v1127, %v1152
  %v1159 = vsub.f32 %v1128, %v1153
  %v1160 = vsub.f32 %v1129, %v1154
  %v1161 = vsub.f32 %v1130, %v1155
  %v1162 = vmul.f32 %v1156, %v1156
  %v1163 = vmul.f32 %v1157, %v1157
  %v1164 = vmul.f32 %v1158, %v1158
  %v1165 = vmul.f32 %v1159, %v1159
  %v1166 = vmul.f32 %v1160, %v1160
  %v1167 = vmul.f32 %v1161, %v1161
  %v1168 = vsel %vm413, %v1162, 0.0
  %1169 = vadd.xlane.f32.xlu0 %v1168
  %v1170 = vpop.xlane.xlu0 %1169
  %v1171 = vsel %vm413, %v1163, 0.0
  %1172 = vadd.xlane.f32.xlu0 %v1171
  %v1173 = vpop.xlane.xlu0 %1172
  %v1174 = vsel %vm413, %v1164, 0.0
  %1175 = vadd.xlane.f32.xlu0 %v1174
  %v1176 = vpop.xlane.xlu0 %1175
  %v1177 = vsel %vm413, %v1165, 0.0
  %1178 = vadd.xlane.f32.xlu0 %v1177
  %v1179 = vpop.xlane.xlu0 %1178
  %v1180 = vsel %vm413, %v1166, 0.0
  %1181 = vadd.xlane.f32.xlu0 %v1180
  %v1182 = vpop.xlane.xlu0 %1181
  %v1183 = vsel %vm413, %v1167, 0.0
  %1184 = vadd.xlane.f32.xlu0 %v1183
  %v1185 = vpop.xlane.xlu0 %1184
  %v1186 = vmul.f32 %v1170, %v1149
  %v1187 = vmul.f32 %v1173, %v1149
  %v1188 = vmul.f32 %v1176, %v1149
  %v1189 = vmul.f32 %v1179, %v1149
  %v1190 = vmul.f32 %v1182, %v1149
  %v1191 = vmul.f32 %v1185, %v1149
  %v1192 = vadd.f32 %v1186, 1e-05
  %v1193 = vadd.f32 %v1187, 1e-05
  %v1194 = vadd.f32 %v1188, 1e-05
  %v1195 = vadd.f32 %v1189, 1e-05
  %v1196 = vadd.f32 %v1190, 1e-05
  %v1197 = vadd.f32 %v1191, 1e-05
  %v1198 = vrsqrt.pop %v1192
  %v1199 = vrsqrt.pop %v1193
  %v1200 = vrsqrt.pop %v1194
  %v1201 = vrsqrt.pop %v1195
  %v1202 = vrsqrt.pop %v1196
  %v1203 = vrsqrt.pop %v1197
  %v1204 = vmul.f32 %v1156, %v1198
  %v1205 = vmul.f32 %v1157, %v1199
  %v1206 = vmul.f32 %v1158, %v1200
  %v1207 = vmul.f32 %v1159, %v1201
  %v1208 = vmul.f32 %v1160, %v1202
  %v1209 = vmul.f32 %v1161, %v1203
  %v1210 = vlaneseq
  %v1211 = vshrl.u32 %v1210, 7
  %v1212 = vsub.s32 2, %v1211
  %v1213 = vrot.slane %v752, %v1212
  %v1214 = vmul.f32 %v1204, %v1213
  %v1215 = vmul.f32 %v1205, %v1213
  %v1216 = vmul.f32 %v1206, %v1213
  %v1217 = vmul.f32 %v1207, %v1213
  %v1218 = vmul.f32 %v1208, %v1213
  %v1219 = vmul.f32 %v1209, %v1213
  %v1220 = vlaneseq
  %v1221 = vshrl.u32 %v1220, 7
  %v1222 = vsub.s32 3, %v1221
  %v1223 = vrot.slane %v752, %v1222
  %v1224 = vadd.f32 %v1214, %v1223
  %v1225 = vadd.f32 %v1215, %v1223
  %v1226 = vadd.f32 %v1216, %v1223
  %v1227 = vadd.f32 %v1217, %v1223
  %v1228 = vadd.f32 %v1218, %v1223
  %v1229 = vadd.f32 %v1219, %v1223
  %v1230 = vmax.f32 %v1224, 0.0
  %v1231 = vmax.f32 %v1225, 0.0
  %v1232 = vmax.f32 %v1226, 0.0
  %v1233 = vmax.f32 %v1227, 0.0
  %v1234 = vmax.f32 %v1228, 0.0
  %v1235 = vmax.f32 %v1229, 0.0
  %v1236 = vpack.c.bf16 %v1231, %v1230
  %v1237 = vpack.c.bf16 %v1233, %v1232
  %v1238 = vpack.c.bf16 %v1235, %v1234
  %v1239 = vlaneseq
  %v1240 = vshrl.u32 %v1239, 7
  %v1241 = vsub.s32 4, %v1240
  %v1242 = vrot.slane %v752, %v1241
  %v1251 = vunpack.c.l.b16 %v770
  %v1252 = vunpack.c.l.b16 %v771
  %v1253 = vunpack.c.l.b16 %v772
  %v1254 = vunpack.c.l.b16 %v773
  %v1255 = vunpack.c.l.b16 %v774
  %v1256 = vunpack.c.l.b16 %v775
  %v1257 = vunpack.c.l.b16 %v776
  %v1258 = vunpack.c.l.b16 %v777
  %v1259 = vpack.c.b16 %v1252, %v1251
  %v1260 = vpack.c.b16 %v1254, %v1253
  %v1261 = vpack.c.b16 %v1256, %v1255
  %v1262 = vpack.c.b16 %v1258, %v1257
  %v1268 = vsel %vm413, %v1236, 0
  %v1271 = vsel %vm413, %v1237, 0
  %v1274 = vsel %vm413, %v1238, 0
  %1276 = vmatprep.subr.bf16.mxu0 0
  %1277 = vmatpush1.bf16.msra.mxu0 %v1259
  %1278 = vmatprep.subr.bf16.mxu0 0
  %1279 = vmatpush1.bf16.msra.mxu0 %v1260
  %1280 = vmatprep.subr.bf16.mxu0 0
  %1281 = vmatpush1.bf16.msra.mxu0 %v1261
  %1282 = vmatprep.subr.bf16.mxu0 0
  %1283 = vmatpush1.bf16.msra.mxu0 %v1262
  %1284 = vmatprep.subr.bf16.mxu0 0
  %1285 = vmatpush1.bf16.msra.mxu0 0
  %1286 = vmatprep.subr.bf16.mxu0 0
  %1287 = vmatpush1.bf16.msra.mxu0 0
  %1288 = vmatprep.subr.bf16.mxu0 0
  %1289 = vmatpush1.bf16.msra.mxu0 0
  %1290 = vmatprep.subr.bf16.mxu0 0
  %1291 = vmatpush1.bf16.msra.mxu0 0
  %1292 = vmatprep.subr.bf16.mxu0 0
  %1293 = vmatpush1.bf16.msra.mxu0 0
  %1294 = vmatprep.subr.bf16.mxu0 0
  %1295 = vmatpush1.bf16.msra.mxu0 0
  %1296 = vmatprep.subr.bf16.mxu0 0
  %1297 = vmatpush1.bf16.msra.mxu0 0
  %1298 = vmatprep.subr.bf16.mxu0 0
  %1299 = vmatpush1.bf16.msra.mxu0 0
  %1300 = vmatprep.subr.bf16.mxu0 0
  %1301 = vmatpush1.bf16.msra.mxu0 0
  %1302 = vmatprep.subr.bf16.mxu0 0
  %1303 = vmatpush1.bf16.msra.mxu0 0
  %1304 = vmatprep.subr.bf16.mxu0 0
  %1305 = vmatpush1.bf16.msra.mxu0 0
  %1306 = vmatprep.subr.bf16.mxu0 0
  %1307 = vmatpush1.bf16.msra.mxu0 0
  %1308 = vmatprep.mubr.bf16.mxu0 0
  %1309 = vmatmul.mubr.bf16.gmra.mrb[0].mxu0 %v1268
  %v1310 = vpop.f32.mrb[0].mxu0
  %v1311 = vadd.f32 %v1242, %v1310
  %v1312 = vpop.f32.mrb[0].mxu0
  %v1313 = vpop.f32.mrb[0].mxu0
  %v1314 = vadd.f32 %v1242, %v1313
  %v1315 = vpop.f32.mrb[0].mxu0
  %1316 = vmatprep.mubr.bf16.mxu0 0
  %1317 = vmatmul.mubr.bf16.gmra.mrb[0].mxu0 %v1271
  %v1318 = vpop.f32.mrb[0].mxu0
  %v1319 = vadd.f32 %v1242, %v1318
  %v1320 = vpop.f32.mrb[0].mxu0
  %v1321 = vpop.f32.mrb[0].mxu0
  %v1322 = vadd.f32 %v1242, %v1321
  %v1323 = vpop.f32.mrb[0].mxu0
  %1324 = vmatprep.mubr.bf16.mxu0 0
  %1325 = vmatmul.mubr.bf16.gmra.mrb[0].mxu0 %v1274
  %v1326 = vpop.f32.mrb[0].mxu0
  %v1327 = vadd.f32 %v1242, %v1326
  %v1328 = vpop.f32.mrb[0].mxu0
  %v1329 = vpop.f32.mrb[0].mxu0
  %v1330 = vadd.f32 %v1242, %v1329
  %v1331 = vpop.f32.mrb[0].mxu0
  %1332 = vdwg.mxu0
  %v1333 = vpack.c.bf16 %v1314, %v1311
  %v1334 = vpack.c.bf16 %v1322, %v1319
  %v1335 = vpack.c.bf16 %v1330, %v1327
  %vm1336 = vcmask 392192
  %v1338 = vsel %vm1336, %v259, 0
  %1340 = vmatprep.subr.bf16.mxu0 0
  %1341 = vmatpush1.bf16.msra.mxu0 %v1333
  %1342 = vmatprep.subr.bf16.mxu0 0
  %1343 = vmatpush1.bf16.msra.mxu0 %v1334
  %1344 = vmatprep.subr.bf16.mxu0 0
  %1345 = vmatpush1.bf16.msra.mxu0 %v1335
  %1346 = vmatprep.subr.bf16.mxu0 0
  %1347 = vmatpush1.bf16.msra.mxu0 0
  %1348 = vmatprep.subr.bf16.mxu0 0
  %1349 = vmatpush1.bf16.msra.mxu0 0
  %1350 = vmatprep.subr.bf16.mxu0 0
  %1351 = vmatpush1.bf16.msra.mxu0 0
  %1352 = vmatprep.subr.bf16.mxu0 0
  %1353 = vmatpush1.bf16.msra.mxu0 0
  %1354 = vmatprep.subr.bf16.mxu0 0
  %1355 = vmatpush1.bf16.msra.mxu0 0
  %1356 = vmatprep.subr.bf16.mxu0 0
  %1357 = vmatpush1.bf16.msra.mxu0 0
  %1358 = vmatprep.subr.bf16.mxu0 0
  %1359 = vmatpush1.bf16.msra.mxu0 0
  %1360 = vmatprep.subr.bf16.mxu0 0
  %1361 = vmatpush1.bf16.msra.mxu0 0
  %1362 = vmatprep.subr.bf16.mxu0 0
  %1363 = vmatpush1.bf16.msra.mxu0 0
  %1364 = vmatprep.subr.bf16.mxu0 0
  %1365 = vmatpush1.bf16.msra.mxu0 0
  %1366 = vmatprep.subr.bf16.mxu0 0
  %1367 = vmatpush1.bf16.msra.mxu0 0
  %1368 = vmatprep.subr.bf16.mxu0 0
  %1369 = vmatpush1.bf16.msra.mxu0 0
  %1370 = vmatprep.subr.bf16.mxu0 0
  %1371 = vmatpush1.bf16.msra.mxu0 0
  %1372 = vmatprep.mubr.bf16.mxu0 0
  %1373 = vmatmul.mubr.bf16.gmra.mrb[0].mxu0 %v1338
  %v1374 = vpop.f32.mrb[0].mxu0
  %v1375 = vadd.f32 0.0, %v1374
  %v1376 = vpop.f32.mrb[0].mxu0
  %v1377 = vpop.f32.mrb[0].mxu0
  %v1378 = vadd.f32 0.0, %v1377
  %v1379 = vpop.f32.mrb[0].mxu0
  %1380 = vdwg.mxu0
  %v1381 = vsel %vm413, %v1375, 0.0
  %1382 = vadd.xlane.f32.xlu0 %v1381
  %v1383 = vpop.xlane.xlu0 %1382
  %v1384 = vsel %vm413, %v1378, 0.0
  %1385 = vadd.xlane.f32.xlu0 %v1384
  %v1386 = vpop.xlane.xlu0 %1385
  %v1387 = vmul.f32 %v1383, %v1149
  %v1388 = vmul.f32 %v1386, %v1149
  %v1389 = vsub.f32 %v1375, %v1387
  %v1390 = vsub.f32 %v1378, %v1388
  %v1391 = vmul.f32 %v1389, %v1389
  %v1392 = vmul.f32 %v1390, %v1390
  %v1393 = vsel %vm413, %v1391, 0.0
  %1394 = vadd.xlane.f32.xlu0 %v1393
  %v1395 = vpop.xlane.xlu0 %1394
  %v1396 = vsel %vm413, %v1392, 0.0
  %1397 = vadd.xlane.f32.xlu0 %v1396
  %v1398 = vpop.xlane.xlu0 %1397
  %v1399 = vmul.f32 %v1395, %v1149
  %v1400 = vmul.f32 %v1398, %v1149
  %v1401 = vadd.f32 %v1399, 1e-05
  %v1402 = vadd.f32 %v1400, 1e-05
  %v1403 = vrsqrt.pop %v1401
  %v1404 = vrsqrt.pop %v1402
  %v1405 = vmul.f32 %v1389, %v1403
  %v1406 = vmul.f32 %v1390, %v1404
  %v1407 = vlaneseq
  %v1408 = vshrl.u32 %v1407, 7
  %v1409 = vsub.s32 5, %v1408
  %v1410 = vrot.slane %v752, %v1409
  %v1411 = vmul.f32 %v1405, %v1410
  %v1412 = vmul.f32 %v1406, %v1410
  %v1413 = vlaneseq
  %v1414 = vshrl.u32 %v1413, 7
  %v1415 = vsub.s32 6, %v1414
  %v1416 = vrot.slane %v752, %v1415
  %v1417 = vadd.f32 %v1411, %v1416
  %v1418 = vadd.f32 %v1412, %v1416
  %1421 = vrot.lane.b32.xlu0 %v458, 64
  %v1422 = vpop.permute.xlu0 %1421
  %1423 = vrot.lane.b32.xlu0 %v459, 64
  %v1424 = vpop.permute.xlu0 %1423
  %v1427 = vsel %vm413, %v1417, %v1422
  %v1428 = vsel %vm413, %v1418, %v1424
  %v1429 = vpack.c.bf16 %v1428, %v1427
  %v1430 = vlaneseq
  %v1431 = vshrl.u32 %v1430, 7
  %v1432 = vsub.s32 7, %v1431
  %v1433 = vrot.slane %v752, %v1432
  %v1450 = vunpack.c.l.b16 %v778
  %v1451 = vunpack.c.l.b16 %v779
  %v1452 = vunpack.c.l.b16 %v780
  %v1453 = vunpack.c.l.b16 %v781
  %v1454 = vunpack.c.l.b16 %v782
  %v1455 = vunpack.c.l.b16 %v783
  %v1456 = vunpack.c.l.b16 %v784
  %v1457 = vunpack.c.l.b16 %v785
  %v1458 = vunpack.c.l.b16 %v786
  %v1459 = vunpack.c.l.b16 %v787
  %v1460 = vunpack.c.l.b16 %v788
  %v1461 = vunpack.c.l.b16 %v789
  %v1462 = vunpack.c.l.b16 %v790
  %v1463 = vunpack.c.l.b16 %v791
  %v1464 = vunpack.c.l.b16 %v792
  %v1465 = vunpack.c.l.b16 %v793
  %v1466 = vpack.c.b16 %v1451, %v1450
  %v1467 = vpack.c.b16 %v1453, %v1452
  %v1468 = vpack.c.b16 %v1455, %v1454
  %v1469 = vpack.c.b16 %v1457, %v1456
  %v1470 = vpack.c.b16 %v1459, %v1458
  %v1471 = vpack.c.b16 %v1461, %v1460
  %v1472 = vpack.c.b16 %v1463, %v1462
  %v1473 = vpack.c.b16 %v1465, %v1464
  %1482 = vmatprep.subr.bf16.mxu0 0
  %1483 = vmatpush1.bf16.msra.mxu0 %v1466
  %1484 = vmatprep.subr.bf16.mxu0 0
  %1485 = vmatpush1.bf16.msra.mxu0 %v1467
  %1486 = vmatprep.subr.bf16.mxu0 0
  %1487 = vmatpush1.bf16.msra.mxu0 %v1468
  %1488 = vmatprep.subr.bf16.mxu0 0
  %1489 = vmatpush1.bf16.msra.mxu0 %v1469
  %1490 = vmatprep.subr.bf16.mxu0 0
  %1491 = vmatpush1.bf16.msra.mxu0 %v1470
  %1492 = vmatprep.subr.bf16.mxu0 0
  %1493 = vmatpush1.bf16.msra.mxu0 %v1471
  %1494 = vmatprep.subr.bf16.mxu0 0
  %1495 = vmatpush1.bf16.msra.mxu0 %v1472
  %1496 = vmatprep.subr.bf16.mxu0 0
  %1497 = vmatpush1.bf16.msra.mxu0 %v1473
  %1498 = vmatprep.subr.bf16.mxu0 0
  %1499 = vmatpush1.bf16.msra.mxu0 0
  %1500 = vmatprep.subr.bf16.mxu0 0
  %1501 = vmatpush1.bf16.msra.mxu0 0
  %1502 = vmatprep.subr.bf16.mxu0 0
  %1503 = vmatpush1.bf16.msra.mxu0 0
  %1504 = vmatprep.subr.bf16.mxu0 0
  %1505 = vmatpush1.bf16.msra.mxu0 0
  %1506 = vmatprep.subr.bf16.mxu0 0
  %1507 = vmatpush1.bf16.msra.mxu0 0
  %1508 = vmatprep.subr.bf16.mxu0 0
  %1509 = vmatpush1.bf16.msra.mxu0 0
  %1510 = vmatprep.subr.bf16.mxu0 0
  %1511 = vmatpush1.bf16.msra.mxu0 0
  %1512 = vmatprep.subr.bf16.mxu0 0
  %1513 = vmatpush1.bf16.msra.mxu0 0
  %1514 = vmatprep.mubr.bf16.mxu0 0
  %1515 = vmatmul.mubr.bf16.gmra.mrb[0].mxu0 %v1429
  %v1516 = vpop.f32.mrb[0].mxu0
  %v1517 = vadd.f32 %v1433, %v1516
  %v1518 = vpop.f32.mrb[0].mxu0
  %v1519 = vpop.f32.mrb[0].mxu0
  %v1520 = vadd.f32 %v1433, %v1519
  %v1521 = vpop.f32.mrb[0].mxu0
  %1522 = vdwg.mxu0
  %v1523 = vmax.f32 %v1517, 0.0
  %v1524 = vmax.f32 %v1520, 0.0
  %v1525 = vpack.c.bf16 %v1524, %v1523
  %v1526 = vlaneseq
  %v1527 = vshrl.u32 %v1526, 7
  %v1528 = vsub.s32 0, %v1527
  %v1529 = vrot.slane %v753, %v1528
  %v1538 = vunpack.c.l.b16 %v794
  %v1539 = vunpack.c.l.b16 %v795
  %v1540 = vunpack.c.l.b16 %v796
  %v1541 = vunpack.c.l.b16 %v797
  %v1542 = vunpack.c.l.b16 %v798
  %v1543 = vunpack.c.l.b16 %v799
  %v1544 = vunpack.c.l.b16 %v800
  %v1545 = vunpack.c.l.b16 %v801
  %v1546 = vpack.c.b16 %v1539, %v1538
  %v1547 = vpack.c.b16 %v1541, %v1540
  %v1548 = vpack.c.b16 %v1543, %v1542
  %v1549 = vpack.c.b16 %v1545, %v1544
  %v1555 = vsel %vm413, %v1525, 0
  %1557 = vmatprep.subr.bf16.mxu0 0
  %1558 = vmatpush1.bf16.msra.mxu0 %v1546
  %1559 = vmatprep.subr.bf16.mxu0 0
  %1560 = vmatpush1.bf16.msra.mxu0 %v1547
  %1561 = vmatprep.subr.bf16.mxu0 0
  %1562 = vmatpush1.bf16.msra.mxu0 %v1548
  %1563 = vmatprep.subr.bf16.mxu0 0
  %1564 = vmatpush1.bf16.msra.mxu0 %v1549
  %1565 = vmatprep.subr.bf16.mxu0 0
  %1566 = vmatpush1.bf16.msra.mxu0 0
  %1567 = vmatprep.subr.bf16.mxu0 0
  %1568 = vmatpush1.bf16.msra.mxu0 0
  %1569 = vmatprep.subr.bf16.mxu0 0
  %1570 = vmatpush1.bf16.msra.mxu0 0
  %1571 = vmatprep.subr.bf16.mxu0 0
  %1572 = vmatpush1.bf16.msra.mxu0 0
  %1573 = vmatprep.subr.bf16.mxu0 0
  %1574 = vmatpush1.bf16.msra.mxu0 0
  %1575 = vmatprep.subr.bf16.mxu0 0
  %1576 = vmatpush1.bf16.msra.mxu0 0
  %1577 = vmatprep.subr.bf16.mxu0 0
  %1578 = vmatpush1.bf16.msra.mxu0 0
  %1579 = vmatprep.subr.bf16.mxu0 0
  %1580 = vmatpush1.bf16.msra.mxu0 0
  %1581 = vmatprep.subr.bf16.mxu0 0
  %1582 = vmatpush1.bf16.msra.mxu0 0
  %1583 = vmatprep.subr.bf16.mxu0 0
  %1584 = vmatpush1.bf16.msra.mxu0 0
  %1585 = vmatprep.subr.bf16.mxu0 0
  %1586 = vmatpush1.bf16.msra.mxu0 0
  %1587 = vmatprep.subr.bf16.mxu0 0
  %1588 = vmatpush1.bf16.msra.mxu0 0
  %1589 = vmatprep.mubr.bf16.mxu0 0
  %1590 = vmatmul.mubr.bf16.gmra.mrb[0].mxu0 %v1555
  %v1591 = vpop.f32.mrb[0].mxu0
  %v1592 = vadd.f32 %v1529, %v1591
  %v1593 = vpop.f32.mrb[0].mxu0
  %v1594 = vpop.f32.mrb[0].mxu0
  %v1595 = vadd.f32 %v1529, %v1594
  %v1596 = vpop.f32.mrb[0].mxu0
  %1597 = vdwg.mxu0
  %v1598 = vld [vmem:[%s39] sm:$0xff]
  %v1599 = vld [vmem:[%s39 + $0x8] sm:$0x1]
  %v1600 = vld [vmem:[%s41] sm:$0xf]
  %v1601 = vld [vmem:[%s41 + $0x4] sm:$0xf]
  %v1602 = vld [vmem:[%s41 + $0x8] sm:$0xf]
  %v1603 = vld [vmem:[%s41 + $0xc] sm:$0xf]
  %v1604 = vld [vmem:[%s41 + $0x10] sm:$0xf]
  %v1605 = vld [vmem:[%s41 + $0x14] sm:$0xf]
  %v1606 = vld [vmem:[%s41 + $0x18] sm:$0xf]
  %v1607 = vld [vmem:[%s41 + $0x1c] sm:$0xf]
  %v1608 = vld [vmem:[%s41 + $0x20] sm:$0xf]
  %v1609 = vld [vmem:[%s41 + $0x24] sm:$0xf]
  %v1610 = vld [vmem:[%s41 + $0x28] sm:$0xf]
  %v1611 = vld [vmem:[%s41 + $0x2c] sm:$0xf]
  %v1612 = vld [vmem:[%s41 + $0x30] sm:$0xf]
  %v1613 = vld [vmem:[%s41 + $0x34] sm:$0xf]
  %v1614 = vld [vmem:[%s41 + $0x38] sm:$0xf]
  %v1615 = vld [vmem:[%s41 + $0x3c] sm:$0xf]
  %v1616 = vld [vmem:[%s43] sm:$0xf]
  %v1617 = vld [vmem:[%s43 + $0x4] sm:$0xf]
  %v1618 = vld [vmem:[%s43 + $0x8] sm:$0xf]
  %v1619 = vld [vmem:[%s43 + $0xc] sm:$0xf]
  %v1620 = vld [vmem:[%s43 + $0x10] sm:$0xf]
  %v1621 = vld [vmem:[%s43 + $0x14] sm:$0xf]
  %v1622 = vld [vmem:[%s43 + $0x18] sm:$0xf]
  %v1623 = vld [vmem:[%s43 + $0x1c] sm:$0xf]
  %v1624 = vld [vmem:[%s45] sm:$0xf]
  %v1625 = vld [vmem:[%s45 + $0x4] sm:$0xf]
  %v1626 = vld [vmem:[%s45 + $0x8] sm:$0xf]
  %v1627 = vld [vmem:[%s45 + $0xc] sm:$0xf]
  %v1628 = vld [vmem:[%s45 + $0x10] sm:$0xf]
  %v1629 = vld [vmem:[%s45 + $0x14] sm:$0xf]
  %v1630 = vld [vmem:[%s45 + $0x18] sm:$0xf]
  %v1631 = vld [vmem:[%s45 + $0x1c] sm:$0xf]
  %v1632 = vld [vmem:[%s45 + $0x20] sm:$0xf]
  %v1633 = vld [vmem:[%s45 + $0x24] sm:$0xf]
  %v1634 = vld [vmem:[%s45 + $0x28] sm:$0xf]
  %v1635 = vld [vmem:[%s45 + $0x2c] sm:$0xf]
  %v1636 = vld [vmem:[%s45 + $0x30] sm:$0xf]
  %v1637 = vld [vmem:[%s45 + $0x34] sm:$0xf]
  %v1638 = vld [vmem:[%s45 + $0x38] sm:$0xf]
  %v1639 = vld [vmem:[%s45 + $0x3c] sm:$0xf]
  %v1640 = vld [vmem:[%s47] sm:$0xf]
  %v1641 = vld [vmem:[%s47 + $0x4] sm:$0xf]
  %v1642 = vld [vmem:[%s47 + $0x8] sm:$0xf]
  %v1643 = vld [vmem:[%s47 + $0xc] sm:$0xf]
  %v1644 = vld [vmem:[%s47 + $0x10] sm:$0xf]
  %v1645 = vld [vmem:[%s47 + $0x14] sm:$0xf]
  %v1646 = vld [vmem:[%s47 + $0x18] sm:$0xf]
  %v1647 = vld [vmem:[%s47 + $0x1c] sm:$0xf]
  %v1648 = vpack.c.bf16 %v1595, %v1592
  %1649 = vmatprep.subr.bf16.mxu0 0
  %1650 = vmatpush1.bf16.msra.mxu0 %v1648
  %1651 = vmatprep.subr.bf16.mxu0 0
  %1652 = vmatpush1.bf16.msra.mxu0 0
  %1653 = vmatprep.subr.bf16.mxu0 0
  %1654 = vmatpush1.bf16.msra.mxu0 0
  %1655 = vmatprep.subr.bf16.mxu0 0
  %1656 = vmatpush1.bf16.msra.mxu0 0
  %1657 = vmatprep.subr.bf16.mxu0 0
  %1658 = vmatpush1.bf16.msra.mxu0 0
  %1659 = vmatprep.subr.bf16.mxu0 0
  %1660 = vmatpush1.bf16.msra.mxu0 0
  %1661 = vmatprep.subr.bf16.mxu0 0
  %1662 = vmatpush1.bf16.msra.mxu0 0
  %1663 = vmatprep.subr.bf16.mxu0 0
  %1664 = vmatpush1.bf16.msra.mxu0 0
  %1665 = vmatprep.subr.bf16.mxu0 0
  %1666 = vmatpush1.bf16.msra.mxu0 0
  %1667 = vmatprep.subr.bf16.mxu0 0
  %1668 = vmatpush1.bf16.msra.mxu0 0
  %1669 = vmatprep.subr.bf16.mxu0 0
  %1670 = vmatpush1.bf16.msra.mxu0 0
  %1671 = vmatprep.subr.bf16.mxu0 0
  %1672 = vmatpush1.bf16.msra.mxu0 0
  %1673 = vmatprep.subr.bf16.mxu0 0
  %1674 = vmatpush1.bf16.msra.mxu0 0
  %1675 = vmatprep.subr.bf16.mxu0 0
  %1676 = vmatpush1.bf16.msra.mxu0 0
  %1677 = vmatprep.subr.bf16.mxu0 0
  %1678 = vmatpush1.bf16.msra.mxu0 0
  %1679 = vmatprep.subr.bf16.mxu0 0
  %1680 = vmatpush1.bf16.msra.mxu0 0
  %1681 = vmatprep.mubr.bf16.mxu0 0
  %1682 = vmatmul.mubr.bf16.gmra.mrb[0].mxu0 %v805
  %v1683 = vpop.f32.mrb[0].mxu0
  %v1684 = vadd.f32 0.0, %v1683
  %v1685 = vpop.f32.mrb[0].mxu0
  %v1686 = vpop.f32.mrb[0].mxu0
  %v1687 = vadd.f32 0.0, %v1686
  %v1688 = vpop.f32.mrb[0].mxu0
  %1689 = vmatprep.mubr.bf16.mxu0 0
  %1690 = vmatmul.mubr.bf16.gmra.mrb[0].mxu0 %v808
  %v1691 = vpop.f32.mrb[0].mxu0
  %v1692 = vadd.f32 0.0, %v1691
  %v1693 = vpop.f32.mrb[0].mxu0
  %v1694 = vpop.f32.mrb[0].mxu0
  %v1695 = vadd.f32 0.0, %v1694
  %v1696 = vpop.f32.mrb[0].mxu0
  %1697 = vmatprep.mubr.bf16.mxu0 0
  %1698 = vmatmul.mubr.bf16.gmra.mrb[0].mxu0 %v811
  %v1699 = vpop.f32.mrb[0].mxu0
  %v1700 = vadd.f32 0.0, %v1699
  %v1701 = vpop.f32.mrb[0].mxu0
  %v1702 = vpop.f32.mrb[0].mxu0
  %v1703 = vadd.f32 0.0, %v1702
  %v1704 = vpop.f32.mrb[0].mxu0
  %1705 = vdwg.mxu0
  %1712 = vrot.lane.b32.xlu0 %v1684, 64
  %v1713 = vpop.permute.xlu0 %1712
  %1714 = vrot.lane.b32.xlu0 %v1687, 64
  %v1715 = vpop.permute.xlu0 %1714
  %1716 = vrot.lane.b32.xlu0 %v1692, 64
  %v1717 = vpop.permute.xlu0 %1716
  %1718 = vrot.lane.b32.xlu0 %v1695, 64
  %v1719 = vpop.permute.xlu0 %1718
  %1720 = vrot.lane.b32.xlu0 %v1700, 64
  %v1721 = vpop.permute.xlu0 %1720
  %1722 = vrot.lane.b32.xlu0 %v1703, 64
  %v1723 = vpop.permute.xlu0 %1722
  %v1730 = vsel %vm413, %v921, %v1713
  %v1731 = vsel %vm413, %v924, %v1715
  %v1732 = vsel %vm413, %v929, %v1717
  %v1733 = vsel %vm413, %v932, %v1719
  %v1734 = vsel %vm413, %v937, %v1721
  %v1735 = vsel %vm413, %v940, %v1723
  %v1736 = vpack.c.bf16 %v1731, %v1730
  %v1737 = vpack.c.bf16 %v1733, %v1732
  %v1738 = vpack.c.bf16 %v1735, %v1734
  %v1739 = vlaneseq
  %v1740 = vshrl.u32 %v1739, 7
  %v1741 = vsub.s32 1, %v1740
  %v1742 = vrot.slane %v1598, %v1741
  %v1759 = vunpack.c.l.b16 %v1600
  %v1760 = vunpack.c.l.b16 %v1601
  %v1761 = vunpack.c.l.b16 %v1602
  %v1762 = vunpack.c.l.b16 %v1603
  %v1763 = vunpack.c.l.b16 %v1604
  %v1764 = vunpack.c.l.b16 %v1605
  %v1765 = vunpack.c.l.b16 %v1606
  %v1766 = vunpack.c.l.b16 %v1607
  %v1767 = vunpack.c.l.b16 %v1608
  %v1768 = vunpack.c.l.b16 %v1609
  %v1769 = vunpack.c.l.b16 %v1610
  %v1770 = vunpack.c.l.b16 %v1611
  %v1771 = vunpack.c.l.b16 %v1612
  %v1772 = vunpack.c.l.b16 %v1613
  %v1773 = vunpack.c.l.b16 %v1614
  %v1774 = vunpack.c.l.b16 %v1615
  %v1775 = vpack.c.b16 %v1760, %v1759
  %v1776 = vpack.c.b16 %v1762, %v1761
  %v1777 = vpack.c.b16 %v1764, %v1763
  %v1778 = vpack.c.b16 %v1766, %v1765
  %v1779 = vpack.c.b16 %v1768, %v1767
  %v1780 = vpack.c.b16 %v1770, %v1769
  %v1781 = vpack.c.b16 %v1772, %v1771
  %v1782 = vpack.c.b16 %v1774, %v1773
  %1791 = vmatprep.subr.bf16.mxu0 0
  %1792 = vmatpush1.bf16.msra.mxu0 %v1775
  %1793 = vmatprep.subr.bf16.mxu0 0
  %1794 = vmatpush1.bf16.msra.mxu0 %v1776
  %1795 = vmatprep.subr.bf16.mxu0 0
  %1796 = vmatpush1.bf16.msra.mxu0 %v1777
  %1797 = vmatprep.subr.bf16.mxu0 0
  %1798 = vmatpush1.bf16.msra.mxu0 %v1778
  %1799 = vmatprep.subr.bf16.mxu0 0
  %1800 = vmatpush1.bf16.msra.mxu0 %v1779
  %1801 = vmatprep.subr.bf16.mxu0 0
  %1802 = vmatpush1.bf16.msra.mxu0 %v1780
  %1803 = vmatprep.subr.bf16.mxu0 0
  %1804 = vmatpush1.bf16.msra.mxu0 %v1781
  %1805 = vmatprep.subr.bf16.mxu0 0
  %1806 = vmatpush1.bf16.msra.mxu0 %v1782
  %1807 = vmatprep.subr.bf16.mxu0 0
  %1808 = vmatpush1.bf16.msra.mxu0 0
  %1809 = vmatprep.subr.bf16.mxu0 0
  %1810 = vmatpush1.bf16.msra.mxu0 0
  %1811 = vmatprep.subr.bf16.mxu0 0
  %1812 = vmatpush1.bf16.msra.mxu0 0
  %1813 = vmatprep.subr.bf16.mxu0 0
  %1814 = vmatpush1.bf16.msra.mxu0 0
  %1815 = vmatprep.subr.bf16.mxu0 0
  %1816 = vmatpush1.bf16.msra.mxu0 0
  %1817 = vmatprep.subr.bf16.mxu0 0
  %1818 = vmatpush1.bf16.msra.mxu0 0
  %1819 = vmatprep.subr.bf16.mxu0 0
  %1820 = vmatpush1.bf16.msra.mxu0 0
  %1821 = vmatprep.subr.bf16.mxu0 0
  %1822 = vmatpush1.bf16.msra.mxu0 0
  %1823 = vmatprep.mubr.bf16.mxu0 0
  %1824 = vmatmul.mubr.bf16.gmra.mrb[0].mxu0 %v1736
  %v1825 = vpop.f32.mrb[0].mxu0
  %v1826 = vadd.f32 %v1742, %v1825
  %v1827 = vpop.f32.mrb[0].mxu0
  %v1828 = vpop.f32.mrb[0].mxu0
  %v1829 = vadd.f32 %v1742, %v1828
  %v1830 = vpop.f32.mrb[0].mxu0
  %1831 = vmatprep.mubr.bf16.mxu0 0
  %1832 = vmatmul.mubr.bf16.gmra.mrb[0].mxu0 %v1737
  %v1833 = vpop.f32.mrb[0].mxu0
  %v1834 = vadd.f32 %v1742, %v1833
  %v1835 = vpop.f32.mrb[0].mxu0
  %v1836 = vpop.f32.mrb[0].mxu0
  %v1837 = vadd.f32 %v1742, %v1836
  %v1838 = vpop.f32.mrb[0].mxu0
  %1839 = vmatprep.mubr.bf16.mxu0 0
  %1840 = vmatmul.mubr.bf16.gmra.mrb[0].mxu0 %v1738
  %v1841 = vpop.f32.mrb[0].mxu0
  %v1842 = vadd.f32 %v1742, %v1841
  %v1843 = vpop.f32.mrb[0].mxu0
  %v1844 = vpop.f32.mrb[0].mxu0
  %v1845 = vadd.f32 %v1742, %v1844
  %v1846 = vpop.f32.mrb[0].mxu0
  %1847 = vdwg.mxu0
  %v1848 = vlaneseq
  %v1849 = vshrl.u32 %v1848, 7
  %v1850 = vsub.s32 0, %v1849
  %v1851 = vrot.slane %v1598, %v1850
  %v1852 = vmul.f32 %v1088, %v1851
  %v1853 = vmul.f32 %v1093, %v1851
  %v1854 = vmul.f32 %v1098, %v1851
  %v1855 = vmul.f32 %v1103, %v1851
  %v1856 = vmul.f32 %v1108, %v1851
  %v1857 = vmul.f32 %v1113, %v1851
  %v1858 = vadd.f32 %v1826, %v1852
  %v1859 = vadd.f32 %v1829, %v1853
  %v1860 = vadd.f32 %v1834, %v1854
  %v1861 = vadd.f32 %v1837, %v1855
  %v1862 = vadd.f32 %v1842, %v1856
  %v1863 = vadd.f32 %v1845, %v1857
  %v1864 = vsel %vm413, %v1858, 0.0
  %1865 = vadd.xlane.f32.xlu0 %v1864
  %v1866 = vpop.xlane.xlu0 %1865
  %v1867 = vsel %vm413, %v1859, 0.0
  %1868 = vadd.xlane.f32.xlu0 %v1867
  %v1869 = vpop.xlane.xlu0 %1868
  %v1870 = vsel %vm413, %v1860, 0.0
  %1871 = vadd.xlane.f32.xlu0 %v1870
  %v1872 = vpop.xlane.xlu0 %1871
  %v1873 = vsel %vm413, %v1861, 0.0
  %1874 = vadd.xlane.f32.xlu0 %v1873
  %v1875 = vpop.xlane.xlu0 %1874
  %v1876 = vsel %vm413, %v1862, 0.0
  %1877 = vadd.xlane.f32.xlu0 %v1876
  %v1878 = vpop.xlane.xlu0 %1877
  %v1879 = vsel %vm413, %v1863, 0.0
  %1880 = vadd.xlane.f32.xlu0 %v1879
  %v1881 = vpop.xlane.xlu0 %1880
  %v1882 = vmul.f32 %v1866, %v1149
  %v1883 = vmul.f32 %v1869, %v1149
  %v1884 = vmul.f32 %v1872, %v1149
  %v1885 = vmul.f32 %v1875, %v1149
  %v1886 = vmul.f32 %v1878, %v1149
  %v1887 = vmul.f32 %v1881, %v1149
  %v1888 = vsub.f32 %v1858, %v1882
  %v1889 = vsub.f32 %v1859, %v1883
  %v1890 = vsub.f32 %v1860, %v1884
  %v1891 = vsub.f32 %v1861, %v1885
  %v1892 = vsub.f32 %v1862, %v1886
  %v1893 = vsub.f32 %v1863, %v1887
  %v1894 = vmul.f32 %v1888, %v1888
  %v1895 = vmul.f32 %v1889, %v1889
  %v1896 = vmul.f32 %v1890, %v1890
  %v1897 = vmul.f32 %v1891, %v1891
  %v1898 = vmul.f32 %v1892, %v1892
  %v1899 = vmul.f32 %v1893, %v1893
  %v1900 = vsel %vm413, %v1894, 0.0
  %1901 = vadd.xlane.f32.xlu0 %v1900
  %v1902 = vpop.xlane.xlu0 %1901
  %v1903 = vsel %vm413, %v1895, 0.0
  %1904 = vadd.xlane.f32.xlu0 %v1903
  %v1905 = vpop.xlane.xlu0 %1904
  %v1906 = vsel %vm413, %v1896, 0.0
  %1907 = vadd.xlane.f32.xlu0 %v1906
  %v1908 = vpop.xlane.xlu0 %1907
  %v1909 = vsel %vm413, %v1897, 0.0
  %1910 = vadd.xlane.f32.xlu0 %v1909
  %v1911 = vpop.xlane.xlu0 %1910
  %v1912 = vsel %vm413, %v1898, 0.0
  %1913 = vadd.xlane.f32.xlu0 %v1912
  %v1914 = vpop.xlane.xlu0 %1913
  %v1915 = vsel %vm413, %v1899, 0.0
  %1916 = vadd.xlane.f32.xlu0 %v1915
  %v1917 = vpop.xlane.xlu0 %1916
  %v1918 = vmul.f32 %v1902, %v1149
  %v1919 = vmul.f32 %v1905, %v1149
  %v1920 = vmul.f32 %v1908, %v1149
  %v1921 = vmul.f32 %v1911, %v1149
  %v1922 = vmul.f32 %v1914, %v1149
  %v1923 = vmul.f32 %v1917, %v1149
  %v1924 = vadd.f32 %v1918, 1e-05
  %v1925 = vadd.f32 %v1919, 1e-05
  %v1926 = vadd.f32 %v1920, 1e-05
  %v1927 = vadd.f32 %v1921, 1e-05
  %v1928 = vadd.f32 %v1922, 1e-05
  %v1929 = vadd.f32 %v1923, 1e-05
  %v1930 = vrsqrt.pop %v1924
  %v1931 = vrsqrt.pop %v1925
  %v1932 = vrsqrt.pop %v1926
  %v1933 = vrsqrt.pop %v1927
  %v1934 = vrsqrt.pop %v1928
  %v1935 = vrsqrt.pop %v1929
  %v1936 = vmul.f32 %v1888, %v1930
  %v1937 = vmul.f32 %v1889, %v1931
  %v1938 = vmul.f32 %v1890, %v1932
  %v1939 = vmul.f32 %v1891, %v1933
  %v1940 = vmul.f32 %v1892, %v1934
  %v1941 = vmul.f32 %v1893, %v1935
  %v1942 = vlaneseq
  %v1943 = vshrl.u32 %v1942, 7
  %v1944 = vsub.s32 2, %v1943
  %v1945 = vrot.slane %v1598, %v1944
  %v1946 = vmul.f32 %v1936, %v1945
  %v1947 = vmul.f32 %v1937, %v1945
  %v1948 = vmul.f32 %v1938, %v1945
  %v1949 = vmul.f32 %v1939, %v1945
  %v1950 = vmul.f32 %v1940, %v1945
  %v1951 = vmul.f32 %v1941, %v1945
  %v1952 = vlaneseq
  %v1953 = vshrl.u32 %v1952, 7
  %v1954 = vsub.s32 3, %v1953
  %v1955 = vrot.slane %v1598, %v1954
  %v1956 = vadd.f32 %v1946, %v1955
  %v1957 = vadd.f32 %v1947, %v1955
  %v1958 = vadd.f32 %v1948, %v1955
  %v1959 = vadd.f32 %v1949, %v1955
  %v1960 = vadd.f32 %v1950, %v1955
  %v1961 = vadd.f32 %v1951, %v1955
  %v1962 = vmax.f32 %v1956, 0.0
  %v1963 = vmax.f32 %v1957, 0.0
  %v1964 = vmax.f32 %v1958, 0.0
  %v1965 = vmax.f32 %v1959, 0.0
  %v1966 = vmax.f32 %v1960, 0.0
  %v1967 = vmax.f32 %v1961, 0.0
  %v1968 = vpack.c.bf16 %v1963, %v1962
  %v1969 = vpack.c.bf16 %v1965, %v1964
  %v1970 = vpack.c.bf16 %v1967, %v1966
  %v1971 = vlaneseq
  %v1972 = vshrl.u32 %v1971, 7
  %v1973 = vsub.s32 4, %v1972
  %v1974 = vrot.slane %v1598, %v1973
  %v1983 = vunpack.c.l.b16 %v1616
  %v1984 = vunpack.c.l.b16 %v1617
  %v1985 = vunpack.c.l.b16 %v1618
  %v1986 = vunpack.c.l.b16 %v1619
  %v1987 = vunpack.c.l.b16 %v1620
  %v1988 = vunpack.c.l.b16 %v1621
  %v1989 = vunpack.c.l.b16 %v1622
  %v1990 = vunpack.c.l.b16 %v1623
  %v1991 = vpack.c.b16 %v1984, %v1983
  %v1992 = vpack.c.b16 %v1986, %v1985
  %v1993 = vpack.c.b16 %v1988, %v1987
  %v1994 = vpack.c.b16 %v1990, %v1989
  %v2000 = vsel %vm413, %v1968, 0
  %v2003 = vsel %vm413, %v1969, 0
  %v2006 = vsel %vm413, %v1970, 0
  %2008 = vmatprep.subr.bf16.mxu0 0
  %2009 = vmatpush1.bf16.msra.mxu0 %v1991
  %2010 = vmatprep.subr.bf16.mxu0 0
  %2011 = vmatpush1.bf16.msra.mxu0 %v1992
  %2012 = vmatprep.subr.bf16.mxu0 0
  %2013 = vmatpush1.bf16.msra.mxu0 %v1993
  %2014 = vmatprep.subr.bf16.mxu0 0
  %2015 = vmatpush1.bf16.msra.mxu0 %v1994
  %2016 = vmatprep.subr.bf16.mxu0 0
  %2017 = vmatpush1.bf16.msra.mxu0 0
  %2018 = vmatprep.subr.bf16.mxu0 0
  %2019 = vmatpush1.bf16.msra.mxu0 0
  %2020 = vmatprep.subr.bf16.mxu0 0
  %2021 = vmatpush1.bf16.msra.mxu0 0
  %2022 = vmatprep.subr.bf16.mxu0 0
  %2023 = vmatpush1.bf16.msra.mxu0 0
  %2024 = vmatprep.subr.bf16.mxu0 0
  %2025 = vmatpush1.bf16.msra.mxu0 0
  %2026 = vmatprep.subr.bf16.mxu0 0
  %2027 = vmatpush1.bf16.msra.mxu0 0
  %2028 = vmatprep.subr.bf16.mxu0 0
  %2029 = vmatpush1.bf16.msra.mxu0 0
  %2030 = vmatprep.subr.bf16.mxu0 0
  %2031 = vmatpush1.bf16.msra.mxu0 0
  %2032 = vmatprep.subr.bf16.mxu0 0
  %2033 = vmatpush1.bf16.msra.mxu0 0
  %2034 = vmatprep.subr.bf16.mxu0 0
  %2035 = vmatpush1.bf16.msra.mxu0 0
  %2036 = vmatprep.subr.bf16.mxu0 0
  %2037 = vmatpush1.bf16.msra.mxu0 0
  %2038 = vmatprep.subr.bf16.mxu0 0
  %2039 = vmatpush1.bf16.msra.mxu0 0
  %2040 = vmatprep.mubr.bf16.mxu0 0
  %2041 = vmatmul.mubr.bf16.gmra.mrb[0].mxu0 %v2000
  %v2042 = vpop.f32.mrb[0].mxu0
  %v2043 = vadd.f32 %v1974, %v2042
  %v2044 = vpop.f32.mrb[0].mxu0
  %v2045 = vpop.f32.mrb[0].mxu0
  %v2046 = vadd.f32 %v1974, %v2045
  %v2047 = vpop.f32.mrb[0].mxu0
  %2048 = vmatprep.mubr.bf16.mxu0 0
  %2049 = vmatmul.mubr.bf16.gmra.mrb[0].mxu0 %v2003
  %v2050 = vpop.f32.mrb[0].mxu0
  %v2051 = vadd.f32 %v1974, %v2050
  %v2052 = vpop.f32.mrb[0].mxu0
  %v2053 = vpop.f32.mrb[0].mxu0
  %v2054 = vadd.f32 %v1974, %v2053
  %v2055 = vpop.f32.mrb[0].mxu0
  %2056 = vmatprep.mubr.bf16.mxu0 0
  %2057 = vmatmul.mubr.bf16.gmra.mrb[0].mxu0 %v2006
  %v2058 = vpop.f32.mrb[0].mxu0
  %v2059 = vadd.f32 %v1974, %v2058
  %v2060 = vpop.f32.mrb[0].mxu0
  %v2061 = vpop.f32.mrb[0].mxu0
  %v2062 = vadd.f32 %v1974, %v2061
  %v2063 = vpop.f32.mrb[0].mxu0
  %2064 = vdwg.mxu0
  %v2065 = vpack.c.bf16 %v2046, %v2043
  %v2066 = vpack.c.bf16 %v2054, %v2051
  %v2067 = vpack.c.bf16 %v2062, %v2059
  %v2069 = vsel %vm1336, %v274, 0
  %v2072 = vsel %vm1336, %v275, 0
  %2074 = vmatprep.subr.bf16.mxu0 0
  %2075 = vmatpush1.bf16.msra.mxu0 %v2065
  %2076 = vmatprep.subr.bf16.mxu0 0
  %2077 = vmatpush1.bf16.msra.mxu0 %v2066
  %2078 = vmatprep.subr.bf16.mxu0 0
  %2079 = vmatpush1.bf16.msra.mxu0 %v2067
  %2080 = vmatprep.subr.bf16.mxu0 0
  %2081 = vmatpush1.bf16.msra.mxu0 0
  %2082 = vmatprep.subr.bf16.mxu0 0
  %2083 = vmatpush1.bf16.msra.mxu0 0
  %2084 = vmatprep.subr.bf16.mxu0 0
  %2085 = vmatpush1.bf16.msra.mxu0 0
  %2086 = vmatprep.subr.bf16.mxu0 0
  %2087 = vmatpush1.bf16.msra.mxu0 0
  %2088 = vmatprep.subr.bf16.mxu0 0
  %2089 = vmatpush1.bf16.msra.mxu0 0
  %2090 = vmatprep.subr.bf16.mxu0 0
  %2091 = vmatpush1.bf16.msra.mxu0 0
  %2092 = vmatprep.subr.bf16.mxu0 0
  %2093 = vmatpush1.bf16.msra.mxu0 0
  %2094 = vmatprep.subr.bf16.mxu0 0
  %2095 = vmatpush1.bf16.msra.mxu0 0
  %2096 = vmatprep.subr.bf16.mxu0 0
  %2097 = vmatpush1.bf16.msra.mxu0 0
  %2098 = vmatprep.subr.bf16.mxu0 0
  %2099 = vmatpush1.bf16.msra.mxu0 0
  %2100 = vmatprep.subr.bf16.mxu0 0
  %2101 = vmatpush1.bf16.msra.mxu0 0
  %2102 = vmatprep.subr.bf16.mxu0 0
  %2103 = vmatpush1.bf16.msra.mxu0 0
  %2104 = vmatprep.subr.bf16.mxu0 0
  %2105 = vmatpush1.bf16.msra.mxu0 0
  %2106 = vmatprep.mubr.bf16.mxu0 0
  %2107 = vmatmul.mubr.bf16.gmra.mrb[0].mxu0 %v2069
  %v2108 = vpop.f32.mrb[0].mxu0
  %v2109 = vadd.f32 0.0, %v2108
  %v2110 = vpop.f32.mrb[0].mxu0
  %v2111 = vpop.f32.mrb[0].mxu0
  %v2112 = vadd.f32 0.0, %v2111
  %v2113 = vpop.f32.mrb[0].mxu0
  %2114 = vmatprep.mubr.bf16.mxu0 0
  %2115 = vmatmul.mubr.bf16.gmra.mrb[0].mxu0 %v2072
  %v2116 = vpop.f32.mrb[0].mxu0
  %v2117 = vadd.f32 0.0, %v2116
  %v2118 = vpop.f32.mrb[0].mxu0
  %v2119 = vpop.f32.mrb[0].mxu0
  %v2120 = vpop.f32.mrb[0].mxu0
  %2121 = vdwg.mxu0
  %v2122 = vsel %vm413, %v2109, 0.0
  %2123 = vadd.xlane.f32.xlu0 %v2122
  %v2124 = vpop.xlane.xlu0 %2123
  %v2125 = vsel %vm413, %v2112, 0.0
  %2126 = vadd.xlane.f32.xlu0 %v2125
  %v2127 = vpop.xlane.xlu0 %2126
  %v2128 = vsel %vm413, %v2117, 0.0
  %2129 = vadd.xlane.f32.xlu0 %v2128
  %v2130 = vpop.xlane.xlu0 %2129
  %v2131 = vmul.f32 %v2124, %v1149
  %v2132 = vmul.f32 %v2127, %v1149
  %v2133 = vmul.f32 %v2130, %v1149
  %v2134 = vsub.f32 %v2109, %v2131
  %v2135 = vsub.f32 %v2112, %v2132
  %v2136 = vsub.f32 %v2117, %v2133
  %v2137 = vmul.f32 %v2134, %v2134
  %v2138 = vmul.f32 %v2135, %v2135
  %v2139 = vmul.f32 %v2136, %v2136
  %v2140 = vsel %vm413, %v2137, 0.0
  %2141 = vadd.xlane.f32.xlu0 %v2140
  %v2142 = vpop.xlane.xlu0 %2141
  %v2143 = vsel %vm413, %v2138, 0.0
  %2144 = vadd.xlane.f32.xlu0 %v2143
  %v2145 = vpop.xlane.xlu0 %2144
  %v2146 = vsel %vm413, %v2139, 0.0
  %2147 = vadd.xlane.f32.xlu0 %v2146
  %v2148 = vpop.xlane.xlu0 %2147
  %v2149 = vmul.f32 %v2142, %v1149
  %v2150 = vmul.f32 %v2145, %v1149
  %v2151 = vmul.f32 %v2148, %v1149
  %v2152 = vadd.f32 %v2149, 1e-05
  %v2153 = vadd.f32 %v2150, 1e-05
  %v2154 = vadd.f32 %v2151, 1e-05
  %v2155 = vrsqrt.pop %v2152
  %v2156 = vrsqrt.pop %v2153
  %v2157 = vrsqrt.pop %v2154
  %v2158 = vmul.f32 %v2134, %v2155
  %v2159 = vmul.f32 %v2135, %v2156
  %v2160 = vmul.f32 %v2136, %v2157
  %v2161 = vlaneseq
  %v2162 = vshrl.u32 %v2161, 7
  %v2163 = vsub.s32 5, %v2162
  %v2164 = vrot.slane %v1598, %v2163
  %v2165 = vmul.f32 %v2158, %v2164
  %v2166 = vmul.f32 %v2159, %v2164
  %v2167 = vmul.f32 %v2160, %v2164
  %v2168 = vlaneseq
  %v2169 = vshrl.u32 %v2168, 7
  %v2170 = vsub.s32 6, %v2169
  %v2171 = vrot.slane %v1598, %v2170
  %v2172 = vadd.f32 %v2165, %v2171
  %v2173 = vadd.f32 %v2166, %v2171
  %v2174 = vadd.f32 %v2167, %v2171
  %2178 = vrot.lane.b32.xlu0 %v680, 64
  %v2179 = vpop.permute.xlu0 %2178
  %2180 = vrot.lane.b32.xlu0 %v681, 64
  %v2181 = vpop.permute.xlu0 %2180
  %2182 = vrot.lane.b32.xlu0 %v682, 64
  %v2183 = vpop.permute.xlu0 %2182
  %v2187 = vsel %vm413, %v2172, %v2179
  %v2188 = vsel %vm413, %v2173, %v2181
  %v2189 = vsel %vm413, %v2174, %v2183
  %v2190 = vpack.c.bf16 %v2188, %v2187
  %v2191 = vpack.c.bf16 %v2189, %v2189
  %v2192 = vlaneseq
  %v2193 = vshrl.u32 %v2192, 7
  %v2194 = vsub.s32 7, %v2193
  %v2195 = vrot.slane %v1598, %v2194
  %v2212 = vunpack.c.l.b16 %v1624
  %v2213 = vunpack.c.l.b16 %v1625
  %v2214 = vunpack.c.l.b16 %v1626
  %v2215 = vunpack.c.l.b16 %v1627
  %v2216 = vunpack.c.l.b16 %v1628
  %v2217 = vunpack.c.l.b16 %v1629
  %v2218 = vunpack.c.l.b16 %v1630
  %v2219 = vunpack.c.l.b16 %v1631
  %v2220 = vunpack.c.l.b16 %v1632
  %v2221 = vunpack.c.l.b16 %v1633
  %v2222 = vunpack.c.l.b16 %v1634
  %v2223 = vunpack.c.l.b16 %v1635
  %v2224 = vunpack.c.l.b16 %v1636
  %v2225 = vunpack.c.l.b16 %v1637
  %v2226 = vunpack.c.l.b16 %v1638
  %v2227 = vunpack.c.l.b16 %v1639
  %v2228 = vpack.c.b16 %v2213, %v2212
  %v2229 = vpack.c.b16 %v2215, %v2214
  %v2230 = vpack.c.b16 %v2217, %v2216
  %v2231 = vpack.c.b16 %v2219, %v2218
  %v2232 = vpack.c.b16 %v2221, %v2220
  %v2233 = vpack.c.b16 %v2223, %v2222
  %v2234 = vpack.c.b16 %v2225, %v2224
  %v2235 = vpack.c.b16 %v2227, %v2226
  %2244 = vmatprep.subr.bf16.mxu0 0
  %2245 = vmatpush1.bf16.msra.mxu0 %v2228
  %2246 = vmatprep.subr.bf16.mxu0 0
  %2247 = vmatpush1.bf16.msra.mxu0 %v2229
  %2248 = vmatprep.subr.bf16.mxu0 0
  %2249 = vmatpush1.bf16.msra.mxu0 %v2230
  %2250 = vmatprep.subr.bf16.mxu0 0
  %2251 = vmatpush1.bf16.msra.mxu0 %v2231
  %2252 = vmatprep.subr.bf16.mxu0 0
  %2253 = vmatpush1.bf16.msra.mxu0 %v2232
  %2254 = vmatprep.subr.bf16.mxu0 0
  %2255 = vmatpush1.bf16.msra.mxu0 %v2233
  %2256 = vmatprep.subr.bf16.mxu0 0
  %2257 = vmatpush1.bf16.msra.mxu0 %v2234
  %2258 = vmatprep.subr.bf16.mxu0 0
  %2259 = vmatpush1.bf16.msra.mxu0 %v2235
  %2260 = vmatprep.subr.bf16.mxu0 0
  %2261 = vmatpush1.bf16.msra.mxu0 0
  %2262 = vmatprep.subr.bf16.mxu0 0
  %2263 = vmatpush1.bf16.msra.mxu0 0
  %2264 = vmatprep.subr.bf16.mxu0 0
  %2265 = vmatpush1.bf16.msra.mxu0 0
  %2266 = vmatprep.subr.bf16.mxu0 0
  %2267 = vmatpush1.bf16.msra.mxu0 0
  %2268 = vmatprep.subr.bf16.mxu0 0
  %2269 = vmatpush1.bf16.msra.mxu0 0
  %2270 = vmatprep.subr.bf16.mxu0 0
  %2271 = vmatpush1.bf16.msra.mxu0 0
  %2272 = vmatprep.subr.bf16.mxu0 0
  %2273 = vmatpush1.bf16.msra.mxu0 0
  %2274 = vmatprep.subr.bf16.mxu0 0
  %2275 = vmatpush1.bf16.msra.mxu0 0
  %2276 = vmatprep.mubr.bf16.mxu0 0
  %2277 = vmatmul.mubr.bf16.gmra.mrb[0].mxu0 %v2190
  %v2278 = vpop.f32.mrb[0].mxu0
  %v2279 = vadd.f32 %v2195, %v2278
  %v2280 = vpop.f32.mrb[0].mxu0
  %v2281 = vpop.f32.mrb[0].mxu0
  %v2282 = vadd.f32 %v2195, %v2281
  %v2283 = vpop.f32.mrb[0].mxu0
  %2284 = vmatprep.mubr.bf16.mxu0 0
  %2285 = vmatmul.mubr.bf16.gmra.mrb[0].mxu0 %v2191
  %v2286 = vpop.f32.mrb[0].mxu0
  %v2287 = vadd.f32 %v2195, %v2286
  %v2288 = vpop.f32.mrb[0].mxu0
  %v2289 = vpop.f32.mrb[0].mxu0
  %v2290 = vpop.f32.mrb[0].mxu0
  %2291 = vdwg.mxu0
  %v2292 = vmax.f32 %v2279, 0.0
  %v2293 = vmax.f32 %v2282, 0.0
  %v2294 = vmax.f32 %v2287, 0.0
  %v2295 = vpack.c.bf16 %v2293, %v2292
  %v2296 = vpack.c.bf16 %v2294, %v2294
  %v2297 = vlaneseq
  %v2298 = vshrl.u32 %v2297, 7
  %v2299 = vsub.s32 0, %v2298
  %v2300 = vrot.slane %v1599, %v2299
  %v2309 = vunpack.c.l.b16 %v1640
  %v2310 = vunpack.c.l.b16 %v1641
  %v2311 = vunpack.c.l.b16 %v1642
  %v2312 = vunpack.c.l.b16 %v1643
  %v2313 = vunpack.c.l.b16 %v1644
  %v2314 = vunpack.c.l.b16 %v1645
  %v2315 = vunpack.c.l.b16 %v1646
  %v2316 = vunpack.c.l.b16 %v1647
  %v2317 = vpack.c.b16 %v2310, %v2309
  %v2318 = vpack.c.b16 %v2312, %v2311
  %v2319 = vpack.c.b16 %v2314, %v2313
  %v2320 = vpack.c.b16 %v2316, %v2315
  %v2326 = vsel %vm413, %v2295, 0
  %v2329 = vsel %vm413, %v2296, 0
  %2331 = vmatprep.subr.bf16.mxu0 0
  %2332 = vmatpush1.bf16.msra.mxu0 %v2317
  %2333 = vmatprep.subr.bf16.mxu0 0
  %2334 = vmatpush1.bf16.msra.mxu0 %v2318
  %2335 = vmatprep.subr.bf16.mxu0 0
  %2336 = vmatpush1.bf16.msra.mxu0 %v2319
  %2337 = vmatprep.subr.bf16.mxu0 0
  %2338 = vmatpush1.bf16.msra.mxu0 %v2320
  %2339 = vmatprep.subr.bf16.mxu0 0
  %2340 = vmatpush1.bf16.msra.mxu0 0
  %2341 = vmatprep.subr.bf16.mxu0 0
  %2342 = vmatpush1.bf16.msra.mxu0 0
  %2343 = vmatprep.subr.bf16.mxu0 0
  %2344 = vmatpush1.bf16.msra.mxu0 0
  %2345 = vmatprep.subr.bf16.mxu0 0
  %2346 = vmatpush1.bf16.msra.mxu0 0
  %2347 = vmatprep.subr.bf16.mxu0 0
  %2348 = vmatpush1.bf16.msra.mxu0 0
  %2349 = vmatprep.subr.bf16.mxu0 0
  %2350 = vmatpush1.bf16.msra.mxu0 0
  %2351 = vmatprep.subr.bf16.mxu0 0
  %2352 = vmatpush1.bf16.msra.mxu0 0
  %2353 = vmatprep.subr.bf16.mxu0 0
  %2354 = vmatpush1.bf16.msra.mxu0 0
  %2355 = vmatprep.subr.bf16.mxu0 0
  %2356 = vmatpush1.bf16.msra.mxu0 0
  %2357 = vmatprep.subr.bf16.mxu0 0
  %2358 = vmatpush1.bf16.msra.mxu0 0
  %2359 = vmatprep.subr.bf16.mxu0 0
  %2360 = vmatpush1.bf16.msra.mxu0 0
  %2361 = vmatprep.subr.bf16.mxu0 0
  %2362 = vmatpush1.bf16.msra.mxu0 0
  %2363 = vmatprep.mubr.bf16.mxu0 0
  %2364 = vmatmul.mubr.bf16.gmra.mrb[0].mxu0 %v2326
  %v2365 = vpop.f32.mrb[0].mxu0
  %v2366 = vadd.f32 %v2300, %v2365
  %v2367 = vpop.f32.mrb[0].mxu0
  %v2368 = vpop.f32.mrb[0].mxu0
  %v2369 = vadd.f32 %v2300, %v2368
  %v2370 = vpop.f32.mrb[0].mxu0
  %2371 = vmatprep.mubr.bf16.mxu0 0
  %2372 = vmatmul.mubr.bf16.gmra.mrb[0].mxu0 %v2329
  %v2373 = vpop.f32.mrb[0].mxu0
  %v2374 = vadd.f32 %v2300, %v2373
  %v2375 = vpop.f32.mrb[0].mxu0
  %v2376 = vpop.f32.mrb[0].mxu0
  %v2377 = vpop.f32.mrb[0].mxu0
  %2378 = vdwg.mxu0
  %v2379 = vld [vmem:[%s49] sm:$0xff]
  %v2380 = vld [vmem:[%s49 + $0x8] sm:$0x1]
  %v2381 = vld [vmem:[%s51] sm:$0xf]
  %v2382 = vld [vmem:[%s51 + $0x4] sm:$0xf]
  %v2383 = vld [vmem:[%s51 + $0x8] sm:$0xf]
  %v2384 = vld [vmem:[%s51 + $0xc] sm:$0xf]
  %v2385 = vld [vmem:[%s51 + $0x10] sm:$0xf]
  %v2386 = vld [vmem:[%s51 + $0x14] sm:$0xf]
  %v2387 = vld [vmem:[%s51 + $0x18] sm:$0xf]
  %v2388 = vld [vmem:[%s51 + $0x1c] sm:$0xf]
  %v2389 = vld [vmem:[%s51 + $0x20] sm:$0xf]
  %v2390 = vld [vmem:[%s51 + $0x24] sm:$0xf]
  %v2391 = vld [vmem:[%s51 + $0x28] sm:$0xf]
  %v2392 = vld [vmem:[%s51 + $0x2c] sm:$0xf]
  %v2393 = vld [vmem:[%s51 + $0x30] sm:$0xf]
  %v2394 = vld [vmem:[%s51 + $0x34] sm:$0xf]
  %v2395 = vld [vmem:[%s51 + $0x38] sm:$0xf]
  %v2396 = vld [vmem:[%s51 + $0x3c] sm:$0xf]
  %v2397 = vld [vmem:[%s53] sm:$0xf]
  %v2398 = vld [vmem:[%s53 + $0x4] sm:$0xf]
  %v2399 = vld [vmem:[%s53 + $0x8] sm:$0xf]
  %v2400 = vld [vmem:[%s53 + $0xc] sm:$0xf]
  %v2401 = vld [vmem:[%s53 + $0x10] sm:$0xf]
  %v2402 = vld [vmem:[%s53 + $0x14] sm:$0xf]
  %v2403 = vld [vmem:[%s53 + $0x18] sm:$0xf]
  %v2404 = vld [vmem:[%s53 + $0x1c] sm:$0xf]
  %v2405 = vld [vmem:[%s55] sm:$0xf]
  %v2406 = vld [vmem:[%s55 + $0x4] sm:$0xf]
  %v2407 = vld [vmem:[%s55 + $0x8] sm:$0xf]
  %v2408 = vld [vmem:[%s55 + $0xc] sm:$0xf]
  %v2409 = vld [vmem:[%s55 + $0x10] sm:$0xf]
  %v2410 = vld [vmem:[%s55 + $0x14] sm:$0xf]
  %v2411 = vld [vmem:[%s55 + $0x18] sm:$0xf]
  %v2412 = vld [vmem:[%s55 + $0x1c] sm:$0xf]
  %v2413 = vld [vmem:[%s55 + $0x20] sm:$0xf]
  %v2414 = vld [vmem:[%s55 + $0x24] sm:$0xf]
  %v2415 = vld [vmem:[%s55 + $0x28] sm:$0xf]
  %v2416 = vld [vmem:[%s55 + $0x2c] sm:$0xf]
  %v2417 = vld [vmem:[%s55 + $0x30] sm:$0xf]
  %v2418 = vld [vmem:[%s55 + $0x34] sm:$0xf]
  %v2419 = vld [vmem:[%s55 + $0x38] sm:$0xf]
  %v2420 = vld [vmem:[%s55 + $0x3c] sm:$0xf]
  %v2421 = vld [vmem:[%s57] sm:$0xf]
  %v2422 = vld [vmem:[%s57 + $0x4] sm:$0xf]
  %v2423 = vld [vmem:[%s57 + $0x8] sm:$0xf]
  %v2424 = vld [vmem:[%s57 + $0xc] sm:$0xf]
  %v2425 = vld [vmem:[%s57 + $0x10] sm:$0xf]
  %v2426 = vld [vmem:[%s57 + $0x14] sm:$0xf]
  %v2427 = vld [vmem:[%s57 + $0x18] sm:$0xf]
  %v2428 = vld [vmem:[%s57 + $0x1c] sm:$0xf]
  %v2429 = vpack.c.bf16 %v2369, %v2366
  %v2430 = vpack.c.bf16 %v2374, %v2374
  %v2432 = vsel %vm882, %v2430, 0
  %2434 = vmatprep.subr.bf16.mxu0 0
  %2435 = vmatpush1.bf16.msra.mxu0 %v2429
  %2436 = vmatprep.subr.bf16.mxu0 0
  %2437 = vmatpush1.bf16.msra.mxu0 %v2432
  %2438 = vmatprep.subr.bf16.mxu0 0
  %2439 = vmatpush1.bf16.msra.mxu0 0
  %2440 = vmatprep.subr.bf16.mxu0 0
  %2441 = vmatpush1.bf16.msra.mxu0 0
  %2442 = vmatprep.subr.bf16.mxu0 0
  %2443 = vmatpush1.bf16.msra.mxu0 0
  %2444 = vmatprep.subr.bf16.mxu0 0
  %2445 = vmatpush1.bf16.msra.mxu0 0
  %2446 = vmatprep.subr.bf16.mxu0 0
  %2447 = vmatpush1.bf16.msra.mxu0 0
  %2448 = vmatprep.subr.bf16.mxu0 0
  %2449 = vmatpush1.bf16.msra.mxu0 0
  %2450 = vmatprep.subr.bf16.mxu0 0
  %2451 = vmatpush1.bf16.msra.mxu0 0
  %2452 = vmatprep.subr.bf16.mxu0 0
  %2453 = vmatpush1.bf16.msra.mxu0 0
  %2454 = vmatprep.subr.bf16.mxu0 0
  %2455 = vmatpush1.bf16.msra.mxu0 0
  %2456 = vmatprep.subr.bf16.mxu0 0
  %2457 = vmatpush1.bf16.msra.mxu0 0
  %2458 = vmatprep.subr.bf16.mxu0 0
  %2459 = vmatpush1.bf16.msra.mxu0 0
  %2460 = vmatprep.subr.bf16.mxu0 0
  %2461 = vmatpush1.bf16.msra.mxu0 0
  %2462 = vmatprep.subr.bf16.mxu0 0
  %2463 = vmatpush1.bf16.msra.mxu0 0
  %2464 = vmatprep.subr.bf16.mxu0 0
  %2465 = vmatpush1.bf16.msra.mxu0 0
  %2466 = vmatprep.mubr.bf16.mxu0 0
  %2467 = vmatmul.mubr.bf16.gmra.mrb[0].mxu0 %v874
  %v2468 = vpop.f32.mrb[0].mxu0
  %v2469 = vadd.f32 0.0, %v2468
  %v2470 = vpop.f32.mrb[0].mxu0
  %v2471 = vpop.f32.mrb[0].mxu0
  %v2472 = vadd.f32 0.0, %v2471
  %v2473 = vpop.f32.mrb[0].mxu0
  %2474 = vmatprep.mubr.bf16.mxu0 0
  %2475 = vmatmul.mubr.bf16.gmra.mrb[0].mxu0 %v877
  %v2476 = vpop.f32.mrb[0].mxu0
  %v2477 = vadd.f32 0.0, %v2476
  %v2478 = vpop.f32.mrb[0].mxu0
  %v2479 = vpop.f32.mrb[0].mxu0
  %v2480 = vadd.f32 0.0, %v2479
  %v2481 = vpop.f32.mrb[0].mxu0
  %2482 = vmatprep.mubr.bf16.mxu0 0
  %2483 = vmatmul.mubr.bf16.gmra.mrb[0].mxu0 %v880
  %v2484 = vpop.f32.mrb[0].mxu0
  %v2485 = vadd.f32 0.0, %v2484
  %v2486 = vpop.f32.mrb[0].mxu0
  %v2487 = vpop.f32.mrb[0].mxu0
  %v2488 = vadd.f32 0.0, %v2487
  %v2489 = vpop.f32.mrb[0].mxu0
  %2490 = vdwg.mxu0
  %2497 = vrot.lane.b32.xlu0 %v2469, 64
  %v2498 = vpop.permute.xlu0 %2497
  %2499 = vrot.lane.b32.xlu0 %v2472, 64
  %v2500 = vpop.permute.xlu0 %2499
  %2501 = vrot.lane.b32.xlu0 %v2477, 64
  %v2502 = vpop.permute.xlu0 %2501
  %2503 = vrot.lane.b32.xlu0 %v2480, 64
  %v2504 = vpop.permute.xlu0 %2503
  %2505 = vrot.lane.b32.xlu0 %v2485, 64
  %v2506 = vpop.permute.xlu0 %2505
  %2507 = vrot.lane.b32.xlu0 %v2488, 64
  %v2508 = vpop.permute.xlu0 %2507
  %v2515 = vsel %vm413, %v1684, %v2498
  %v2516 = vsel %vm413, %v1687, %v2500
  %v2517 = vsel %vm413, %v1692, %v2502
  %v2518 = vsel %vm413, %v1695, %v2504
  %v2519 = vsel %vm413, %v1700, %v2506
  %v2520 = vsel %vm413, %v1703, %v2508
  %v2521 = vpack.c.bf16 %v2516, %v2515
  %v2522 = vpack.c.bf16 %v2518, %v2517
  %v2523 = vpack.c.bf16 %v2520, %v2519
  %v2524 = vlaneseq
  %v2525 = vshrl.u32 %v2524, 7
  %v2526 = vsub.s32 1, %v2525
  %v2527 = vrot.slane %v2379, %v2526
  %v2544 = vunpack.c.l.b16 %v2381
  %v2545 = vunpack.c.l.b16 %v2382
  %v2546 = vunpack.c.l.b16 %v2383
  %v2547 = vunpack.c.l.b16 %v2384
  %v2548 = vunpack.c.l.b16 %v2385
  %v2549 = vunpack.c.l.b16 %v2386
  %v2550 = vunpack.c.l.b16 %v2387
  %v2551 = vunpack.c.l.b16 %v2388
  %v2552 = vunpack.c.l.b16 %v2389
  %v2553 = vunpack.c.l.b16 %v2390
  %v2554 = vunpack.c.l.b16 %v2391
  %v2555 = vunpack.c.l.b16 %v2392
  %v2556 = vunpack.c.l.b16 %v2393
  %v2557 = vunpack.c.l.b16 %v2394
  %v2558 = vunpack.c.l.b16 %v2395
  %v2559 = vunpack.c.l.b16 %v2396
  %v2560 = vpack.c.b16 %v2545, %v2544
  %v2561 = vpack.c.b16 %v2547, %v2546
  %v2562 = vpack.c.b16 %v2549, %v2548
  %v2563 = vpack.c.b16 %v2551, %v2550
  %v2564 = vpack.c.b16 %v2553, %v2552
  %v2565 = vpack.c.b16 %v2555, %v2554
  %v2566 = vpack.c.b16 %v2557, %v2556
  %v2567 = vpack.c.b16 %v2559, %v2558
  %2576 = vmatprep.subr.bf16.mxu0 0
  %2577 = vmatpush1.bf16.msra.mxu0 %v2560
  %2578 = vmatprep.subr.bf16.mxu0 0
  %2579 = vmatpush1.bf16.msra.mxu0 %v2561
  %2580 = vmatprep.subr.bf16.mxu0 0
  %2581 = vmatpush1.bf16.msra.mxu0 %v2562
  %2582 = vmatprep.subr.bf16.mxu0 0
  %2583 = vmatpush1.bf16.msra.mxu0 %v2563
  %2584 = vmatprep.subr.bf16.mxu0 0
  %2585 = vmatpush1.bf16.msra.mxu0 %v2564
  %2586 = vmatprep.subr.bf16.mxu0 0
  %2587 = vmatpush1.bf16.msra.mxu0 %v2565
  %2588 = vmatprep.subr.bf16.mxu0 0
  %2589 = vmatpush1.bf16.msra.mxu0 %v2566
  %2590 = vmatprep.subr.bf16.mxu0 0
  %2591 = vmatpush1.bf16.msra.mxu0 %v2567
  %2592 = vmatprep.subr.bf16.mxu0 0
  %2593 = vmatpush1.bf16.msra.mxu0 0
  %2594 = vmatprep.subr.bf16.mxu0 0
  %2595 = vmatpush1.bf16.msra.mxu0 0
  %2596 = vmatprep.subr.bf16.mxu0 0
  %2597 = vmatpush1.bf16.msra.mxu0 0
  %2598 = vmatprep.subr.bf16.mxu0 0
  %2599 = vmatpush1.bf16.msra.mxu0 0
  %2600 = vmatprep.subr.bf16.mxu0 0
  %2601 = vmatpush1.bf16.msra.mxu0 0
  %2602 = vmatprep.subr.bf16.mxu0 0
  %2603 = vmatpush1.bf16.msra.mxu0 0
  %2604 = vmatprep.subr.bf16.mxu0 0
  %2605 = vmatpush1.bf16.msra.mxu0 0
  %2606 = vmatprep.subr.bf16.mxu0 0
  %2607 = vmatpush1.bf16.msra.mxu0 0
  %2608 = vmatprep.mubr.bf16.mxu0 0
  %2609 = vmatmul.mubr.bf16.gmra.mrb[0].mxu0 %v2521
  %v2610 = vpop.f32.mrb[0].mxu0
  %v2611 = vadd.f32 %v2527, %v2610
  %v2612 = vpop.f32.mrb[0].mxu0
  %v2613 = vpop.f32.mrb[0].mxu0
  %v2614 = vadd.f32 %v2527, %v2613
  %v2615 = vpop.f32.mrb[0].mxu0
  %2616 = vmatprep.mubr.bf16.mxu0 0
  %2617 = vmatmul.mubr.bf16.gmra.mrb[0].mxu0 %v2522
  %v2618 = vpop.f32.mrb[0].mxu0
  %v2619 = vadd.f32 %v2527, %v2618
  %v2620 = vpop.f32.mrb[0].mxu0
  %v2621 = vpop.f32.mrb[0].mxu0
  %v2622 = vadd.f32 %v2527, %v2621
  %v2623 = vpop.f32.mrb[0].mxu0
  %2624 = vmatprep.mubr.bf16.mxu0 0
  %2625 = vmatmul.mubr.bf16.gmra.mrb[0].mxu0 %v2523
  %v2626 = vpop.f32.mrb[0].mxu0
  %v2627 = vadd.f32 %v2527, %v2626
  %v2628 = vpop.f32.mrb[0].mxu0
  %v2629 = vpop.f32.mrb[0].mxu0
  %v2630 = vadd.f32 %v2527, %v2629
  %v2631 = vpop.f32.mrb[0].mxu0
  %2632 = vdwg.mxu0
  %v2633 = vlaneseq
  %v2634 = vshrl.u32 %v2633, 7
  %v2635 = vsub.s32 0, %v2634
  %v2636 = vrot.slane %v2379, %v2635
  %v2637 = vmul.f32 %v1088, %v2636
  %v2638 = vmul.f32 %v1093, %v2636
  %v2639 = vmul.f32 %v1098, %v2636
  %v2640 = vmul.f32 %v1103, %v2636
  %v2641 = vmul.f32 %v1108, %v2636
  %v2642 = vmul.f32 %v1113, %v2636
  %v2643 = vadd.f32 %v2611, %v2637
  %v2644 = vadd.f32 %v2614, %v2638
  %v2645 = vadd.f32 %v2619, %v2639
  %v2646 = vadd.f32 %v2622, %v2640
  %v2647 = vadd.f32 %v2627, %v2641
  %v2648 = vadd.f32 %v2630, %v2642
  %v2649 = vsel %vm413, %v2643, 0.0
  %2650 = vadd.xlane.f32.xlu0 %v2649
  %v2651 = vpop.xlane.xlu0 %2650
  %v2652 = vsel %vm413, %v2644, 0.0
  %2653 = vadd.xlane.f32.xlu0 %v2652
  %v2654 = vpop.xlane.xlu0 %2653
  %v2655 = vsel %vm413, %v2645, 0.0
  %2656 = vadd.xlane.f32.xlu0 %v2655
  %v2657 = vpop.xlane.xlu0 %2656
  %v2658 = vsel %vm413, %v2646, 0.0
  %2659 = vadd.xlane.f32.xlu0 %v2658
  %v2660 = vpop.xlane.xlu0 %2659
  %v2661 = vsel %vm413, %v2647, 0.0
  %2662 = vadd.xlane.f32.xlu0 %v2661
  %v2663 = vpop.xlane.xlu0 %2662
  %v2664 = vsel %vm413, %v2648, 0.0
  %2665 = vadd.xlane.f32.xlu0 %v2664
  %v2666 = vpop.xlane.xlu0 %2665
  %v2667 = vmul.f32 %v2651, %v1149
  %v2668 = vmul.f32 %v2654, %v1149
  %v2669 = vmul.f32 %v2657, %v1149
  %v2670 = vmul.f32 %v2660, %v1149
  %v2671 = vmul.f32 %v2663, %v1149
  %v2672 = vmul.f32 %v2666, %v1149
  %v2673 = vsub.f32 %v2643, %v2667
  %v2674 = vsub.f32 %v2644, %v2668
  %v2675 = vsub.f32 %v2645, %v2669
  %v2676 = vsub.f32 %v2646, %v2670
  %v2677 = vsub.f32 %v2647, %v2671
  %v2678 = vsub.f32 %v2648, %v2672
  %v2679 = vmul.f32 %v2673, %v2673
  %v2680 = vmul.f32 %v2674, %v2674
  %v2681 = vmul.f32 %v2675, %v2675
  %v2682 = vmul.f32 %v2676, %v2676
  %v2683 = vmul.f32 %v2677, %v2677
  %v2684 = vmul.f32 %v2678, %v2678
  %v2685 = vsel %vm413, %v2679, 0.0
  %2686 = vadd.xlane.f32.xlu0 %v2685
  %v2687 = vpop.xlane.xlu0 %2686
  %v2688 = vsel %vm413, %v2680, 0.0
  %2689 = vadd.xlane.f32.xlu0 %v2688
  %v2690 = vpop.xlane.xlu0 %2689
  %v2691 = vsel %vm413, %v2681, 0.0
  %2692 = vadd.xlane.f32.xlu0 %v2691
  %v2693 = vpop.xlane.xlu0 %2692
  %v2694 = vsel %vm413, %v2682, 0.0
  %2695 = vadd.xlane.f32.xlu0 %v2694
  %v2696 = vpop.xlane.xlu0 %2695
  %v2697 = vsel %vm413, %v2683, 0.0
  %2698 = vadd.xlane.f32.xlu0 %v2697
  %v2699 = vpop.xlane.xlu0 %2698
  %v2700 = vsel %vm413, %v2684, 0.0
  %2701 = vadd.xlane.f32.xlu0 %v2700
  %v2702 = vpop.xlane.xlu0 %2701
  %v2703 = vmul.f32 %v2687, %v1149
  %v2704 = vmul.f32 %v2690, %v1149
  %v2705 = vmul.f32 %v2693, %v1149
  %v2706 = vmul.f32 %v2696, %v1149
  %v2707 = vmul.f32 %v2699, %v1149
  %v2708 = vmul.f32 %v2702, %v1149
  %v2709 = vadd.f32 %v2703, 1e-05
  %v2710 = vadd.f32 %v2704, 1e-05
  %v2711 = vadd.f32 %v2705, 1e-05
  %v2712 = vadd.f32 %v2706, 1e-05
  %v2713 = vadd.f32 %v2707, 1e-05
  %v2714 = vadd.f32 %v2708, 1e-05
  %v2715 = vrsqrt.pop %v2709
  %v2716 = vrsqrt.pop %v2710
  %v2717 = vrsqrt.pop %v2711
  %v2718 = vrsqrt.pop %v2712
  %v2719 = vrsqrt.pop %v2713
  %v2720 = vrsqrt.pop %v2714
  %v2721 = vmul.f32 %v2673, %v2715
  %v2722 = vmul.f32 %v2674, %v2716
  %v2723 = vmul.f32 %v2675, %v2717
  %v2724 = vmul.f32 %v2676, %v2718
  %v2725 = vmul.f32 %v2677, %v2719
  %v2726 = vmul.f32 %v2678, %v2720
  %v2727 = vlaneseq
  %v2728 = vshrl.u32 %v2727, 7
  %v2729 = vsub.s32 2, %v2728
  %v2730 = vrot.slane %v2379, %v2729
  %v2731 = vmul.f32 %v2721, %v2730
  %v2732 = vmul.f32 %v2722, %v2730
  %v2733 = vmul.f32 %v2723, %v2730
  %v2734 = vmul.f32 %v2724, %v2730
  %v2735 = vmul.f32 %v2725, %v2730
  %v2736 = vmul.f32 %v2726, %v2730
  %v2737 = vlaneseq
  %v2738 = vshrl.u32 %v2737, 7
  %v2739 = vsub.s32 3, %v2738
  %v2740 = vrot.slane %v2379, %v2739
  %v2741 = vadd.f32 %v2731, %v2740
  %v2742 = vadd.f32 %v2732, %v2740
  %v2743 = vadd.f32 %v2733, %v2740
  %v2744 = vadd.f32 %v2734, %v2740
  %v2745 = vadd.f32 %v2735, %v2740
  %v2746 = vadd.f32 %v2736, %v2740
  %v2747 = vmax.f32 %v2741, 0.0
  %v2748 = vmax.f32 %v2742, 0.0
  %v2749 = vmax.f32 %v2743, 0.0
  %v2750 = vmax.f32 %v2744, 0.0
  %v2751 = vmax.f32 %v2745, 0.0
  %v2752 = vmax.f32 %v2746, 0.0
  %v2753 = vpack.c.bf16 %v2748, %v2747
  %v2754 = vpack.c.bf16 %v2750, %v2749
  %v2755 = vpack.c.bf16 %v2752, %v2751
  %v2756 = vlaneseq
  %v2757 = vshrl.u32 %v2756, 7
  %v2758 = vsub.s32 4, %v2757
  %v2759 = vrot.slane %v2379, %v2758
  %v2768 = vunpack.c.l.b16 %v2397
  %v2769 = vunpack.c.l.b16 %v2398
  %v2770 = vunpack.c.l.b16 %v2399
  %v2771 = vunpack.c.l.b16 %v2400
  %v2772 = vunpack.c.l.b16 %v2401
  %v2773 = vunpack.c.l.b16 %v2402
  %v2774 = vunpack.c.l.b16 %v2403
  %v2775 = vunpack.c.l.b16 %v2404
  %v2776 = vpack.c.b16 %v2769, %v2768
  %v2777 = vpack.c.b16 %v2771, %v2770
  %v2778 = vpack.c.b16 %v2773, %v2772
  %v2779 = vpack.c.b16 %v2775, %v2774
  %v2785 = vsel %vm413, %v2753, 0
  %v2788 = vsel %vm413, %v2754, 0
  %v2791 = vsel %vm413, %v2755, 0
  %2793 = vmatprep.subr.bf16.mxu0 0
  %2794 = vmatpush1.bf16.msra.mxu0 %v2776
  %2795 = vmatprep.subr.bf16.mxu0 0
  %2796 = vmatpush1.bf16.msra.mxu0 %v2777
  %2797 = vmatprep.subr.bf16.mxu0 0
  %2798 = vmatpush1.bf16.msra.mxu0 %v2778
  %2799 = vmatprep.subr.bf16.mxu0 0
  %2800 = vmatpush1.bf16.msra.mxu0 %v2779
  %2801 = vmatprep.subr.bf16.mxu0 0
  %2802 = vmatpush1.bf16.msra.mxu0 0
  %2803 = vmatprep.subr.bf16.mxu0 0
  %2804 = vmatpush1.bf16.msra.mxu0 0
  %2805 = vmatprep.subr.bf16.mxu0 0
  %2806 = vmatpush1.bf16.msra.mxu0 0
  %2807 = vmatprep.subr.bf16.mxu0 0
  %2808 = vmatpush1.bf16.msra.mxu0 0
  %2809 = vmatprep.subr.bf16.mxu0 0
  %2810 = vmatpush1.bf16.msra.mxu0 0
  %2811 = vmatprep.subr.bf16.mxu0 0
  %2812 = vmatpush1.bf16.msra.mxu0 0
  %2813 = vmatprep.subr.bf16.mxu0 0
  %2814 = vmatpush1.bf16.msra.mxu0 0
  %2815 = vmatprep.subr.bf16.mxu0 0
  %2816 = vmatpush1.bf16.msra.mxu0 0
  %2817 = vmatprep.subr.bf16.mxu0 0
  %2818 = vmatpush1.bf16.msra.mxu0 0
  %2819 = vmatprep.subr.bf16.mxu0 0
  %2820 = vmatpush1.bf16.msra.mxu0 0
  %2821 = vmatprep.subr.bf16.mxu0 0
  %2822 = vmatpush1.bf16.msra.mxu0 0
  %2823 = vmatprep.subr.bf16.mxu0 0
  %2824 = vmatpush1.bf16.msra.mxu0 0
  %2825 = vmatprep.mubr.bf16.mxu0 0
  %2826 = vmatmul.mubr.bf16.gmra.mrb[0].mxu0 %v2785
  %v2827 = vpop.f32.mrb[0].mxu0
  %v2828 = vadd.f32 %v2759, %v2827
  %v2829 = vpop.f32.mrb[0].mxu0
  %v2830 = vpop.f32.mrb[0].mxu0
  %v2831 = vadd.f32 %v2759, %v2830
  %v2832 = vpop.f32.mrb[0].mxu0
  %2833 = vmatprep.mubr.bf16.mxu0 0
  %2834 = vmatmul.mubr.bf16.gmra.mrb[0].mxu0 %v2788
  %v2835 = vpop.f32.mrb[0].mxu0
  %v2836 = vadd.f32 %v2759, %v2835
  %v2837 = vpop.f32.mrb[0].mxu0
  %v2838 = vpop.f32.mrb[0].mxu0
  %v2839 = vadd.f32 %v2759, %v2838
  %v2840 = vpop.f32.mrb[0].mxu0
  %2841 = vmatprep.mubr.bf16.mxu0 0
  %2842 = vmatmul.mubr.bf16.gmra.mrb[0].mxu0 %v2791
  %v2843 = vpop.f32.mrb[0].mxu0
  %v2844 = vadd.f32 %v2759, %v2843
  %v2845 = vpop.f32.mrb[0].mxu0
  %v2846 = vpop.f32.mrb[0].mxu0
  %v2847 = vadd.f32 %v2759, %v2846
  %v2848 = vpop.f32.mrb[0].mxu0
  %2849 = vdwg.mxu0
  %v2850 = vpack.c.bf16 %v2831, %v2828
  %v2851 = vpack.c.bf16 %v2839, %v2836
  %v2852 = vpack.c.bf16 %v2847, %v2844
  %2853 = vmatprep.subr.bf16.mxu0 0
  %2854 = vmatpush1.bf16.msra.mxu0 %v2850
  %2855 = vmatprep.subr.bf16.mxu0 0
  %2856 = vmatpush1.bf16.msra.mxu0 %v2851
  %2857 = vmatprep.subr.bf16.mxu0 0
  %2858 = vmatpush1.bf16.msra.mxu0 %v2852
  %2859 = vmatprep.subr.bf16.mxu0 0
  %2860 = vmatpush1.bf16.msra.mxu0 0
  %2861 = vmatprep.subr.bf16.mxu0 0
  %2862 = vmatpush1.bf16.msra.mxu0 0
  %2863 = vmatprep.subr.bf16.mxu0 0
  %2864 = vmatpush1.bf16.msra.mxu0 0
  %2865 = vmatprep.subr.bf16.mxu0 0
  %2866 = vmatpush1.bf16.msra.mxu0 0
  %2867 = vmatprep.subr.bf16.mxu0 0
  %2868 = vmatpush1.bf16.msra.mxu0 0
  %2869 = vmatprep.subr.bf16.mxu0 0
  %2870 = vmatpush1.bf16.msra.mxu0 0
  %2871 = vmatprep.subr.bf16.mxu0 0
  %2872 = vmatpush1.bf16.msra.mxu0 0
  %2873 = vmatprep.subr.bf16.mxu0 0
  %2874 = vmatpush1.bf16.msra.mxu0 0
  %2875 = vmatprep.subr.bf16.mxu0 0
  %2876 = vmatpush1.bf16.msra.mxu0 0
  %2877 = vmatprep.subr.bf16.mxu0 0
  %2878 = vmatpush1.bf16.msra.mxu0 0
  %2879 = vmatprep.subr.bf16.mxu0 0
  %2880 = vmatpush1.bf16.msra.mxu0 0
  %2881 = vmatprep.subr.bf16.mxu0 0
  %2882 = vmatpush1.bf16.msra.mxu0 0
  %2883 = vmatprep.subr.bf16.mxu0 0
  %2884 = vmatpush1.bf16.msra.mxu0 0
  %2885 = vmatprep.mubr.bf16.mxu0 0
  %2886 = vmatmul.mubr.bf16.gmra.mrb[0].mxu0 %v1338
  %v2887 = vpop.f32.mrb[0].mxu0
  %v2888 = vadd.f32 0.0, %v2887
  %v2889 = vpop.f32.mrb[0].mxu0
  %v2890 = vpop.f32.mrb[0].mxu0
  %v2891 = vadd.f32 0.0, %v2890
  %v2892 = vpop.f32.mrb[0].mxu0
  %2893 = vdwg.mxu0
  %v2894 = vsel %vm413, %v2888, 0.0
  %2895 = vadd.xlane.f32.xlu0 %v2894
  %v2896 = vpop.xlane.xlu0 %2895
  %v2897 = vsel %vm413, %v2891, 0.0
  %2898 = vadd.xlane.f32.xlu0 %v2897
  %v2899 = vpop.xlane.xlu0 %2898
  %v2900 = vmul.f32 %v2896, %v1149
  %v2901 = vmul.f32 %v2899, %v1149
  %v2902 = vsub.f32 %v2888, %v2900
  %v2903 = vsub.f32 %v2891, %v2901
  %v2904 = vmul.f32 %v2902, %v2902
  %v2905 = vmul.f32 %v2903, %v2903
  %v2906 = vsel %vm413, %v2904, 0.0
  %2907 = vadd.xlane.f32.xlu0 %v2906
  %v2908 = vpop.xlane.xlu0 %2907
  %v2909 = vsel %vm413, %v2905, 0.0
  %2910 = vadd.xlane.f32.xlu0 %v2909
  %v2911 = vpop.xlane.xlu0 %2910
  %v2912 = vmul.f32 %v2908, %v1149
  %v2913 = vmul.f32 %v2911, %v1149
  %v2914 = vadd.f32 %v2912, 1e-05
  %v2915 = vadd.f32 %v2913, 1e-05
  %v2916 = vrsqrt.pop %v2914
  %v2917 = vrsqrt.pop %v2915
  %v2918 = vmul.f32 %v2902, %v2916
  %v2919 = vmul.f32 %v2903, %v2917
  %v2920 = vlaneseq
  %v2921 = vshrl.u32 %v2920, 7
  %v2922 = vsub.s32 5, %v2921
  %v2923 = vrot.slane %v2379, %v2922
  %v2924 = vmul.f32 %v2918, %v2923
  %v2925 = vmul.f32 %v2919, %v2923
  %v2926 = vlaneseq
  %v2927 = vshrl.u32 %v2926, 7
  %v2928 = vsub.s32 6, %v2927
  %v2929 = vrot.slane %v2379, %v2928
  %v2930 = vadd.f32 %v2924, %v2929
  %v2931 = vadd.f32 %v2925, %v2929
  %2934 = vrot.lane.b32.xlu0 %v1592, 64
  %v2935 = vpop.permute.xlu0 %2934
  %2936 = vrot.lane.b32.xlu0 %v1595, 64
  %v2937 = vpop.permute.xlu0 %2936
  %v2940 = vsel %vm413, %v2930, %v2935
  %v2941 = vsel %vm413, %v2931, %v2937
  %v2942 = vpack.c.bf16 %v2941, %v2940
  %v2943 = vlaneseq
  %v2944 = vshrl.u32 %v2943, 7
  %v2945 = vsub.s32 7, %v2944
  %v2946 = vrot.slane %v2379, %v2945
  %v2963 = vunpack.c.l.b16 %v2405
  %v2964 = vunpack.c.l.b16 %v2406
  %v2965 = vunpack.c.l.b16 %v2407
  %v2966 = vunpack.c.l.b16 %v2408
  %v2967 = vunpack.c.l.b16 %v2409
  %v2968 = vunpack.c.l.b16 %v2410
  %v2969 = vunpack.c.l.b16 %v2411
  %v2970 = vunpack.c.l.b16 %v2412
  %v2971 = vunpack.c.l.b16 %v2413
  %v2972 = vunpack.c.l.b16 %v2414
  %v2973 = vunpack.c.l.b16 %v2415
  %v2974 = vunpack.c.l.b16 %v2416
  %v2975 = vunpack.c.l.b16 %v2417
  %v2976 = vunpack.c.l.b16 %v2418
  %v2977 = vunpack.c.l.b16 %v2419
  %v2978 = vunpack.c.l.b16 %v2420
  %v2979 = vpack.c.b16 %v2964, %v2963
  %v2980 = vpack.c.b16 %v2966, %v2965
  %v2981 = vpack.c.b16 %v2968, %v2967
  %v2982 = vpack.c.b16 %v2970, %v2969
  %v2983 = vpack.c.b16 %v2972, %v2971
  %v2984 = vpack.c.b16 %v2974, %v2973
  %v2985 = vpack.c.b16 %v2976, %v2975
  %v2986 = vpack.c.b16 %v2978, %v2977
  %2995 = vmatprep.subr.bf16.mxu0 0
  %2996 = vmatpush1.bf16.msra.mxu0 %v2979
  %2997 = vmatprep.subr.bf16.mxu0 0
  %2998 = vmatpush1.bf16.msra.mxu0 %v2980
  %2999 = vmatprep.subr.bf16.mxu0 0
  %3000 = vmatpush1.bf16.msra.mxu0 %v2981
  %3001 = vmatprep.subr.bf16.mxu0 0
  %3002 = vmatpush1.bf16.msra.mxu0 %v2982
  %3003 = vmatprep.subr.bf16.mxu0 0
  %3004 = vmatpush1.bf16.msra.mxu0 %v2983
  %3005 = vmatprep.subr.bf16.mxu0 0
  %3006 = vmatpush1.bf16.msra.mxu0 %v2984
  %3007 = vmatprep.subr.bf16.mxu0 0
  %3008 = vmatpush1.bf16.msra.mxu0 %v2985
  %3009 = vmatprep.subr.bf16.mxu0 0
  %3010 = vmatpush1.bf16.msra.mxu0 %v2986
  %3011 = vmatprep.subr.bf16.mxu0 0
  %3012 = vmatpush1.bf16.msra.mxu0 0
  %3013 = vmatprep.subr.bf16.mxu0 0
  %3014 = vmatpush1.bf16.msra.mxu0 0
  %3015 = vmatprep.subr.bf16.mxu0 0
  %3016 = vmatpush1.bf16.msra.mxu0 0
  %3017 = vmatprep.subr.bf16.mxu0 0
  %3018 = vmatpush1.bf16.msra.mxu0 0
  %3019 = vmatprep.subr.bf16.mxu0 0
  %3020 = vmatpush1.bf16.msra.mxu0 0
  %3021 = vmatprep.subr.bf16.mxu0 0
  %3022 = vmatpush1.bf16.msra.mxu0 0
  %3023 = vmatprep.subr.bf16.mxu0 0
  %3024 = vmatpush1.bf16.msra.mxu0 0
  %3025 = vmatprep.subr.bf16.mxu0 0
  %3026 = vmatpush1.bf16.msra.mxu0 0
  %3027 = vmatprep.mubr.bf16.mxu0 0
  %3028 = vmatmul.mubr.bf16.gmra.mrb[0].mxu0 %v2942
  %v3029 = vpop.f32.mrb[0].mxu0
  %v3030 = vadd.f32 %v2946, %v3029
  %v3031 = vpop.f32.mrb[0].mxu0
  %v3032 = vpop.f32.mrb[0].mxu0
  %v3033 = vadd.f32 %v2946, %v3032
  %v3034 = vpop.f32.mrb[0].mxu0
  %3035 = vdwg.mxu0
  %v3036 = vmax.f32 %v3030, 0.0
  %v3037 = vmax.f32 %v3033, 0.0
  %v3038 = vpack.c.bf16 %v3037, %v3036
  %v3039 = vlaneseq
  %v3040 = vshrl.u32 %v3039, 7
  %v3041 = vsub.s32 0, %v3040
  %v3042 = vrot.slane %v2380, %v3041
  %v3051 = vunpack.c.l.b16 %v2421
  %v3052 = vunpack.c.l.b16 %v2422
  %v3053 = vunpack.c.l.b16 %v2423
  %v3054 = vunpack.c.l.b16 %v2424
  %v3055 = vunpack.c.l.b16 %v2425
  %v3056 = vunpack.c.l.b16 %v2426
  %v3057 = vunpack.c.l.b16 %v2427
  %v3058 = vunpack.c.l.b16 %v2428
  %v3059 = vpack.c.b16 %v3052, %v3051
  %v3060 = vpack.c.b16 %v3054, %v3053
  %v3061 = vpack.c.b16 %v3056, %v3055
  %v3062 = vpack.c.b16 %v3058, %v3057
  %v3068 = vsel %vm413, %v3038, 0
  %3070 = vmatprep.subr.bf16.mxu0 0
  %3071 = vmatpush1.bf16.msra.mxu0 %v3059
  %3072 = vmatprep.subr.bf16.mxu0 0
  %3073 = vmatpush1.bf16.msra.mxu0 %v3060
  %3074 = vmatprep.subr.bf16.mxu0 0
  %3075 = vmatpush1.bf16.msra.mxu0 %v3061
  %3076 = vmatprep.subr.bf16.mxu0 0
  %3077 = vmatpush1.bf16.msra.mxu0 %v3062
  %3078 = vmatprep.subr.bf16.mxu0 0
  %3079 = vmatpush1.bf16.msra.mxu0 0
  %3080 = vmatprep.subr.bf16.mxu0 0
  %3081 = vmatpush1.bf16.msra.mxu0 0
  %3082 = vmatprep.subr.bf16.mxu0 0
  %3083 = vmatpush1.bf16.msra.mxu0 0
  %3084 = vmatprep.subr.bf16.mxu0 0
  %3085 = vmatpush1.bf16.msra.mxu0 0
  %3086 = vmatprep.subr.bf16.mxu0 0
  %3087 = vmatpush1.bf16.msra.mxu0 0
  %3088 = vmatprep.subr.bf16.mxu0 0
  %3089 = vmatpush1.bf16.msra.mxu0 0
  %3090 = vmatprep.subr.bf16.mxu0 0
  %3091 = vmatpush1.bf16.msra.mxu0 0
  %3092 = vmatprep.subr.bf16.mxu0 0
  %3093 = vmatpush1.bf16.msra.mxu0 0
  %3094 = vmatprep.subr.bf16.mxu0 0
  %3095 = vmatpush1.bf16.msra.mxu0 0
  %3096 = vmatprep.subr.bf16.mxu0 0
  %3097 = vmatpush1.bf16.msra.mxu0 0
  %3098 = vmatprep.subr.bf16.mxu0 0
  %3099 = vmatpush1.bf16.msra.mxu0 0
  %3100 = vmatprep.subr.bf16.mxu0 0
  %3101 = vmatpush1.bf16.msra.mxu0 0
  %3102 = vmatprep.mubr.bf16.mxu0 0
  %3103 = vmatmul.mubr.bf16.gmra.mrb[0].mxu0 %v3068
  %v3104 = vpop.f32.mrb[0].mxu0
  %v3105 = vadd.f32 %v3042, %v3104
  %v3106 = vpop.f32.mrb[0].mxu0
  %v3107 = vpop.f32.mrb[0].mxu0
  %v3108 = vadd.f32 %v3042, %v3107
  %v3109 = vpop.f32.mrb[0].mxu0
  %3110 = vdwg.mxu0
  %v3111 = vld [vmem:[%s59] sm:$0xff]
  %v3112 = vld [vmem:[%s59 + $0x8] sm:$0x1]
  %v3113 = vld [vmem:[%s61] sm:$0xf]
  %v3114 = vld [vmem:[%s61 + $0x4] sm:$0xf]
  %v3115 = vld [vmem:[%s61 + $0x8] sm:$0xf]
  %v3116 = vld [vmem:[%s61 + $0xc] sm:$0xf]
  %v3117 = vld [vmem:[%s61 + $0x10] sm:$0xf]
  %v3118 = vld [vmem:[%s61 + $0x14] sm:$0xf]
  %v3119 = vld [vmem:[%s61 + $0x18] sm:$0xf]
  %v3120 = vld [vmem:[%s61 + $0x1c] sm:$0xf]
  %v3121 = vld [vmem:[%s61 + $0x20] sm:$0xf]
  %v3122 = vld [vmem:[%s61 + $0x24] sm:$0xf]
  %v3123 = vld [vmem:[%s61 + $0x28] sm:$0xf]
  %v3124 = vld [vmem:[%s61 + $0x2c] sm:$0xf]
  %v3125 = vld [vmem:[%s61 + $0x30] sm:$0xf]
  %v3126 = vld [vmem:[%s61 + $0x34] sm:$0xf]
  %v3127 = vld [vmem:[%s61 + $0x38] sm:$0xf]
  %v3128 = vld [vmem:[%s61 + $0x3c] sm:$0xf]
  %v3129 = vld [vmem:[%s63] sm:$0xf]
  %v3130 = vld [vmem:[%s63 + $0x4] sm:$0xf]
  %v3131 = vld [vmem:[%s63 + $0x8] sm:$0xf]
  %v3132 = vld [vmem:[%s63 + $0xc] sm:$0xf]
  %v3133 = vld [vmem:[%s63 + $0x10] sm:$0xf]
  %v3134 = vld [vmem:[%s63 + $0x14] sm:$0xf]
  %v3135 = vld [vmem:[%s63 + $0x18] sm:$0xf]
  %v3136 = vld [vmem:[%s63 + $0x1c] sm:$0xf]
  %v3137 = vld [vmem:[%s65] sm:$0xf]
  %v3138 = vld [vmem:[%s65 + $0x4] sm:$0xf]
  %v3139 = vld [vmem:[%s65 + $0x8] sm:$0xf]
  %v3140 = vld [vmem:[%s65 + $0xc] sm:$0xf]
  %v3141 = vld [vmem:[%s65 + $0x10] sm:$0xf]
  %v3142 = vld [vmem:[%s65 + $0x14] sm:$0xf]
  %v3143 = vld [vmem:[%s65 + $0x18] sm:$0xf]
  %v3144 = vld [vmem:[%s65 + $0x1c] sm:$0xf]
  %v3145 = vld [vmem:[%s65 + $0x20] sm:$0xf]
  %v3146 = vld [vmem:[%s65 + $0x24] sm:$0xf]
  %v3147 = vld [vmem:[%s65 + $0x28] sm:$0xf]
  %v3148 = vld [vmem:[%s65 + $0x2c] sm:$0xf]
  %v3149 = vld [vmem:[%s65 + $0x30] sm:$0xf]
  %v3150 = vld [vmem:[%s65 + $0x34] sm:$0xf]
  %v3151 = vld [vmem:[%s65 + $0x38] sm:$0xf]
  %v3152 = vld [vmem:[%s65 + $0x3c] sm:$0xf]
  %v3153 = vld [vmem:[%s67] sm:$0xf]
  %v3154 = vld [vmem:[%s67 + $0x4] sm:$0xf]
  %v3155 = vld [vmem:[%s67 + $0x8] sm:$0xf]
  %v3156 = vld [vmem:[%s67 + $0xc] sm:$0xf]
  %v3157 = vld [vmem:[%s67 + $0x10] sm:$0xf]
  %v3158 = vld [vmem:[%s67 + $0x14] sm:$0xf]
  %v3159 = vld [vmem:[%s67 + $0x18] sm:$0xf]
  %v3160 = vld [vmem:[%s67 + $0x1c] sm:$0xf]
  %v3161 = vpack.c.bf16 %v3108, %v3105
  %3162 = vmatprep.subr.bf16.mxu0 0
  %3163 = vmatpush1.bf16.msra.mxu0 %v3161
  %3164 = vmatprep.subr.bf16.mxu0 0
  %3165 = vmatpush1.bf16.msra.mxu0 0
  %3166 = vmatprep.subr.bf16.mxu0 0
  %3167 = vmatpush1.bf16.msra.mxu0 0
  %3168 = vmatprep.subr.bf16.mxu0 0
  %3169 = vmatpush1.bf16.msra.mxu0 0
  %3170 = vmatprep.subr.bf16.mxu0 0
  %3171 = vmatpush1.bf16.msra.mxu0 0
  %3172 = vmatprep.subr.bf16.mxu0 0
  %3173 = vmatpush1.bf16.msra.mxu0 0
  %3174 = vmatprep.subr.bf16.mxu0 0
  %3175 = vmatpush1.bf16.msra.mxu0 0
  %3176 = vmatprep.subr.bf16.mxu0 0
  %3177 = vmatpush1.bf16.msra.mxu0 0
  %3178 = vmatprep.subr.bf16.mxu0 0
  %3179 = vmatpush1.bf16.msra.mxu0 0
  %3180 = vmatprep.subr.bf16.mxu0 0
  %3181 = vmatpush1.bf16.msra.mxu0 0
  %3182 = vmatprep.subr.bf16.mxu0 0
  %3183 = vmatpush1.bf16.msra.mxu0 0
  %3184 = vmatprep.subr.bf16.mxu0 0
  %3185 = vmatpush1.bf16.msra.mxu0 0
  %3186 = vmatprep.subr.bf16.mxu0 0
  %3187 = vmatpush1.bf16.msra.mxu0 0
  %3188 = vmatprep.subr.bf16.mxu0 0
  %3189 = vmatpush1.bf16.msra.mxu0 0
  %3190 = vmatprep.subr.bf16.mxu0 0
  %3191 = vmatpush1.bf16.msra.mxu0 0
  %3192 = vmatprep.subr.bf16.mxu0 0
  %3193 = vmatpush1.bf16.msra.mxu0 0
  %3194 = vmatprep.mubr.bf16.mxu0 0
  %3195 = vmatmul.mubr.bf16.gmra.mrb[0].mxu0 %v805
  %v3196 = vpop.f32.mrb[0].mxu0
  %v3197 = vadd.f32 0.0, %v3196
  %v3198 = vpop.f32.mrb[0].mxu0
  %v3199 = vpop.f32.mrb[0].mxu0
  %v3200 = vadd.f32 0.0, %v3199
  %v3201 = vpop.f32.mrb[0].mxu0
  %3202 = vmatprep.mubr.bf16.mxu0 0
  %3203 = vmatmul.mubr.bf16.gmra.mrb[0].mxu0 %v808
  %v3204 = vpop.f32.mrb[0].mxu0
  %v3205 = vadd.f32 0.0, %v3204
  %v3206 = vpop.f32.mrb[0].mxu0
  %v3207 = vpop.f32.mrb[0].mxu0
  %v3208 = vadd.f32 0.0, %v3207
  %v3209 = vpop.f32.mrb[0].mxu0
  %3210 = vmatprep.mubr.bf16.mxu0 0
  %3211 = vmatmul.mubr.bf16.gmra.mrb[0].mxu0 %v811
  %v3212 = vpop.f32.mrb[0].mxu0
  %v3213 = vadd.f32 0.0, %v3212
  %v3214 = vpop.f32.mrb[0].mxu0
  %v3215 = vpop.f32.mrb[0].mxu0
  %v3216 = vadd.f32 0.0, %v3215
  %v3217 = vpop.f32.mrb[0].mxu0
  %3218 = vdwg.mxu0
  %3225 = vrot.lane.b32.xlu0 %v3197, 64
  %v3226 = vpop.permute.xlu0 %3225
  %3227 = vrot.lane.b32.xlu0 %v3200, 64
  %v3228 = vpop.permute.xlu0 %3227
  %3229 = vrot.lane.b32.xlu0 %v3205, 64
  %v3230 = vpop.permute.xlu0 %3229
  %3231 = vrot.lane.b32.xlu0 %v3208, 64
  %v3232 = vpop.permute.xlu0 %3231
  %3233 = vrot.lane.b32.xlu0 %v3213, 64
  %v3234 = vpop.permute.xlu0 %3233
  %3235 = vrot.lane.b32.xlu0 %v3216, 64
  %v3236 = vpop.permute.xlu0 %3235
  %v3243 = vsel %vm413, %v2469, %v3226
  %v3244 = vsel %vm413, %v2472, %v3228
  %v3245 = vsel %vm413, %v2477, %v3230
  %v3246 = vsel %vm413, %v2480, %v3232
  %v3247 = vsel %vm413, %v2485, %v3234
  %v3248 = vsel %vm413, %v2488, %v3236
  %v3249 = vpack.c.bf16 %v3244, %v3243
  %v3250 = vpack.c.bf16 %v3246, %v3245
  %v3251 = vpack.c.bf16 %v3248, %v3247
  %v3252 = vlaneseq
  %v3253 = vshrl.u32 %v3252, 7
  %v3254 = vsub.s32 1, %v3253
  %v3255 = vrot.slane %v3111, %v3254
  %v3272 = vunpack.c.l.b16 %v3113
  %v3273 = vunpack.c.l.b16 %v3114
  %v3274 = vunpack.c.l.b16 %v3115
  %v3275 = vunpack.c.l.b16 %v3116
  %v3276 = vunpack.c.l.b16 %v3117
  %v3277 = vunpack.c.l.b16 %v3118
  %v3278 = vunpack.c.l.b16 %v3119
  %v3279 = vunpack.c.l.b16 %v3120
  %v3280 = vunpack.c.l.b16 %v3121
  %v3281 = vunpack.c.l.b16 %v3122
  %v3282 = vunpack.c.l.b16 %v3123
  %v3283 = vunpack.c.l.b16 %v3124
  %v3284 = vunpack.c.l.b16 %v3125
  %v3285 = vunpack.c.l.b16 %v3126
  %v3286 = vunpack.c.l.b16 %v3127
  %v3287 = vunpack.c.l.b16 %v3128
  %v3288 = vpack.c.b16 %v3273, %v3272
  %v3289 = vpack.c.b16 %v3275, %v3274
  %v3290 = vpack.c.b16 %v3277, %v3276
  %v3291 = vpack.c.b16 %v3279, %v3278
  %v3292 = vpack.c.b16 %v3281, %v3280
  %v3293 = vpack.c.b16 %v3283, %v3282
  %v3294 = vpack.c.b16 %v3285, %v3284
  %v3295 = vpack.c.b16 %v3287, %v3286
  %3304 = vmatprep.subr.bf16.mxu0 0
  %3305 = vmatpush1.bf16.msra.mxu0 %v3288
  %3306 = vmatprep.subr.bf16.mxu0 0
  %3307 = vmatpush1.bf16.msra.mxu0 %v3289
  %3308 = vmatprep.subr.bf16.mxu0 0
  %3309 = vmatpush1.bf16.msra.mxu0 %v3290
  %3310 = vmatprep.subr.bf16.mxu0 0
  %3311 = vmatpush1.bf16.msra.mxu0 %v3291
  %3312 = vmatprep.subr.bf16.mxu0 0
  %3313 = vmatpush1.bf16.msra.mxu0 %v3292
  %3314 = vmatprep.subr.bf16.mxu0 0
  %3315 = vmatpush1.bf16.msra.mxu0 %v3293
  %3316 = vmatprep.subr.bf16.mxu0 0
  %3317 = vmatpush1.bf16.msra.mxu0 %v3294
  %3318 = vmatprep.subr.bf16.mxu0 0
  %3319 = vmatpush1.bf16.msra.mxu0 %v3295
  %3320 = vmatprep.subr.bf16.mxu0 0
  %3321 = vmatpush1.bf16.msra.mxu0 0
  %3322 = vmatprep.subr.bf16.mxu0 0
  %3323 = vmatpush1.bf16.msra.mxu0 0
  %3324 = vmatprep.subr.bf16.mxu0 0
  %3325 = vmatpush1.bf16.msra.mxu0 0
  %3326 = vmatprep.subr.bf16.mxu0 0
  %3327 = vmatpush1.bf16.msra.mxu0 0
  %3328 = vmatprep.subr.bf16.mxu0 0
  %3329 = vmatpush1.bf16.msra.mxu0 0
  %3330 = vmatprep.subr.bf16.mxu0 0
  %3331 = vmatpush1.bf16.msra.mxu0 0
  %3332 = vmatprep.subr.bf16.mxu0 0
  %3333 = vmatpush1.bf16.msra.mxu0 0
  %3334 = vmatprep.subr.bf16.mxu0 0
  %3335 = vmatpush1.bf16.msra.mxu0 0
  %3336 = vmatprep.mubr.bf16.mxu0 0
  %3337 = vmatmul.mubr.bf16.gmra.mrb[0].mxu0 %v3249
  %v3338 = vpop.f32.mrb[0].mxu0
  %v3339 = vadd.f32 %v3255, %v3338
  %v3340 = vpop.f32.mrb[0].mxu0
  %v3341 = vpop.f32.mrb[0].mxu0
  %v3342 = vadd.f32 %v3255, %v3341
  %v3343 = vpop.f32.mrb[0].mxu0
  %3344 = vmatprep.mubr.bf16.mxu0 0
  %3345 = vmatmul.mubr.bf16.gmra.mrb[0].mxu0 %v3250
  %v3346 = vpop.f32.mrb[0].mxu0
  %v3347 = vadd.f32 %v3255, %v3346
  %v3348 = vpop.f32.mrb[0].mxu0
  %v3349 = vpop.f32.mrb[0].mxu0
  %v3350 = vadd.f32 %v3255, %v3349
  %v3351 = vpop.f32.mrb[0].mxu0
  %3352 = vmatprep.mubr.bf16.mxu0 0
  %3353 = vmatmul.mubr.bf16.gmra.mrb[0].mxu0 %v3251
  %v3354 = vpop.f32.mrb[0].mxu0
  %v3355 = vadd.f32 %v3255, %v3354
  %v3356 = vpop.f32.mrb[0].mxu0
  %v3357 = vpop.f32.mrb[0].mxu0
  %v3358 = vadd.f32 %v3255, %v3357
  %v3359 = vpop.f32.mrb[0].mxu0
  %3360 = vdwg.mxu0
  %v3361 = vlaneseq
  %v3362 = vshrl.u32 %v3361, 7
  %v3363 = vsub.s32 0, %v3362
  %v3364 = vrot.slane %v3111, %v3363
  %v3365 = vmul.f32 %v1088, %v3364
  %v3366 = vmul.f32 %v1093, %v3364
  %v3367 = vmul.f32 %v1098, %v3364
  %v3368 = vmul.f32 %v1103, %v3364
  %v3369 = vmul.f32 %v1108, %v3364
  %v3370 = vmul.f32 %v1113, %v3364
  %v3371 = vadd.f32 %v3339, %v3365
  %v3372 = vadd.f32 %v3342, %v3366
  %v3373 = vadd.f32 %v3347, %v3367
  %v3374 = vadd.f32 %v3350, %v3368
  %v3375 = vadd.f32 %v3355, %v3369
  %v3376 = vadd.f32 %v3358, %v3370
  %v3377 = vsel %vm413, %v3371, 0.0
  %3378 = vadd.xlane.f32.xlu0 %v3377
  %v3379 = vpop.xlane.xlu0 %3378
  %v3380 = vsel %vm413, %v3372, 0.0
  %3381 = vadd.xlane.f32.xlu0 %v3380
  %v3382 = vpop.xlane.xlu0 %3381
  %v3383 = vsel %vm413, %v3373, 0.0
  %3384 = vadd.xlane.f32.xlu0 %v3383
  %v3385 = vpop.xlane.xlu0 %3384
  %v3386 = vsel %vm413, %v3374, 0.0
  %3387 = vadd.xlane.f32.xlu0 %v3386
  %v3388 = vpop.xlane.xlu0 %3387
  %v3389 = vsel %vm413, %v3375, 0.0
  %3390 = vadd.xlane.f32.xlu0 %v3389
  %v3391 = vpop.xlane.xlu0 %3390
  %v3392 = vsel %vm413, %v3376, 0.0
  %3393 = vadd.xlane.f32.xlu0 %v3392
  %v3394 = vpop.xlane.xlu0 %3393
  %v3395 = vmul.f32 %v3379, %v1149
  %v3396 = vmul.f32 %v3382, %v1149
  %v3397 = vmul.f32 %v3385, %v1149
  %v3398 = vmul.f32 %v3388, %v1149
  %v3399 = vmul.f32 %v3391, %v1149
  %v3400 = vmul.f32 %v3394, %v1149
  %v3401 = vsub.f32 %v3371, %v3395
  %v3402 = vsub.f32 %v3372, %v3396
  %v3403 = vsub.f32 %v3373, %v3397
  %v3404 = vsub.f32 %v3374, %v3398
  %v3405 = vsub.f32 %v3375, %v3399
  %v3406 = vsub.f32 %v3376, %v3400
  %v3407 = vmul.f32 %v3401, %v3401
  %v3408 = vmul.f32 %v3402, %v3402
  %v3409 = vmul.f32 %v3403, %v3403
  %v3410 = vmul.f32 %v3404, %v3404
  %v3411 = vmul.f32 %v3405, %v3405
  %v3412 = vmul.f32 %v3406, %v3406
  %v3413 = vsel %vm413, %v3407, 0.0
  %3414 = vadd.xlane.f32.xlu0 %v3413
  %v3415 = vpop.xlane.xlu0 %3414
  %v3416 = vsel %vm413, %v3408, 0.0
  %3417 = vadd.xlane.f32.xlu0 %v3416
  %v3418 = vpop.xlane.xlu0 %3417
  %v3419 = vsel %vm413, %v3409, 0.0
  %3420 = vadd.xlane.f32.xlu0 %v3419
  %v3421 = vpop.xlane.xlu0 %3420
  %v3422 = vsel %vm413, %v3410, 0.0
  %3423 = vadd.xlane.f32.xlu0 %v3422
  %v3424 = vpop.xlane.xlu0 %3423
  %v3425 = vsel %vm413, %v3411, 0.0
  %3426 = vadd.xlane.f32.xlu0 %v3425
  %v3427 = vpop.xlane.xlu0 %3426
  %v3428 = vsel %vm413, %v3412, 0.0
  %3429 = vadd.xlane.f32.xlu0 %v3428
  %v3430 = vpop.xlane.xlu0 %3429
  %v3431 = vmul.f32 %v3415, %v1149
  %v3432 = vmul.f32 %v3418, %v1149
  %v3433 = vmul.f32 %v3421, %v1149
  %v3434 = vmul.f32 %v3424, %v1149
  %v3435 = vmul.f32 %v3427, %v1149
  %v3436 = vmul.f32 %v3430, %v1149
  %v3437 = vadd.f32 %v3431, 1e-05
  %v3438 = vadd.f32 %v3432, 1e-05
  %v3439 = vadd.f32 %v3433, 1e-05
  %v3440 = vadd.f32 %v3434, 1e-05
  %v3441 = vadd.f32 %v3435, 1e-05
  %v3442 = vadd.f32 %v3436, 1e-05
  %v3443 = vrsqrt.pop %v3437
  %v3444 = vrsqrt.pop %v3438
  %v3445 = vrsqrt.pop %v3439
  %v3446 = vrsqrt.pop %v3440
  %v3447 = vrsqrt.pop %v3441
  %v3448 = vrsqrt.pop %v3442
  %v3449 = vmul.f32 %v3401, %v3443
  %v3450 = vmul.f32 %v3402, %v3444
  %v3451 = vmul.f32 %v3403, %v3445
  %v3452 = vmul.f32 %v3404, %v3446
  %v3453 = vmul.f32 %v3405, %v3447
  %v3454 = vmul.f32 %v3406, %v3448
  %v3455 = vlaneseq
  %v3456 = vshrl.u32 %v3455, 7
  %v3457 = vsub.s32 2, %v3456
  %v3458 = vrot.slane %v3111, %v3457
  %v3459 = vmul.f32 %v3449, %v3458
  %v3460 = vmul.f32 %v3450, %v3458
  %v3461 = vmul.f32 %v3451, %v3458
  %v3462 = vmul.f32 %v3452, %v3458
  %v3463 = vmul.f32 %v3453, %v3458
  %v3464 = vmul.f32 %v3454, %v3458
  %v3465 = vlaneseq
  %v3466 = vshrl.u32 %v3465, 7
  %v3467 = vsub.s32 3, %v3466
  %v3468 = vrot.slane %v3111, %v3467
  %v3469 = vadd.f32 %v3459, %v3468
  %v3470 = vadd.f32 %v3460, %v3468
  %v3471 = vadd.f32 %v3461, %v3468
  %v3472 = vadd.f32 %v3462, %v3468
  %v3473 = vadd.f32 %v3463, %v3468
  %v3474 = vadd.f32 %v3464, %v3468
  %v3475 = vmax.f32 %v3469, 0.0
  %v3476 = vmax.f32 %v3470, 0.0
  %v3477 = vmax.f32 %v3471, 0.0
  %v3478 = vmax.f32 %v3472, 0.0
  %v3479 = vmax.f32 %v3473, 0.0
  %v3480 = vmax.f32 %v3474, 0.0
  %v3481 = vpack.c.bf16 %v3476, %v3475
  %v3482 = vpack.c.bf16 %v3478, %v3477
  %v3483 = vpack.c.bf16 %v3480, %v3479
  %v3484 = vlaneseq
  %v3485 = vshrl.u32 %v3484, 7
  %v3486 = vsub.s32 4, %v3485
  %v3487 = vrot.slane %v3111, %v3486
  %v3496 = vunpack.c.l.b16 %v3129
  %v3497 = vunpack.c.l.b16 %v3130
  %v3498 = vunpack.c.l.b16 %v3131
  %v3499 = vunpack.c.l.b16 %v3132
  %v3500 = vunpack.c.l.b16 %v3133
  %v3501 = vunpack.c.l.b16 %v3134
  %v3502 = vunpack.c.l.b16 %v3135
  %v3503 = vunpack.c.l.b16 %v3136
  %v3504 = vpack.c.b16 %v3497, %v3496
  %v3505 = vpack.c.b16 %v3499, %v3498
  %v3506 = vpack.c.b16 %v3501, %v3500
  %v3507 = vpack.c.b16 %v3503, %v3502
  %v3513 = vsel %vm413, %v3481, 0
  %v3516 = vsel %vm413, %v3482, 0
  %v3519 = vsel %vm413, %v3483, 0
  %3521 = vmatprep.subr.bf16.mxu0 0
  %3522 = vmatpush1.bf16.msra.mxu0 %v3504
  %3523 = vmatprep.subr.bf16.mxu0 0
  %3524 = vmatpush1.bf16.msra.mxu0 %v3505
  %3525 = vmatprep.subr.bf16.mxu0 0
  %3526 = vmatpush1.bf16.msra.mxu0 %v3506
  %3527 = vmatprep.subr.bf16.mxu0 0
  %3528 = vmatpush1.bf16.msra.mxu0 %v3507
  %3529 = vmatprep.subr.bf16.mxu0 0
  %3530 = vmatpush1.bf16.msra.mxu0 0
  %3531 = vmatprep.subr.bf16.mxu0 0
  %3532 = vmatpush1.bf16.msra.mxu0 0
  %3533 = vmatprep.subr.bf16.mxu0 0
  %3534 = vmatpush1.bf16.msra.mxu0 0
  %3535 = vmatprep.subr.bf16.mxu0 0
  %3536 = vmatpush1.bf16.msra.mxu0 0
  %3537 = vmatprep.subr.bf16.mxu0 0
  %3538 = vmatpush1.bf16.msra.mxu0 0
  %3539 = vmatprep.subr.bf16.mxu0 0
  %3540 = vmatpush1.bf16.msra.mxu0 0
  %3541 = vmatprep.subr.bf16.mxu0 0
  %3542 = vmatpush1.bf16.msra.mxu0 0
  %3543 = vmatprep.subr.bf16.mxu0 0
  %3544 = vmatpush1.bf16.msra.mxu0 0
  %3545 = vmatprep.subr.bf16.mxu0 0
  %3546 = vmatpush1.bf16.msra.mxu0 0
  %3547 = vmatprep.subr.bf16.mxu0 0
  %3548 = vmatpush1.bf16.msra.mxu0 0
  %3549 = vmatprep.subr.bf16.mxu0 0
  %3550 = vmatpush1.bf16.msra.mxu0 0
  %3551 = vmatprep.subr.bf16.mxu0 0
  %3552 = vmatpush1.bf16.msra.mxu0 0
  %3553 = vmatprep.mubr.bf16.mxu0 0
  %3554 = vmatmul.mubr.bf16.gmra.mrb[0].mxu0 %v3513
  %v3555 = vpop.f32.mrb[0].mxu0
  %v3556 = vadd.f32 %v3487, %v3555
  %v3557 = vpop.f32.mrb[0].mxu0
  %v3558 = vpop.f32.mrb[0].mxu0
  %v3559 = vadd.f32 %v3487, %v3558
  %v3560 = vpop.f32.mrb[0].mxu0
  %3561 = vmatprep.mubr.bf16.mxu0 0
  %3562 = vmatmul.mubr.bf16.gmra.mrb[0].mxu0 %v3516
  %v3563 = vpop.f32.mrb[0].mxu0
  %v3564 = vadd.f32 %v3487, %v3563
  %v3565 = vpop.f32.mrb[0].mxu0
  %v3566 = vpop.f32.mrb[0].mxu0
  %v3567 = vadd.f32 %v3487, %v3566
  %v3568 = vpop.f32.mrb[0].mxu0
  %3569 = vmatprep.mubr.bf16.mxu0 0
  %3570 = vmatmul.mubr.bf16.gmra.mrb[0].mxu0 %v3519
  %v3571 = vpop.f32.mrb[0].mxu0
  %v3572 = vadd.f32 %v3487, %v3571
  %v3573 = vpop.f32.mrb[0].mxu0
  %v3574 = vpop.f32.mrb[0].mxu0
  %v3575 = vadd.f32 %v3487, %v3574
  %v3576 = vpop.f32.mrb[0].mxu0
  %3577 = vdwg.mxu0
  %v3578 = vpack.c.bf16 %v3559, %v3556
  %v3579 = vpack.c.bf16 %v3567, %v3564
  %v3580 = vpack.c.bf16 %v3575, %v3572
  %3581 = vmatprep.subr.bf16.mxu0 0
  %3582 = vmatpush1.bf16.msra.mxu0 %v3578
  %3583 = vmatprep.subr.bf16.mxu0 0
  %3584 = vmatpush1.bf16.msra.mxu0 %v3579
  %3585 = vmatprep.subr.bf16.mxu0 0
  %3586 = vmatpush1.bf16.msra.mxu0 %v3580
  %3587 = vmatprep.subr.bf16.mxu0 0
  %3588 = vmatpush1.bf16.msra.mxu0 0
  %3589 = vmatprep.subr.bf16.mxu0 0
  %3590 = vmatpush1.bf16.msra.mxu0 0
  %3591 = vmatprep.subr.bf16.mxu0 0
  %3592 = vmatpush1.bf16.msra.mxu0 0
  %3593 = vmatprep.subr.bf16.mxu0 0
  %3594 = vmatpush1.bf16.msra.mxu0 0
  %3595 = vmatprep.subr.bf16.mxu0 0
  %3596 = vmatpush1.bf16.msra.mxu0 0
  %3597 = vmatprep.subr.bf16.mxu0 0
  %3598 = vmatpush1.bf16.msra.mxu0 0
  %3599 = vmatprep.subr.bf16.mxu0 0
  %3600 = vmatpush1.bf16.msra.mxu0 0
  %3601 = vmatprep.subr.bf16.mxu0 0
  %3602 = vmatpush1.bf16.msra.mxu0 0
  %3603 = vmatprep.subr.bf16.mxu0 0
  %3604 = vmatpush1.bf16.msra.mxu0 0
  %3605 = vmatprep.subr.bf16.mxu0 0
  %3606 = vmatpush1.bf16.msra.mxu0 0
  %3607 = vmatprep.subr.bf16.mxu0 0
  %3608 = vmatpush1.bf16.msra.mxu0 0
  %3609 = vmatprep.subr.bf16.mxu0 0
  %3610 = vmatpush1.bf16.msra.mxu0 0
  %3611 = vmatprep.subr.bf16.mxu0 0
  %3612 = vmatpush1.bf16.msra.mxu0 0
  %3613 = vmatprep.mubr.bf16.mxu0 0
  %3614 = vmatmul.mubr.bf16.gmra.mrb[0].mxu0 %v2069
  %v3615 = vpop.f32.mrb[0].mxu0
  %v3616 = vadd.f32 0.0, %v3615
  %v3617 = vpop.f32.mrb[0].mxu0
  %v3618 = vpop.f32.mrb[0].mxu0
  %v3619 = vadd.f32 0.0, %v3618
  %v3620 = vpop.f32.mrb[0].mxu0
  %3621 = vmatprep.mubr.bf16.mxu0 0
  %3622 = vmatmul.mubr.bf16.gmra.mrb[0].mxu0 %v2072
  %v3623 = vpop.f32.mrb[0].mxu0
  %v3624 = vadd.f32 0.0, %v3623
  %v3625 = vpop.f32.mrb[0].mxu0
  %v3626 = vpop.f32.mrb[0].mxu0
  %v3627 = vpop.f32.mrb[0].mxu0
  %3628 = vdwg.mxu0
  %v3629 = vsel %vm413, %v3616, 0.0
  %3630 = vadd.xlane.f32.xlu0 %v3629
  %v3631 = vpop.xlane.xlu0 %3630
  %v3632 = vsel %vm413, %v3619, 0.0
  %3633 = vadd.xlane.f32.xlu0 %v3632
  %v3634 = vpop.xlane.xlu0 %3633
  %v3635 = vsel %vm413, %v3624, 0.0
  %3636 = vadd.xlane.f32.xlu0 %v3635
  %v3637 = vpop.xlane.xlu0 %3636
  %v3638 = vmul.f32 %v3631, %v1149
  %v3639 = vmul.f32 %v3634, %v1149
  %v3640 = vmul.f32 %v3637, %v1149
  %v3641 = vsub.f32 %v3616, %v3638
  %v3642 = vsub.f32 %v3619, %v3639
  %v3643 = vsub.f32 %v3624, %v3640
  %v3644 = vmul.f32 %v3641, %v3641
  %v3645 = vmul.f32 %v3642, %v3642
  %v3646 = vmul.f32 %v3643, %v3643
  %v3647 = vsel %vm413, %v3644, 0.0
  %3648 = vadd.xlane.f32.xlu0 %v3647
  %v3649 = vpop.xlane.xlu0 %3648
  %v3650 = vsel %vm413, %v3645, 0.0
  %3651 = vadd.xlane.f32.xlu0 %v3650
  %v3652 = vpop.xlane.xlu0 %3651
  %v3653 = vsel %vm413, %v3646, 0.0
  %3654 = vadd.xlane.f32.xlu0 %v3653
  %v3655 = vpop.xlane.xlu0 %3654
  %v3656 = vmul.f32 %v3649, %v1149
  %v3657 = vmul.f32 %v3652, %v1149
  %v3658 = vmul.f32 %v3655, %v1149
  %v3659 = vadd.f32 %v3656, 1e-05
  %v3660 = vadd.f32 %v3657, 1e-05
  %v3661 = vadd.f32 %v3658, 1e-05
  %v3662 = vrsqrt.pop %v3659
  %v3663 = vrsqrt.pop %v3660
  %v3664 = vrsqrt.pop %v3661
  %v3665 = vmul.f32 %v3641, %v3662
  %v3666 = vmul.f32 %v3642, %v3663
  %v3667 = vmul.f32 %v3643, %v3664
  %v3668 = vlaneseq
  %v3669 = vshrl.u32 %v3668, 7
  %v3670 = vsub.s32 5, %v3669
  %v3671 = vrot.slane %v3111, %v3670
  %v3672 = vmul.f32 %v3665, %v3671
  %v3673 = vmul.f32 %v3666, %v3671
  %v3674 = vmul.f32 %v3667, %v3671
  %v3675 = vlaneseq
  %v3676 = vshrl.u32 %v3675, 7
  %v3677 = vsub.s32 6, %v3676
  %v3678 = vrot.slane %v3111, %v3677
  %v3679 = vadd.f32 %v3672, %v3678
  %v3680 = vadd.f32 %v3673, %v3678
  %v3681 = vadd.f32 %v3674, %v3678
  %3685 = vrot.lane.b32.xlu0 %v2366, 64
  %v3686 = vpop.permute.xlu0 %3685
  %3687 = vrot.lane.b32.xlu0 %v2369, 64
  %v3688 = vpop.permute.xlu0 %3687
  %3689 = vrot.lane.b32.xlu0 %v2374, 64
  %v3690 = vpop.permute.xlu0 %3689
  %v3694 = vsel %vm413, %v3679, %v3686
  %v3695 = vsel %vm413, %v3680, %v3688
  %v3696 = vsel %vm413, %v3681, %v3690
  %v3697 = vpack.c.bf16 %v3695, %v3694
  %v3698 = vpack.c.bf16 %v3696, %v3696
  %v3699 = vlaneseq
  %v3700 = vshrl.u32 %v3699, 7
  %v3701 = vsub.s32 7, %v3700
  %v3702 = vrot.slane %v3111, %v3701
  %v3719 = vunpack.c.l.b16 %v3137
  %v3720 = vunpack.c.l.b16 %v3138
  %v3721 = vunpack.c.l.b16 %v3139
  %v3722 = vunpack.c.l.b16 %v3140
  %v3723 = vunpack.c.l.b16 %v3141
  %v3724 = vunpack.c.l.b16 %v3142
  %v3725 = vunpack.c.l.b16 %v3143
  %v3726 = vunpack.c.l.b16 %v3144
  %v3727 = vunpack.c.l.b16 %v3145
  %v3728 = vunpack.c.l.b16 %v3146
  %v3729 = vunpack.c.l.b16 %v3147
  %v3730 = vunpack.c.l.b16 %v3148
  %v3731 = vunpack.c.l.b16 %v3149
  %v3732 = vunpack.c.l.b16 %v3150
  %v3733 = vunpack.c.l.b16 %v3151
  %v3734 = vunpack.c.l.b16 %v3152
  %v3735 = vpack.c.b16 %v3720, %v3719
  %v3736 = vpack.c.b16 %v3722, %v3721
  %v3737 = vpack.c.b16 %v3724, %v3723
  %v3738 = vpack.c.b16 %v3726, %v3725
  %v3739 = vpack.c.b16 %v3728, %v3727
  %v3740 = vpack.c.b16 %v3730, %v3729
  %v3741 = vpack.c.b16 %v3732, %v3731
  %v3742 = vpack.c.b16 %v3734, %v3733
  %3751 = vmatprep.subr.bf16.mxu0 0
  %3752 = vmatpush1.bf16.msra.mxu0 %v3735
  %3753 = vmatprep.subr.bf16.mxu0 0
  %3754 = vmatpush1.bf16.msra.mxu0 %v3736
  %3755 = vmatprep.subr.bf16.mxu0 0
  %3756 = vmatpush1.bf16.msra.mxu0 %v3737
  %3757 = vmatprep.subr.bf16.mxu0 0
  %3758 = vmatpush1.bf16.msra.mxu0 %v3738
  %3759 = vmatprep.subr.bf16.mxu0 0
  %3760 = vmatpush1.bf16.msra.mxu0 %v3739
  %3761 = vmatprep.subr.bf16.mxu0 0
  %3762 = vmatpush1.bf16.msra.mxu0 %v3740
  %3763 = vmatprep.subr.bf16.mxu0 0
  %3764 = vmatpush1.bf16.msra.mxu0 %v3741
  %3765 = vmatprep.subr.bf16.mxu0 0
  %3766 = vmatpush1.bf16.msra.mxu0 %v3742
  %3767 = vmatprep.subr.bf16.mxu0 0
  %3768 = vmatpush1.bf16.msra.mxu0 0
  %3769 = vmatprep.subr.bf16.mxu0 0
  %3770 = vmatpush1.bf16.msra.mxu0 0
  %3771 = vmatprep.subr.bf16.mxu0 0
  %3772 = vmatpush1.bf16.msra.mxu0 0
  %3773 = vmatprep.subr.bf16.mxu0 0
  %3774 = vmatpush1.bf16.msra.mxu0 0
  %3775 = vmatprep.subr.bf16.mxu0 0
  %3776 = vmatpush1.bf16.msra.mxu0 0
  %3777 = vmatprep.subr.bf16.mxu0 0
  %3778 = vmatpush1.bf16.msra.mxu0 0
  %3779 = vmatprep.subr.bf16.mxu0 0
  %3780 = vmatpush1.bf16.msra.mxu0 0
  %3781 = vmatprep.subr.bf16.mxu0 0
  %3782 = vmatpush1.bf16.msra.mxu0 0
  %3783 = vmatprep.mubr.bf16.mxu0 0
  %3784 = vmatmul.mubr.bf16.gmra.mrb[0].mxu0 %v3697
  %v3785 = vpop.f32.mrb[0].mxu0
  %v3786 = vadd.f32 %v3702, %v3785
  %v3787 = vpop.f32.mrb[0].mxu0
  %v3788 = vpop.f32.mrb[0].mxu0
  %v3789 = vadd.f32 %v3702, %v3788
  %v3790 = vpop.f32.mrb[0].mxu0
  %3791 = vmatprep.mubr.bf16.mxu0 0
  %3792 = vmatmul.mubr.bf16.gmra.mrb[0].mxu0 %v3698
  %v3793 = vpop.f32.mrb[0].mxu0
  %v3794 = vadd.f32 %v3702, %v3793
  %v3795 = vpop.f32.mrb[0].mxu0
  %v3796 = vpop.f32.mrb[0].mxu0
  %v3797 = vpop.f32.mrb[0].mxu0
  %3798 = vdwg.mxu0
  %v3799 = vmax.f32 %v3786, 0.0
  %v3800 = vmax.f32 %v3789, 0.0
  %v3801 = vmax.f32 %v3794, 0.0
  %v3802 = vpack.c.bf16 %v3800, %v3799
  %v3803 = vpack.c.bf16 %v3801, %v3801
  %v3804 = vlaneseq
  %v3805 = vshrl.u32 %v3804, 7
  %v3806 = vsub.s32 0, %v3805
  %v3807 = vrot.slane %v3112, %v3806
  %v3816 = vunpack.c.l.b16 %v3153
  %v3817 = vunpack.c.l.b16 %v3154
  %v3818 = vunpack.c.l.b16 %v3155
  %v3819 = vunpack.c.l.b16 %v3156
  %v3820 = vunpack.c.l.b16 %v3157
  %v3821 = vunpack.c.l.b16 %v3158
  %v3822 = vunpack.c.l.b16 %v3159
  %v3823 = vunpack.c.l.b16 %v3160
  %v3824 = vpack.c.b16 %v3817, %v3816
  %v3825 = vpack.c.b16 %v3819, %v3818
  %v3826 = vpack.c.b16 %v3821, %v3820
  %v3827 = vpack.c.b16 %v3823, %v3822
  %v3833 = vsel %vm413, %v3802, 0
  %v3836 = vsel %vm413, %v3803, 0
  %3838 = vmatprep.subr.bf16.mxu0 0
  %3839 = vmatpush1.bf16.msra.mxu0 %v3824
  %3840 = vmatprep.subr.bf16.mxu0 0
  %3841 = vmatpush1.bf16.msra.mxu0 %v3825
  %3842 = vmatprep.subr.bf16.mxu0 0
  %3843 = vmatpush1.bf16.msra.mxu0 %v3826
  %3844 = vmatprep.subr.bf16.mxu0 0
  %3845 = vmatpush1.bf16.msra.mxu0 %v3827
  %3846 = vmatprep.subr.bf16.mxu0 0
  %3847 = vmatpush1.bf16.msra.mxu0 0
  %3848 = vmatprep.subr.bf16.mxu0 0
  %3849 = vmatpush1.bf16.msra.mxu0 0
  %3850 = vmatprep.subr.bf16.mxu0 0
  %3851 = vmatpush1.bf16.msra.mxu0 0
  %3852 = vmatprep.subr.bf16.mxu0 0
  %3853 = vmatpush1.bf16.msra.mxu0 0
  %3854 = vmatprep.subr.bf16.mxu0 0
  %3855 = vmatpush1.bf16.msra.mxu0 0
  %3856 = vmatprep.subr.bf16.mxu0 0
  %3857 = vmatpush1.bf16.msra.mxu0 0
  %3858 = vmatprep.subr.bf16.mxu0 0
  %3859 = vmatpush1.bf16.msra.mxu0 0
  %3860 = vmatprep.subr.bf16.mxu0 0
  %3861 = vmatpush1.bf16.msra.mxu0 0
  %3862 = vmatprep.subr.bf16.mxu0 0
  %3863 = vmatpush1.bf16.msra.mxu0 0
  %3864 = vmatprep.subr.bf16.mxu0 0
  %3865 = vmatpush1.bf16.msra.mxu0 0
  %3866 = vmatprep.subr.bf16.mxu0 0
  %3867 = vmatpush1.bf16.msra.mxu0 0
  %3868 = vmatprep.subr.bf16.mxu0 0
  %3869 = vmatpush1.bf16.msra.mxu0 0
  %3870 = vmatprep.mubr.bf16.mxu0 0
  %3871 = vmatmul.mubr.bf16.gmra.mrb[0].mxu0 %v3833
  %v3872 = vpop.f32.mrb[0].mxu0
  %v3873 = vadd.f32 %v3807, %v3872
  %v3874 = vpop.f32.mrb[0].mxu0
  %v3875 = vpop.f32.mrb[0].mxu0
  %v3876 = vadd.f32 %v3807, %v3875
  %v3877 = vpop.f32.mrb[0].mxu0
  %3878 = vmatprep.mubr.bf16.mxu0 0
  %3879 = vmatmul.mubr.bf16.gmra.mrb[0].mxu0 %v3836
  %v3880 = vpop.f32.mrb[0].mxu0
  %v3881 = vadd.f32 %v3807, %v3880
  %v3882 = vpop.f32.mrb[0].mxu0
  %v3883 = vpop.f32.mrb[0].mxu0
  %v3884 = vpop.f32.mrb[0].mxu0
  %3885 = vdwg.mxu0
  %v3886 = vpack.c.bf16 %v3876, %v3873
  %v3887 = vpack.c.bf16 %v3881, %v3881
  %v3888 = vld [vmem:[%s69] sm:$0xf]
  %v3889 = vld [vmem:[%s69 + $0x4] sm:$0xf]
  %v3890 = vld [vmem:[%s69 + $0x8] sm:$0xf]
  %v3891 = vld [vmem:[%s69 + $0xc] sm:$0xf]
  %v3892 = vld [vmem:[%s69 + $0x10] sm:$0xf]
  %v3893 = vld [vmem:[%s69 + $0x14] sm:$0xf]
  %v3894 = vld [vmem:[%s69 + $0x18] sm:$0xf]
  %v3895 = vld [vmem:[%s69 + $0x1c] sm:$0xf]
  %v3896 = vld [vmem:[%s71] sm:$0x1]
  %v3898 = vlaneseq
  %v3899 = vshrl.u32 %v3898, 7
  %v3900 = vsub.s32 0, %v3899
  %v3901 = vrot.slane %v3896, %v3900
  %v3911 = vunpack.c.l.b16 %v3888
  %v3912 = vunpack.c.l.b16 %v3889
  %v3913 = vunpack.c.l.b16 %v3890
  %v3914 = vunpack.c.l.b16 %v3891
  %v3915 = vunpack.c.l.b16 %v3892
  %v3916 = vunpack.c.l.b16 %v3893
  %v3917 = vunpack.c.l.b16 %v3894
  %v3918 = vunpack.c.l.b16 %v3895
  %v3919 = vpack.c.b16 %v3912, %v3911
  %v3920 = vpack.c.b16 %v3914, %v3913
  %v3921 = vpack.c.b16 %v3916, %v3915
  %v3922 = vpack.c.b16 %v3918, %v3917
  %v3928 = vsel %vm413, %v3886, 0
  %v3931 = vsel %vm413, %v3887, 0
  %3933 = vmatprep.subr.bf16.mxu0 0
  %3934 = vmatpush1.bf16.msra.mxu0 %v3919
  %3935 = vmatprep.subr.bf16.mxu0 0
  %3936 = vmatpush1.bf16.msra.mxu0 %v3920
  %3937 = vmatprep.subr.bf16.mxu0 0
  %3938 = vmatpush1.bf16.msra.mxu0 %v3921
  %3939 = vmatprep.subr.bf16.mxu0 0
  %3940 = vmatpush1.bf16.msra.mxu0 %v3922
  %3941 = vmatprep.subr.bf16.mxu0 0
  %3942 = vmatpush1.bf16.msra.mxu0 0
  %3943 = vmatprep.subr.bf16.mxu0 0
  %3944 = vmatpush1.bf16.msra.mxu0 0
  %3945 = vmatprep.subr.bf16.mxu0 0
  %3946 = vmatpush1.bf16.msra.mxu0 0
  %3947 = vmatprep.subr.bf16.mxu0 0
  %3948 = vmatpush1.bf16.msra.mxu0 0
  %3949 = vmatprep.subr.bf16.mxu0 0
  %3950 = vmatpush1.bf16.msra.mxu0 0
  %3951 = vmatprep.subr.bf16.mxu0 0
  %3952 = vmatpush1.bf16.msra.mxu0 0
  %3953 = vmatprep.subr.bf16.mxu0 0
  %3954 = vmatpush1.bf16.msra.mxu0 0
  %3955 = vmatprep.subr.bf16.mxu0 0
  %3956 = vmatpush1.bf16.msra.mxu0 0
  %3957 = vmatprep.subr.bf16.mxu0 0
  %3958 = vmatpush1.bf16.msra.mxu0 0
  %3959 = vmatprep.subr.bf16.mxu0 0
  %3960 = vmatpush1.bf16.msra.mxu0 0
  %3961 = vmatprep.subr.bf16.mxu0 0
  %3962 = vmatpush1.bf16.msra.mxu0 0
  %3963 = vmatprep.subr.bf16.mxu0 0
  %3964 = vmatpush1.bf16.msra.mxu0 0
  %3965 = vmatprep.mubr.bf16.mxu0 0
  %3966 = vmatmul.mubr.bf16.gmra.mrb[0].mxu0 %v3928
  %v3967 = vpop.f32.mrb[0].mxu0
  %v3968 = vadd.f32 %v3901, %v3967
  %v3969 = vpop.f32.mrb[0].mxu0
  %v3970 = vpop.f32.mrb[0].mxu0
  %v3971 = vadd.f32 %v3901, %v3970
  %v3972 = vpop.f32.mrb[0].mxu0
  %3973 = vmatprep.mubr.bf16.mxu0 0
  %3974 = vmatmul.mubr.bf16.gmra.mrb[0].mxu0 %v3931
  %v3975 = vpop.f32.mrb[0].mxu0
  %v3976 = vadd.f32 %v3901, %v3975
  %v3977 = vpop.f32.mrb[0].mxu0
  %v3978 = vpop.f32.mrb[0].mxu0
  %v3979 = vpop.f32.mrb[0].mxu0
  %3980 = vdwg.mxu0
  %v3981 = vmax.f32 %v3968, 0.0
  %v3982 = vmax.f32 %v3971, 0.0
  %v3983 = vmax.f32 %v3976, 0.0
  %v3984 = vpack.c.bf16 %v3982, %v3981
  %v3985 = vpack.c.bf16 %v3983, %v3983
  %v3986 = vld [vmem:[%s73] sm:$0xf]
  %v3987 = vld [vmem:[%s73 + $0x4] sm:$0xf]
  %v3988 = vld [vmem:[%s73 + $0x8] sm:$0xf]
  %v3989 = vld [vmem:[%s73 + $0xc] sm:$0xf]
  %v3990 = vld [vmem:[%s73 + $0x10] sm:$0xf]
  %v3991 = vld [vmem:[%s73 + $0x14] sm:$0xf]
  %v3992 = vld [vmem:[%s73 + $0x18] sm:$0xf]
  %v3993 = vld [vmem:[%s73 + $0x1c] sm:$0xf]
  %v3994 = vld [vmem:[%s75] sm:$0x1]
  %v3996 = vlaneseq
  %v3997 = vshrl.u32 %v3996, 7
  %v3998 = vsub.s32 0, %v3997
  %v3999 = vrot.slane %v3994, %v3998
  %v4009 = vunpack.c.l.b16 %v3986
  %v4010 = vunpack.c.l.b16 %v3987
  %v4011 = vunpack.c.l.b16 %v3988
  %v4012 = vunpack.c.l.b16 %v3989
  %v4013 = vunpack.c.l.b16 %v3990
  %v4014 = vunpack.c.l.b16 %v3991
  %v4015 = vunpack.c.l.b16 %v3992
  %v4016 = vunpack.c.l.b16 %v3993
  %v4017 = vpack.c.b16 %v4010, %v4009
  %v4018 = vpack.c.b16 %v4012, %v4011
  %v4019 = vpack.c.b16 %v4014, %v4013
  %v4020 = vpack.c.b16 %v4016, %v4015
  %v4026 = vsel %vm413, %v3984, 0
  %v4029 = vsel %vm413, %v3985, 0
  %4031 = vmatprep.subr.bf16.mxu0 0
  %4032 = vmatpush1.bf16.msra.mxu0 %v4017
  %4033 = vmatprep.subr.bf16.mxu0 0
  %4034 = vmatpush1.bf16.msra.mxu0 %v4018
  %4035 = vmatprep.subr.bf16.mxu0 0
  %4036 = vmatpush1.bf16.msra.mxu0 %v4019
  %4037 = vmatprep.subr.bf16.mxu0 0
  %4038 = vmatpush1.bf16.msra.mxu0 %v4020
  %4039 = vmatprep.subr.bf16.mxu0 0
  %4040 = vmatpush1.bf16.msra.mxu0 0
  %4041 = vmatprep.subr.bf16.mxu0 0
  %4042 = vmatpush1.bf16.msra.mxu0 0
  %4043 = vmatprep.subr.bf16.mxu0 0
  %4044 = vmatpush1.bf16.msra.mxu0 0
  %4045 = vmatprep.subr.bf16.mxu0 0
  %4046 = vmatpush1.bf16.msra.mxu0 0
  %4047 = vmatprep.subr.bf16.mxu0 0
  %4048 = vmatpush1.bf16.msra.mxu0 0
  %4049 = vmatprep.subr.bf16.mxu0 0
  %4050 = vmatpush1.bf16.msra.mxu0 0
  %4051 = vmatprep.subr.bf16.mxu0 0
  %4052 = vmatpush1.bf16.msra.mxu0 0
  %4053 = vmatprep.subr.bf16.mxu0 0
  %4054 = vmatpush1.bf16.msra.mxu0 0
  %4055 = vmatprep.subr.bf16.mxu0 0
  %4056 = vmatpush1.bf16.msra.mxu0 0
  %4057 = vmatprep.subr.bf16.mxu0 0
  %4058 = vmatpush1.bf16.msra.mxu0 0
  %4059 = vmatprep.subr.bf16.mxu0 0
  %4060 = vmatpush1.bf16.msra.mxu0 0
  %4061 = vmatprep.subr.bf16.mxu0 0
  %4062 = vmatpush1.bf16.msra.mxu0 0
  %4063 = vmatprep.mubr.bf16.mxu0 0
  %4064 = vmatmul.mubr.bf16.gmra.mrb[0].mxu0 %v4026
  %v4065 = vpop.f32.mrb[0].mxu0
  %v4066 = vadd.f32 %v3999, %v4065
  %v4067 = vpop.f32.mrb[0].mxu0
  %v4068 = vpop.f32.mrb[0].mxu0
  %v4069 = vadd.f32 %v3999, %v4068
  %v4070 = vpop.f32.mrb[0].mxu0
  %4071 = vmatprep.mubr.bf16.mxu0 0
  %4072 = vmatmul.mubr.bf16.gmra.mrb[0].mxu0 %v4029
  %v4073 = vpop.f32.mrb[0].mxu0
  %v4074 = vadd.f32 %v3999, %v4073
  %v4075 = vpop.f32.mrb[0].mxu0
  %v4076 = vpop.f32.mrb[0].mxu0
  %v4077 = vpop.f32.mrb[0].mxu0
  %4078 = vdwg.mxu0
  %v4079 = vxor.u32 %v4066, 2147483648
  %v4080 = vxor.u32 %v4069, 2147483648
  %v4081 = vxor.u32 %v4074, 2147483648
  %v4082 = vmul.f32 %v4079, 1.442695
  %v4083 = vpow.pop %v4082
  %v4084 = vmul.f32 %v4080, 1.442695
  %v4085 = vpow.pop %v4084
  %v4086 = vmul.f32 %v4081, 1.442695
  %v4087 = vpow.pop %v4086
  %v4088 = vadd.f32 %v4083, 1.0
  %v4089 = vadd.f32 %v4085, 1.0
  %v4090 = vadd.f32 %v4087, 1.0
  %v4091 = vrcp.pop %v4088
  %v4092 = vmul.f32 1.0, %v4091
  %v4093 = vrcp.pop %v4089
  %v4094 = vmul.f32 1.0, %v4093
  %v4095 = vrcp.pop %v4090
  %v4096 = vmul.f32 1.0, %v4095
  %4097 = vst [vmem:[%s77] sm:$0xff] %v4092
  %4098 = vst [vmem:[%s77 + $0x8] sm:$0xff] %v4094
  %4099 = vst [vmem:[%s77 + $0x10] sm:$0xff] %v4096
  // Predicated region
  $region154: #{gnn_policy_forward.1} parent=0 // pred_check
    _
  $region155: #{gnn_policy_forward.1} parent=0 // pred_check_branch
    %4101 = sbr.rel (0) target = $region157
  $region156: #{gnn_policy_forward.1} parent=0 // pred_region
    _
  $region157: #{gnn_policy_forward.1} parent=0 // pred_fallthru
    _
  // Predicated region
  $region158: #{gnn_policy_forward.1} parent=0 // pred_check
    _
  $region159: #{gnn_policy_forward.1} parent=0 // pred_check_branch
    %4103 = sbr.rel (0) target = $region161
  $region160: #{gnn_policy_forward.1} parent=0 // pred_region
    _
  $region161: #{gnn_policy_forward.1} parent=0 // pred_fallthru
    _

</llo_original>
